<compile_context>
chip_gen: v7x
topology: tpu7x:2x2x1
jax: 0.10.0
libtpu: 0.0.40
codegen_flags: <defaults>
</compile_context>

<pallas_src>
import jax
import jax.numpy as jnp
from jax.experimental import pallas as pl
from jax.experimental.pallas import tpu as pltpu

# ----- config (mirrors `args`) ------------------------------------------------
LATDIM = 32          # args.latdim
HEAD = 4             # args.head
ANCHOR = 8           # args.anchor
N_NODES = 64         # number of graph nodes (input rows)
EPS = 1e-5           # nn.LayerNorm default eps
HEAD_DIM = LATDIM // HEAD
SCALE = 1.0 / float(jnp.sqrt(jnp.float32(LATDIM / HEAD)))   # 1/sqrt(head_dim)

_VMEM = pl.BlockSpec(memory_space=pltpu.MemorySpace.VMEM)
_SMEM = pl.BlockSpec(memory_space=pltpu.MemorySpace.SMEM)


# ----- fused Pallas kernel ----------------------------------------------------
def _gt_layer_kernel(idx_ref, x_ref, wqkv_ref, w3_ref, vec_ref, o_ref, anc_ref):
    """Whole GTLayer forward (eval mode) in one kernel.

    idx_ref  : (A,)  int32 SMEM   sampled anchor row indices
    x_ref    : (N, D)             node embeddings
    wqkv_ref : (3H, D, hd)        per-head Q (scale folded in), K, V weights
    w3_ref   : (3, D, D)          [Wo^T, W1^T, W2^T]  (pre-transposed: x @ W)
    vec_ref  : (8, D)             rows = [b1, b2, g1, beta1, g2, beta2, 0, 0]
    o_ref    : (N, D)             output embeddings
    anc_ref  : (A, D) VMEM scratch for gathered anchors
    """
    x = x_ref[...]                                    # (N, D)
    wqkv = wqkv_ref[...]                              # (3H, D, hd)
    wo_t = w3_ref[0]                                  # (D, D)
    w1_t = w3_ref[1]
    w2_t = w3_ref[2]
    vec = vec_ref[...]
    b1, b2 = vec[0:1, :], vec[1:2, :]
    g1, beta1 = vec[2:3, :], vec[3:4, :]
    g2, beta2 = vec[4:5, :], vec[5:6, :]

    # ---- anchor gather (in-kernel; replaces host-side jnp.take) -------------
    for i in range(ANCHOR):                           # static unroll, 8 row copies
        r = idx_ref[i]
        anc_ref[pl.ds(i, 1), :] = x_ref[pl.ds(r, 1), :]
    anchors = anc_ref[...]                            # (A, D)

    def mha_residual(q, kv):
        """out = MultiheadAttention(q, kv, kv) + q  (bias=False, eval mode)."""
        lq, lk = q.shape[0], kv.shape[0]
        # Batched-head projections (leading batch dim, no activation reshapes).
        qb = jnp.broadcast_to(q[None], (HEAD, lq, LATDIM))
        kvb = jnp.broadcast_to(kv[None], (2 * HEAD, lk, LATDIM))
        qh = jnp.einsum('hqe,hed->hqd', qb, wqkv[:HEAD],
                        preferred_element_type=jnp.float32)    # (H, Lq, hd), scaled
        kvh = jnp.einsum('hke,hed->hkd', kvb, wqkv[HEAD:],
                         preferred_element_type=jnp.float32)   # (2H, Lk, hd)
        kh, vh = kvh[:HEAD], kvh[HEAD:]
        # scores + per-head softmax over keys
        s = jnp.einsum('hqd,hkd->hqk', qh, kh,
                       preferred_element_type=jnp.float32)     # (H, Lq, Lk)
        s = s - jnp.max(s, axis=-1, keepdims=True)
        p = jnp.exp(s)
        p = p * pl.reciprocal(jnp.sum(p, axis=-1, keepdims=True), approx=True)
        # TODO(synk): attention dropout (p=0.1) skipped — eval-mode semantics.
        att = jnp.einsum('hqk,hkd->hqd', p, vh,
                         preferred_element_type=jnp.float32)   # (H, Lq, hd)
        # Output projection: H small MXU matmuls on static row-slices of Wo^T,
        # summed (no concat of narrow head chunks, no in-kernel reshapes).
        out = jnp.dot(att[0], wo_t[0:HEAD_DIM, :],
                      preferred_element_type=jnp.float32)
        for h in range(1, HEAD):
            out = out + jnp.dot(att[h], wo_t[h * HEAD_DIM:(h + 1) * HEAD_DIM, :],
                                preferred_element_type=jnp.float32)
        return out + q                                         # residual add

    def layernorm(y, gamma, beta):
        mean = jnp.mean(y, axis=-1, keepdims=True)
        var = jnp.mean((y - mean) ** 2, axis=-1, keepdims=True)
        return (y - mean) * jax.lax.rsqrt(var + EPS) * gamma + beta

    # anchor <- MHA(anchor, embeds, embeds) + anchor          (stays in VMEM)
    anchors = mha_residual(anchors, x)
    # embeds' = LayerNorm1( MHA(embeds, anchor, anchor) + embeds )
    h = layernorm(mha_residual(x, anchors), g1, beta1)
    # FFN: two FeedForwardLayer(latdim, latdim, bias=True, act='relu')
    f = jnp.maximum(jnp.dot(h, w1_t, preferred_element_type=jnp.float32) + b1, 0.0)
    f = jnp.maximum(jnp.dot(f, w2_t, preferred_element_type=jnp.float32) + b2, 0.0)
    # TODO(synk): fc_dropout (p=args.drop_rate) skipped — eval-mode semantics.
    o_ref[...] = layernorm(f + h, g2, beta2)


# ----- wrappers ---------------------------------------------------------------
def gt_layer_fused(anchor_idx, embeds, prep):
    return pl.pallas_call(
        _gt_layer_kernel,
        out_shape=jax.ShapeDtypeStruct(embeds.shape, jnp.float32),
        in_specs=[_SMEM, _VMEM, _VMEM, _VMEM, _VMEM],
        out_specs=_VMEM,
        scratch_shapes=[pltpu.VMEM((ANCHOR, LATDIM), jnp.float32)],
    )(anchor_idx, embeds, prep["wqkv_h"], prep["w3"], prep["vec"])


def prepare_params(p):
    """One-time host-side weight prep: transpose, fold scale, split per head."""
    D, H, hd = LATDIM, HEAD, HEAD_DIM
    # PyTorch Linear convention y = x @ W.T  ->  store W.T so kernel does x @ W.
    wq_t = p["wq"].T * SCALE                     # fold 1/sqrt(head_dim) into Wq
    wk_t = p["wk"].T
    wv_t = p["wv"].T
    # per-head layouts (heads are the major part of the feature axis)
    wq_h = wq_t.reshape(D, H, hd).transpose(1, 0, 2)            # (H, D, hd)
    wk_h = wk_t.reshape(D, H, hd).transpose(1, 0, 2)            # (H, D, hd)
    wv_h = wv_t.reshape(D, H, hd).transpose(1, 0, 2)            # (H, D, hd)
    wqkv_h = jnp.concatenate([wq_h, wk_h, wv_h], axis=0)        # (3H, D, hd)
    w3 = jnp.stack([p["wo"].T, p["w1"].T, p["w2"].T], axis=0)   # (3, D, D)
    zeros = jnp.zeros((D,), jnp.float32)
    vec = jnp.stack([p["b1"], p["b2"], p["g1"], p["beta1"],
                     p["g2"], p["beta2"], zeros, zeros], axis=0)  # (8, D)
    return {"wqkv_h": wqkv_h, "w3": w3, "vec": vec}


def init_params(key):
    ks = jax.random.split(key, 8)
    s = 0.05
    return {
        # nn.MultiheadAttention(latdim, head, bias=False): in_proj split + out_proj
        "wq": s * jax.random.normal(ks[0], (LATDIM, LATDIM), jnp.float32),
        "wk": s * jax.random.normal(ks[1], (LATDIM, LATDIM), jnp.float32),
        "wv": s * jax.random.normal(ks[2], (LATDIM, LATDIM), jnp.float32),
        "wo": s * jax.random.normal(ks[3], (LATDIM, LATDIM), jnp.float32),
        # two FeedForwardLayer(latdim, latdim, bias=True, act='relu')
        "w1": s * jax.random.normal(ks[4], (LATDIM, LATDIM), jnp.float32),
        "b1": 0.01 * jax.random.normal(ks[6], (LATDIM,), jnp.float32),
        "w2": s * jax.random.normal(ks[5], (LATDIM, LATDIM), jnp.float32),
        "b2": 0.01 * jax.random.normal(ks[7], (LATDIM,), jnp.float32),
        # two LayerNorm(latdim) affine params
        "g1": jnp.ones((LATDIM,), jnp.float32),
        "beta1": jnp.zeros((LATDIM,), jnp.float32),
        "g2": jnp.ones((LATDIM,), jnp.float32),
        "beta2": jnp.zeros((LATDIM,), jnp.float32),
    }


@jax.jit
def gt_layer_forward(embeds, prep, anchor_key):
    # _pick_anchors: random permutation, take first `anchor` indices.  Only the
    # int32 indices cross into the kernel (SMEM); the row gather happens in VMEM
    # inside the fused kernel.
    # TODO(synk): no batch/multi-graph axis exists, so no parallel grid axis for
    # the second v7x TensorCore; the single fused call is launch-overhead bound.
    perm = jax.random.permutation(anchor_key, embeds.shape[0])
    idx = perm[:ANCHOR].astype(jnp.int32)                       # (A,)
    return gt_layer_fused(idx, embeds, prep)


# ----- pure-JAX reference (uses original PyTorch-convention params) ------------
def _reference_forward(embeds, params, anchor_key):
    perm = jax.random.permutation(anchor_key, embeds.shape[0])
    anchors = jnp.take(embeds, perm[:ANCHOR], axis=0)

    def mha(q, kv):
        qp = q @ params["wq"].T
        kp = kv @ params["wk"].T
        vp = kv @ params["wv"].T
        outs = []
        for h in range(HEAD):
            sl = slice(h * HEAD_DIM, (h + 1) * HEAD_DIM)
            s = (qp[:, sl] @ kp[:, sl].T) * SCALE
            a = jax.nn.softmax(s, axis=-1)
            outs.append(a @ vp[:, sl])
        return jnp.concatenate(outs, axis=-1) @ params["wo"].T

    def ln(x, g, b):
        m = x.mean(-1, keepdims=True)
        v = ((x - m) ** 2).mean(-1, keepdims=True)
        return (x - m) / jnp.sqrt(v + EPS) * g + b

    a = mha(anchors, embeds) + anchors
    h = ln(mha(embeds, a) + embeds, params["g1"], params["beta1"])
    f = jax.nn.relu(h @ params["w1"].T + params["b1"])
    f = jax.nn.relu(f @ params["w2"].T + params["b2"])
    return ln(f + h, params["g2"], params["beta2"])


if __name__ == "__main__":
    key = jax.random.PRNGKey(0)
    k_emb, k_par, k_anchor = jax.random.split(key, 3)

    embeds = jax.random.normal(k_emb, (N_NODES, LATDIM), jnp.float32)
    params = init_params(k_par)
    prep = prepare_params(params)

    out = gt_layer_forward(embeds, prep, k_anchor)
    out = jax.block_until_ready(out)

    assert out.shape == (N_NODES, LATDIM)
    assert bool(jnp.all(jnp.isfinite(out)))

    ref = _reference_forward(embeds, params, k_anchor)
    assert jnp.allclose(out, ref, atol=1e-2, rtol=1e-2), (
        float(jnp.max(jnp.abs(out - ref))))

    print("KERNEL_OK")
</pallas_src>

<mosaic_0001>
module attributes {stable_mosaic.version = 11 : i64} {
  func.func @_gt_layer_kernel(%arg0: memref<8xi32, #tpu.memory_space<smem>>, %arg1: memref<64x32xf32, #tpu.memory_space<vmem>>, %arg2: memref<12x32x8xf32, #tpu.memory_space<vmem>>, %arg3: memref<3x32x32xf32, #tpu.memory_space<vmem>>, %arg4: memref<8x32xf32, #tpu.memory_space<vmem>>, %arg5: memref<64x32xf32, #tpu.memory_space<vmem>>, %arg6: memref<8x32xf32, #tpu.memory_space<vmem>>) attributes {dimension_semantics = [], scalar_prefetch = 0 : i64, scratch_operands = 1 : i64, tpu.core_type = #tpu.core_type<tc>} {
    %c0 = arith.constant 0 : index
    %c0_0 = arith.constant 0 : index
    %0 = vector.load %arg1[%c0, %c0_0] : memref<64x32xf32, #tpu.memory_space<vmem>>, vector<64x32xf32>
    %c0_1 = arith.constant 0 : index
    %c0_2 = arith.constant 0 : index
    %c0_3 = arith.constant 0 : index
    %1 = vector.load %arg2[%c0_1, %c0_2, %c0_3] : memref<12x32x8xf32, #tpu.memory_space<vmem>>, vector<12x32x8xf32>
    %c0_4 = arith.constant 0 : index
    %c0_5 = arith.constant 0 : index
    %c0_6 = arith.constant 0 : index
    %2 = vector.load %arg3[%c0_4, %c0_5, %c0_6] : memref<3x32x32xf32, #tpu.memory_space<vmem>>, vector<1x32x32xf32>
    %3 = vector.shape_cast %2 : vector<1x32x32xf32> to vector<32x32xf32>
    %c1 = arith.constant 1 : index
    %c0_7 = arith.constant 0 : index
    %c0_8 = arith.constant 0 : index
    %4 = vector.load %arg3[%c1, %c0_7, %c0_8] : memref<3x32x32xf32, #tpu.memory_space<vmem>>, vector<1x32x32xf32>
    %5 = vector.shape_cast %4 : vector<1x32x32xf32> to vector<32x32xf32>
    %c2 = arith.constant 2 : index
    %c0_9 = arith.constant 0 : index
    %c0_10 = arith.constant 0 : index
    %6 = vector.load %arg3[%c2, %c0_9, %c0_10] : memref<3x32x32xf32, #tpu.memory_space<vmem>>, vector<1x32x32xf32>
    %7 = vector.shape_cast %6 : vector<1x32x32xf32> to vector<32x32xf32>
    %c0_11 = arith.constant 0 : index
    %c0_12 = arith.constant 0 : index
    %8 = vector.load %arg4[%c0_11, %c0_12] : memref<8x32xf32, #tpu.memory_space<vmem>>, vector<8x32xf32>
    %9 = vector.extract_strided_slice %8 {offsets = [0, 0], sizes = [1, 32], strides = [1, 1]} : vector<8x32xf32> to vector<1x32xf32>
    %10 = vector.extract_strided_slice %8 {offsets = [1, 0], sizes = [1, 32], strides = [1, 1]} : vector<8x32xf32> to vector<1x32xf32>
    %11 = vector.extract_strided_slice %8 {offsets = [2, 0], sizes = [1, 32], strides = [1, 1]} : vector<8x32xf32> to vector<1x32xf32>
    %12 = vector.extract_strided_slice %8 {offsets = [3, 0], sizes = [1, 32], strides = [1, 1]} : vector<8x32xf32> to vector<1x32xf32>
    %13 = vector.extract_strided_slice %8 {offsets = [4, 0], sizes = [1, 32], strides = [1, 1]} : vector<8x32xf32> to vector<1x32xf32>
    %14 = vector.extract_strided_slice %8 {offsets = [5, 0], sizes = [1, 32], strides = [1, 1]} : vector<8x32xf32> to vector<1x32xf32>
    %c0_13 = arith.constant 0 : index
    %15 = memref.load %arg0[%c0_13] : memref<8xi32, #tpu.memory_space<smem>>
    %16 = arith.index_cast %15 : i32 to index
    %c0_14 = arith.constant 0 : index
    %17 = vector.load %arg1[%16, %c0_14] : memref<64x32xf32, #tpu.memory_space<vmem>>, vector<1x32xf32>
    %c0_15 = arith.constant 0 : index
    %c0_16 = arith.constant 0 : index
    %18 = vector.load %arg6[%c0_15, %c0_16] : memref<8x32xf32, #tpu.memory_space<vmem>>, vector<1x32xf32>
    tpu.vector_store %arg6[%c0_15, %c0_16], %17 {strides = array<i32>} : memref<8x32xf32, #tpu.memory_space<vmem>>, vector<1x32xf32>,
    %c1_17 = arith.constant 1 : index
    %19 = memref.load %arg0[%c1_17] : memref<8xi32, #tpu.memory_space<smem>>
    %20 = arith.index_cast %19 : i32 to index
    %c0_18 = arith.constant 0 : index
    %21 = vector.load %arg1[%20, %c0_18] : memref<64x32xf32, #tpu.memory_space<vmem>>, vector<1x32xf32>
    %c1_19 = arith.constant 1 : index
    %c0_20 = arith.constant 0 : index
    %22 = vector.load %arg6[%c1_19, %c0_20] : memref<8x32xf32, #tpu.memory_space<vmem>>, vector<1x32xf32>
    tpu.vector_store %arg6[%c1_19, %c0_20], %21 {strides = array<i32>} : memref<8x32xf32, #tpu.memory_space<vmem>>, vector<1x32xf32>,
    %c2_21 = arith.constant 2 : index
    %23 = memref.load %arg0[%c2_21] : memref<8xi32, #tpu.memory_space<smem>>
    %24 = arith.index_cast %23 : i32 to index
    %c0_22 = arith.constant 0 : index
    %25 = vector.load %arg1[%24, %c0_22] : memref<64x32xf32, #tpu.memory_space<vmem>>, vector<1x32xf32>
    %c2_23 = arith.constant 2 : index
    %c0_24 = arith.constant 0 : index
    %26 = vector.load %arg6[%c2_23, %c0_24] : memref<8x32xf32, #tpu.memory_space<vmem>>, vector<1x32xf32>
    tpu.vector_store %arg6[%c2_23, %c0_24], %25 {strides = array<i32>} : memref<8x32xf32, #tpu.memory_space<vmem>>, vector<1x32xf32>,
    %c3 = arith.constant 3 : index
    %27 = memref.load %arg0[%c3] : memref<8xi32, #tpu.memory_space<smem>>
    %28 = arith.index_cast %27 : i32 to index
    %c0_25 = arith.constant 0 : index
    %29 = vector.load %arg1[%28, %c0_25] : memref<64x32xf32, #tpu.memory_space<vmem>>, vector<1x32xf32>
    %c3_26 = arith.constant 3 : index
    %c0_27 = arith.constant 0 : index
    %30 = vector.load %arg6[%c3_26, %c0_27] : memref<8x32xf32, #tpu.memory_space<vmem>>, vector<1x32xf32>
    tpu.vector_store %arg6[%c3_26, %c0_27], %29 {strides = array<i32>} : memref<8x32xf32, #tpu.memory_space<vmem>>, vector<1x32xf32>,
    %c4 = arith.constant 4 : index
    %31 = memref.load %arg0[%c4] : memref<8xi32, #tpu.memory_space<smem>>
    %32 = arith.index_cast %31 : i32 to index
    %c0_28 = arith.constant 0 : index
    %33 = vector.load %arg1[%32, %c0_28] : memref<64x32xf32, #tpu.memory_space<vmem>>, vector<1x32xf32>
    %c4_29 = arith.constant 4 : index
    %c0_30 = arith.constant 0 : index
    %34 = vector.load %arg6[%c4_29, %c0_30] : memref<8x32xf32, #tpu.memory_space<vmem>>, vector<1x32xf32>
    tpu.vector_store %arg6[%c4_29, %c0_30], %33 {strides = array<i32>} : memref<8x32xf32, #tpu.memory_space<vmem>>, vector<1x32xf32>,
    %c5 = arith.constant 5 : index
    %35 = memref.load %arg0[%c5] : memref<8xi32, #tpu.memory_space<smem>>
    %36 = arith.index_cast %35 : i32 to index
    %c0_31 = arith.constant 0 : index
    %37 = vector.load %arg1[%36, %c0_31] : memref<64x32xf32, #tpu.memory_space<vmem>>, vector<1x32xf32>
    %c5_32 = arith.constant 5 : index
    %c0_33 = arith.constant 0 : index
    %38 = vector.load %arg6[%c5_32, %c0_33] : memref<8x32xf32, #tpu.memory_space<vmem>>, vector<1x32xf32>
    tpu.vector_store %arg6[%c5_32, %c0_33], %37 {strides = array<i32>} : memref<8x32xf32, #tpu.memory_space<vmem>>, vector<1x32xf32>,
    %c6 = arith.constant 6 : index
    %39 = memref.load %arg0[%c6] : memref<8xi32, #tpu.memory_space<smem>>
    %40 = arith.index_cast %39 : i32 to index
    %c0_34 = arith.constant 0 : index
    %41 = vector.load %arg1[%40, %c0_34] : memref<64x32xf32, #tpu.memory_space<vmem>>, vector<1x32xf32>
    %c6_35 = arith.constant 6 : index
    %c0_36 = arith.constant 0 : index
    %42 = vector.load %arg6[%c6_35, %c0_36] : memref<8x32xf32, #tpu.memory_space<vmem>>, vector<1x32xf32>
    tpu.vector_store %arg6[%c6_35, %c0_36], %41 {strides = array<i32>} : memref<8x32xf32, #tpu.memory_space<vmem>>, vector<1x32xf32>,
    %c7 = arith.constant 7 : index
    %43 = memref.load %arg0[%c7] : memref<8xi32, #tpu.memory_space<smem>>
    %44 = arith.index_cast %43 : i32 to index
    %c0_37 = arith.constant 0 : index
    %45 = vector.load %arg1[%44, %c0_37] : memref<64x32xf32, #tpu.memory_space<vmem>>, vector<1x32xf32>
    %c7_38 = arith.constant 7 : index
    %c0_39 = arith.constant 0 : index
    %46 = vector.load %arg6[%c7_38, %c0_39] : memref<8x32xf32, #tpu.memory_space<vmem>>, vector<1x32xf32>
    tpu.vector_store %arg6[%c7_38, %c0_39], %45 {strides = array<i32>} : memref<8x32xf32, #tpu.memory_space<vmem>>, vector<1x32xf32>,
    %c0_40 = arith.constant 0 : index
    %c0_41 = arith.constant 0 : index
    %47 = vector.load %arg6[%c0_40, %c0_41] : memref<8x32xf32, #tpu.memory_space<vmem>>, vector<8x32xf32>
    %48 = vector.shape_cast %47 : vector<8x32xf32> to vector<1x8x32xf32>
    %49 = vector.shape_cast %48 : vector<1x8x32xf32> to vector<1x8x32xf32>
    %50 = vector.broadcast %49 : vector<1x8x32xf32> to vector<4x8x32xf32>
    %51 = vector.shape_cast %0 : vector<64x32xf32> to vector<1x64x32xf32>
    %52 = vector.shape_cast %51 : vector<1x64x32xf32> to vector<1x64x32xf32>
    %53 = vector.broadcast %52 : vector<1x64x32xf32> to vector<8x64x32xf32>
    %54 = vector.extract_strided_slice %1 {offsets = [0, 0, 0], sizes = [4, 32, 8], strides = [1, 1, 1]} : vector<12x32x8xf32> to vector<4x32x8xf32>
    "tpu.trace_start"() <{level = 10 : i32, message = "hqe,hed->hqd"}> : () -> ()
    %cst = arith.constant dense<0.000000e+00> : vector<4x8x8xf32>
    %55 = tpu.matmul %50, %54, %cst {dimension_numbers = #tpu.dot_dimension_numbers<[2], [1], [1], [2], [0, 0, 0, 1, 1, 2], [0], [0]>} : vector<4x8x32xf32>, vector<4x32x8xf32>, vector<4x8x8xf32> -> vector<4x8x8xf32>
    "tpu.trace_stop"() : () -> ()
    %56 = vector.extract_strided_slice %1 {offsets = [4, 0, 0], sizes = [8, 32, 8], strides = [1, 1, 1]} : vector<12x32x8xf32> to vector<8x32x8xf32>
    "tpu.trace_start"() <{level = 10 : i32, message = "hke,hed->hkd"}> : () -> ()
    %cst_42 = arith.constant dense<0.000000e+00> : vector<8x64x8xf32>
    %57 = tpu.matmul %53, %56, %cst_42 {dimension_numbers = #tpu.dot_dimension_numbers<[2], [1], [1], [2], [0, 0, 0, 1, 1, 2], [0], [0]>} : vector<8x64x32xf32>, vector<8x32x8xf32>, vector<8x64x8xf32> -> vector<8x64x8xf32>
    "tpu.trace_stop"() : () -> ()
    %58 = vector.extract_strided_slice %57 {offsets = [0, 0, 0], sizes = [4, 64, 8], strides = [1, 1, 1]} : vector<8x64x8xf32> to vector<4x64x8xf32>
    %59 = vector.extract_strided_slice %57 {offsets = [4, 0, 0], sizes = [4, 64, 8], strides = [1, 1, 1]} : vector<8x64x8xf32> to vector<4x64x8xf32>
    "tpu.trace_start"() <{level = 10 : i32, message = "hqd,hkd->hqk"}> : () -> ()
    %cst_43 = arith.constant dense<0.000000e+00> : vector<4x8x64xf32>
    %60 = tpu.matmul %55, %58, %cst_43 {dimension_numbers = #tpu.dot_dimension_numbers<[2], [2], [1], [1], [0, 0, 0, 1, 1, 1], [0], [0]>} : vector<4x8x8xf32>, vector<4x64x8xf32>, vector<4x8x64xf32> -> vector<4x8x64xf32>
    "tpu.trace_stop"() : () -> ()
    %cst_44 = arith.constant dense<0xFF800000> : vector<4x8xf32>
    %61 = vector.multi_reduction <maximumf>, %60, %cst_44 [2] : vector<4x8x64xf32> to vector<4x8xf32>
    %62 = vector.shape_cast %61 : vector<4x8xf32> to vector<4x8x1xf32>
    %63 = vector.broadcast %62 : vector<4x8x1xf32> to vector<4x8x64xf32>
    %64 = arith.subf %60, %63 : vector<4x8x64xf32>
    %65 = math.exp %64 : vector<4x8x64xf32>
    %cst_45 = arith.constant dense<0.000000e+00> : vector<4x8xf32>
    %66 = vector.multi_reduction <add>, %65, %cst_45 [2] : vector<4x8x64xf32> to vector<4x8xf32>
    %67 = vector.shape_cast %66 : vector<4x8xf32> to vector<4x8x1xf32>
    %68 = tpu.reciprocal %67 {approx = true} : vector<4x8x1xf32> -> vector<4x8x1xf32>
    %69 = vector.broadcast %68 : vector<4x8x1xf32> to vector<4x8x64xf32>
    %70 = arith.mulf %65, %69 : vector<4x8x64xf32>
    "tpu.trace_start"() <{level = 10 : i32, message = "hqk,hkd->hqd"}> : () -> ()
    %cst_46 = arith.constant dense<0.000000e+00> : vector<4x8x8xf32>
    %71 = tpu.matmul %70, %59, %cst_46 {dimension_numbers = #tpu.dot_dimension_numbers<[2], [1], [1], [2], [0, 0, 0, 1, 1, 2], [0], [0]>} : vector<4x8x64xf32>, vector<4x64x8xf32>, vector<4x8x8xf32> -> vector<4x8x8xf32>
    "tpu.trace_stop"() : () -> ()
    %72 = vector.extract_strided_slice %71 {offsets = [0, 0, 0], sizes = [1, 8, 8], strides = [1, 1, 1]} : vector<4x8x8xf32> to vector<1x8x8xf32>
    %73 = vector.shape_cast %72 : vector<1x8x8xf32> to vector<8x8xf32>
    %74 = vector.extract_strided_slice %3 {offsets = [0, 0], sizes = [8, 32], strides = [1, 1]} : vector<32x32xf32> to vector<8x32xf32>
    %cst_47 = arith.constant dense<0.000000e+00> : vector<8x32xf32>
    %75 = tpu.matmul %73, %74, %cst_47 {dimension_numbers = #tpu.dot_dimension_numbers<[1], [0], [0], [1], [0, 0, 1, 1], [], []>} : vector<8x8xf32>, vector<8x32xf32>, vector<8x32xf32> -> vector<8x32xf32>
    %76 = vector.extract_strided_slice %71 {offsets = [1, 0, 0], sizes = [1, 8, 8], strides = [1, 1, 1]} : vector<4x8x8xf32> to vector<1x8x8xf32>
    %77 = vector.shape_cast %76 : vector<1x8x8xf32> to vector<8x8xf32>
    %78 = vector.extract_strided_slice %3 {offsets = [8, 0], sizes = [8, 32], strides = [1, 1]} : vector<32x32xf32> to vector<8x32xf32>
    %cst_48 = arith.constant dense<0.000000e+00> : vector<8x32xf32>
    %79 = tpu.matmul %77, %78, %cst_48 {dimension_numbers = #tpu.dot_dimension_numbers<[1], [0], [0], [1], [0, 0, 1, 1], [], []>} : vector<8x8xf32>, vector<8x32xf32>, vector<8x32xf32> -> vector<8x32xf32>
    %80 = arith.addf %75, %79 : vector<8x32xf32>
    %81 = vector.extract_strided_slice %71 {offsets = [2, 0, 0], sizes = [1, 8, 8], strides = [1, 1, 1]} : vector<4x8x8xf32> to vector<1x8x8xf32>
    %82 = vector.shape_cast %81 : vector<1x8x8xf32> to vector<8x8xf32>
    %83 = vector.extract_strided_slice %3 {offsets = [16, 0], sizes = [8, 32], strides = [1, 1]} : vector<32x32xf32> to vector<8x32xf32>
    %cst_49 = arith.constant dense<0.000000e+00> : vector<8x32xf32>
    %84 = tpu.matmul %82, %83, %cst_49 {dimension_numbers = #tpu.dot_dimension_numbers<[1], [0], [0], [1], [0, 0, 1, 1], [], []>} : vector<8x8xf32>, vector<8x32xf32>, vector<8x32xf32> -> vector<8x32xf32>
    %85 = arith.addf %80, %84 : vector<8x32xf32>
    %86 = vector.extract_strided_slice %71 {offsets = [3, 0, 0], sizes = [1, 8, 8], strides = [1, 1, 1]} : vector<4x8x8xf32> to vector<1x8x8xf32>
    %87 = vector.shape_cast %86 : vector<1x8x8xf32> to vector<8x8xf32>
    %88 = vector.extract_strided_slice %3 {offsets = [24, 0], sizes = [8, 32], strides = [1, 1]} : vector<32x32xf32> to vector<8x32xf32>
    %cst_50 = arith.constant dense<0.000000e+00> : vector<8x32xf32>
    %89 = tpu.matmul %87, %88, %cst_50 {dimension_numbers = #tpu.dot_dimension_numbers<[1], [0], [0], [1], [0, 0, 1, 1], [], []>} : vector<8x8xf32>, vector<8x32xf32>, vector<8x32xf32> -> vector<8x32xf32>
    %90 = arith.addf %85, %89 : vector<8x32xf32>
    %91 = arith.addf %90, %47 : vector<8x32xf32>
    %92 = vector.shape_cast %0 : vector<64x32xf32> to vector<1x64x32xf32>
    %93 = vector.shape_cast %92 : vector<1x64x32xf32> to vector<1x64x32xf32>
    %94 = vector.broadcast %93 : vector<1x64x32xf32> to vector<4x64x32xf32>
    %95 = vector.shape_cast %91 : vector<8x32xf32> to vector<1x8x32xf32>
    %96 = vector.shape_cast %95 : vector<1x8x32xf32> to vector<1x8x32xf32>
    %97 = vector.broadcast %96 : vector<1x8x32xf32> to vector<8x8x32xf32>
    %98 = vector.extract_strided_slice %1 {offsets = [0, 0, 0], sizes = [4, 32, 8], strides = [1, 1, 1]} : vector<12x32x8xf32> to vector<4x32x8xf32>
    "tpu.trace_start"() <{level = 10 : i32, message = "hqe,hed->hqd"}> : () -> ()
    %cst_51 = arith.constant dense<0.000000e+00> : vector<4x64x8xf32>
    %99 = tpu.matmul %94, %98, %cst_51 {dimension_numbers = #tpu.dot_dimension_numbers<[2], [1], [1], [2], [0, 0, 0, 1, 1, 2], [0], [0]>} : vector<4x64x32xf32>, vector<4x32x8xf32>, vector<4x64x8xf32> -> vector<4x64x8xf32>
    "tpu.trace_stop"() : () -> ()
    %100 = vector.extract_strided_slice %1 {offsets = [4, 0, 0], sizes = [8, 32, 8], strides = [1, 1, 1]} : vector<12x32x8xf32> to vector<8x32x8xf32>
    "tpu.trace_start"() <{level = 10 : i32, message = "hke,hed->hkd"}> : () -> ()
    %cst_52 = arith.constant dense<0.000000e+00> : vector<8x8x8xf32>
    %101 = tpu.matmul %97, %100, %cst_52 {dimension_numbers = #tpu.dot_dimension_numbers<[2], [1], [1], [2], [0, 0, 0, 1, 1, 2], [0], [0]>} : vector<8x8x32xf32>, vector<8x32x8xf32>, vector<8x8x8xf32> -> vector<8x8x8xf32>
    "tpu.trace_stop"() : () -> ()
    %102 = vector.extract_strided_slice %101 {offsets = [0, 0, 0], sizes = [4, 8, 8], strides = [1, 1, 1]} : vector<8x8x8xf32> to vector<4x8x8xf32>
    %103 = vector.extract_strided_slice %101 {offsets = [4, 0, 0], sizes = [4, 8, 8], strides = [1, 1, 1]} : vector<8x8x8xf32> to vector<4x8x8xf32>
    "tpu.trace_start"() <{level = 10 : i32, message = "hqd,hkd->hqk"}> : () -> ()
    %cst_53 = arith.constant dense<0.000000e+00> : vector<4x64x8xf32>
    %104 = tpu.matmul %99, %102, %cst_53 {dimension_numbers = #tpu.dot_dimension_numbers<[2], [2], [1], [1], [0, 0, 0, 1, 1, 1], [0], [0]>} : vector<4x64x8xf32>, vector<4x8x8xf32>, vector<4x64x8xf32> -> vector<4x64x8xf32>
    "tpu.trace_stop"() : () -> ()
    %cst_54 = arith.constant dense<0xFF800000> : vector<4x64xf32>
    %105 = vector.multi_reduction <maximumf>, %104, %cst_54 [2] : vector<4x64x8xf32> to vector<4x64xf32>
    %106 = vector.shape_cast %105 : vector<4x64xf32> to vector<4x64x1xf32>
    %107 = vector.broadcast %106 : vector<4x64x1xf32> to vector<4x64x8xf32>
    %108 = arith.subf %104, %107 : vector<4x64x8xf32>
    %109 = math.exp %108 : vector<4x64x8xf32>
    %cst_55 = arith.constant dense<0.000000e+00> : vector<4x64xf32>
    %110 = vector.multi_reduction <add>, %109, %cst_55 [2] : vector<4x64x8xf32> to vector<4x64xf32>
    %111 = vector.shape_cast %110 : vector<4x64xf32> to vector<4x64x1xf32>
    %112 = tpu.reciprocal %111 {approx = true} : vector<4x64x1xf32> -> vector<4x64x1xf32>
    %113 = vector.broadcast %112 : vector<4x64x1xf32> to vector<4x64x8xf32>
    %114 = arith.mulf %109, %113 : vector<4x64x8xf32>
    "tpu.trace_start"() <{level = 10 : i32, message = "hqk,hkd->hqd"}> : () -> ()
    %cst_56 = arith.constant dense<0.000000e+00> : vector<4x64x8xf32>
    %115 = tpu.matmul %114, %103, %cst_56 {dimension_numbers = #tpu.dot_dimension_numbers<[2], [1], [1], [2], [0, 0, 0, 1, 1, 2], [0], [0]>} : vector<4x64x8xf32>, vector<4x8x8xf32>, vector<4x64x8xf32> -> vector<4x64x8xf32>
    "tpu.trace_stop"() : () -> ()
    %116 = vector.extract_strided_slice %115 {offsets = [0, 0, 0], sizes = [1, 64, 8], strides = [1, 1, 1]} : vector<4x64x8xf32> to vector<1x64x8xf32>
    %117 = vector.shape_cast %116 : vector<1x64x8xf32> to vector<64x8xf32>
    %118 = vector.extract_strided_slice %3 {offsets = [0, 0], sizes = [8, 32], strides = [1, 1]} : vector<32x32xf32> to vector<8x32xf32>
    %cst_57 = arith.constant dense<0.000000e+00> : vector<64x32xf32>
    %119 = tpu.matmul %117, %118, %cst_57 {dimension_numbers = #tpu.dot_dimension_numbers<[1], [0], [0], [1], [0, 0, 1, 1], [], []>} : vector<64x8xf32>, vector<8x32xf32>, vector<64x32xf32> -> vector<64x32xf32>
    %120 = vector.extract_strided_slice %115 {offsets = [1, 0, 0], sizes = [1, 64, 8], strides = [1, 1, 1]} : vector<4x64x8xf32> to vector<1x64x8xf32>
    %121 = vector.shape_cast %120 : vector<1x64x8xf32> to vector<64x8xf32>
    %122 = vector.extract_strided_slice %3 {offsets = [8, 0], sizes = [8, 32], strides = [1, 1]} : vector<32x32xf32> to vector<8x32xf32>
    %cst_58 = arith.constant dense<0.000000e+00> : vector<64x32xf32>
    %123 = tpu.matmul %121, %122, %cst_58 {dimension_numbers = #tpu.dot_dimension_numbers<[1], [0], [0], [1], [0, 0, 1, 1], [], []>} : vector<64x8xf32>, vector<8x32xf32>, vector<64x32xf32> -> vector<64x32xf32>
    %124 = arith.addf %119, %123 : vector<64x32xf32>
    %125 = vector.extract_strided_slice %115 {offsets = [2, 0, 0], sizes = [1, 64, 8], strides = [1, 1, 1]} : vector<4x64x8xf32> to vector<1x64x8xf32>
    %126 = vector.shape_cast %125 : vector<1x64x8xf32> to vector<64x8xf32>
    %127 = vector.extract_strided_slice %3 {offsets = [16, 0], sizes = [8, 32], strides = [1, 1]} : vector<32x32xf32> to vector<8x32xf32>
    %cst_59 = arith.constant dense<0.000000e+00> : vector<64x32xf32>
    %128 = tpu.matmul %126, %127, %cst_59 {dimension_numbers = #tpu.dot_dimension_numbers<[1], [0], [0], [1], [0, 0, 1, 1], [], []>} : vector<64x8xf32>, vector<8x32xf32>, vector<64x32xf32> -> vector<64x32xf32>
    %129 = arith.addf %124, %128 : vector<64x32xf32>
    %130 = vector.extract_strided_slice %115 {offsets = [3, 0, 0], sizes = [1, 64, 8], strides = [1, 1, 1]} : vector<4x64x8xf32> to vector<1x64x8xf32>
    %131 = vector.shape_cast %130 : vector<1x64x8xf32> to vector<64x8xf32>
    %132 = vector.extract_strided_slice %3 {offsets = [24, 0], sizes = [8, 32], strides = [1, 1]} : vector<32x32xf32> to vector<8x32xf32>
    %cst_60 = arith.constant dense<0.000000e+00> : vector<64x32xf32>
    %133 = tpu.matmul %131, %132, %cst_60 {dimension_numbers = #tpu.dot_dimension_numbers<[1], [0], [0], [1], [0, 0, 1, 1], [], []>} : vector<64x8xf32>, vector<8x32xf32>, vector<64x32xf32> -> vector<64x32xf32>
    %134 = arith.addf %129, %133 : vector<64x32xf32>
    %135 = arith.addf %134, %0 : vector<64x32xf32>
    %cst_61 = arith.constant dense<0.000000e+00> : vector<64xf32>
    %136 = vector.multi_reduction <add>, %135, %cst_61 [1] : vector<64x32xf32> to vector<64xf32>
    %137 = vector.shape_cast %136 : vector<64xf32> to vector<64x1xf32>
    %cst_62 = arith.constant 3.200000e+01 : f32
    %138 = vector.broadcast %cst_62 : f32 to vector<64x1xf32>
    %139 = arith.divf %137, %138 : vector<64x1xf32>
    %140 = vector.broadcast %139 : vector<64x1xf32> to vector<64x32xf32>
    %141 = arith.subf %135, %140 : vector<64x32xf32>
    %142 = arith.mulf %141, %141 : vector<64x32xf32>
    %cst_63 = arith.constant dense<0.000000e+00> : vector<64xf32>
    %143 = vector.multi_reduction <add>, %142, %cst_63 [1] : vector<64x32xf32> to vector<64xf32>
    %144 = vector.shape_cast %143 : vector<64xf32> to vector<64x1xf32>
    %cst_64 = arith.constant 3.200000e+01 : f32
    %145 = vector.broadcast %cst_64 : f32 to vector<64x1xf32>
    %146 = arith.divf %144, %145 : vector<64x1xf32>
    %147 = vector.broadcast %139 : vector<64x1xf32> to vector<64x32xf32>
    %148 = arith.subf %135, %147 : vector<64x32xf32>
    %cst_65 = arith.constant 9.99999974E-6 : f32
    %149 = vector.broadcast %cst_65 : f32 to vector<64x1xf32>
    %150 = arith.addf %146, %149 : vector<64x1xf32>
    %151 = math.rsqrt %150 : vector<64x1xf32>
    %152 = vector.broadcast %151 : vector<64x1xf32> to vector<64x32xf32>
    %153 = arith.mulf %148, %152 : vector<64x32xf32>
    %154 = vector.broadcast %11 : vector<1x32xf32> to vector<64x32xf32>
    %155 = arith.mulf %153, %154 : vector<64x32xf32>
    %156 = vector.broadcast %12 : vector<1x32xf32> to vector<64x32xf32>
    %157 = arith.addf %155, %156 : vector<64x32xf32>
    %cst_66 = arith.constant dense<0.000000e+00> : vector<64x32xf32>
    %158 = tpu.matmul %157, %5, %cst_66 {dimension_numbers = #tpu.dot_dimension_numbers<[1], [0], [0], [1], [0, 0, 1, 1], [], []>} : vector<64x32xf32>, vector<32x32xf32>, vector<64x32xf32> -> vector<64x32xf32>
    %159 = vector.broadcast %9 : vector<1x32xf32> to vector<64x32xf32>
    %160 = arith.addf %158, %159 : vector<64x32xf32>
    %cst_67 = arith.constant 0.000000e+00 : f32
    %161 = vector.broadcast %cst_67 : f32 to vector<64x32xf32>
    %162 = arith.maximumf %160, %161 : vector<64x32xf32>
    %cst_68 = arith.constant dense<0.000000e+00> : vector<64x32xf32>
    %163 = tpu.matmul %162, %7, %cst_68 {dimension_numbers = #tpu.dot_dimension_numbers<[1], [0], [0], [1], [0, 0, 1, 1], [], []>} : vector<64x32xf32>, vector<32x32xf32>, vector<64x32xf32> -> vector<64x32xf32>
    %164 = vector.broadcast %10 : vector<1x32xf32> to vector<64x32xf32>
    %165 = arith.addf %163, %164 : vector<64x32xf32>
    %cst_69 = arith.constant 0.000000e+00 : f32
    %166 = vector.broadcast %cst_69 : f32 to vector<64x32xf32>
    %167 = arith.maximumf %165, %166 : vector<64x32xf32>
    %168 = arith.addf %167, %157 : vector<64x32xf32>
    %cst_70 = arith.constant dense<0.000000e+00> : vector<64xf32>
    %169 = vector.multi_reduction <add>, %168, %cst_70 [1] : vector<64x32xf32> to vector<64xf32>
    %170 = vector.shape_cast %169 : vector<64xf32> to vector<64x1xf32>
    %cst_71 = arith.constant 3.200000e+01 : f32
    %171 = vector.broadcast %cst_71 : f32 to vector<64x1xf32>
    %172 = arith.divf %170, %171 : vector<64x1xf32>
    %173 = vector.broadcast %172 : vector<64x1xf32> to vector<64x32xf32>
    %174 = arith.subf %168, %173 : vector<64x32xf32>
    %175 = arith.mulf %174, %174 : vector<64x32xf32>
    %cst_72 = arith.constant dense<0.000000e+00> : vector<64xf32>
    %176 = vector.multi_reduction <add>, %175, %cst_72 [1] : vector<64x32xf32> to vector<64xf32>
    %177 = vector.shape_cast %176 : vector<64xf32> to vector<64x1xf32>
    %cst_73 = arith.constant 3.200000e+01 : f32
    %178 = vector.broadcast %cst_73 : f32 to vector<64x1xf32>
    %179 = arith.divf %177, %178 : vector<64x1xf32>
    %180 = vector.broadcast %172 : vector<64x1xf32> to vector<64x32xf32>
    %181 = arith.subf %168, %180 : vector<64x32xf32>
    %cst_74 = arith.constant 9.99999974E-6 : f32
    %182 = vector.broadcast %cst_74 : f32 to vector<64x1xf32>
    %183 = arith.addf %179, %182 : vector<64x1xf32>
    %184 = math.rsqrt %183 : vector<64x1xf32>
    %185 = vector.broadcast %184 : vector<64x1xf32> to vector<64x32xf32>
    %186 = arith.mulf %181, %185 : vector<64x32xf32>
    %187 = vector.broadcast %13 : vector<1x32xf32> to vector<64x32xf32>
    %188 = arith.mulf %186, %187 : vector<64x32xf32>
    %189 = vector.broadcast %14 : vector<1x32xf32> to vector<64x32xf32>
    %190 = arith.addf %188, %189 : vector<64x32xf32>
    %c0_75 = arith.constant 0 : index
    %c0_76 = arith.constant 0 : index
    %191 = vector.load %arg5[%c0_75, %c0_76] : memref<64x32xf32, #tpu.memory_space<vmem>>, vector<64x32xf32>
    tpu.vector_store %arg5[%c0_75, %c0_76], %190 {strides = array<i32>} : memref<64x32xf32, #tpu.memory_space<vmem>>, vector<64x32xf32>,
    return
  }
}

</mosaic_0001>

<llo_original>
// kernel: gt_layer_forward.1
$region0: #{gt_layer_forward.1}
  #allocation0 [shape = 'u32[]', space=smem, size = 0x4, offset = 0x4, fixed_abs, tag = 'smem constant byte address 0x4 - core index']
  #allocation1 [shape = 'u32[144,128]{1,0:T(1,128)}', space=vmem, size = 0x12000, scoped, tag = 'internal scratch']
  #allocation2 [shape = 'f32[8,32]{1,0:T(8,128)}', space=vmem, size = 0x1000, scoped, tag = 'scratch operand']
  %s0 = inlined_call_operand.vmem [shape: s32[8], index: 0, kind: input, shape index: {}]
  %s1 = inlined_call_operand.vmem [shape: f32[64,32], index: 1, kind: input, shape index: {}]
  %s2 = inlined_call_operand.vmem [shape: f32[12,32,8], index: 2, kind: input, shape index: {}]
  %s3 = inlined_call_operand.vmem [shape: f32[3,32,32], index: 3, kind: input, shape index: {}]
  %s4 = inlined_call_operand.vmem [shape: f32[8,32], index: 4, kind: input, shape index: {}]
  %s5 = inlined_call_operand.vmem [shape: f32[64,32], index: 5, kind: output, shape index: {}]
  %s6 = sld [smem:[#allocation0]]
  $region34: #{gt_layer_forward.1} parent=0
    _
  %s8 = ssub.s32 1, %s6
  %s9 = scalar_select 0, %s8, %s6
  $region1: #{gt_layer_forward.1} parent=0
    #allocation3 [shape = 'u8[512]{0}', space=smem, size = 0x200, scoped, tag = 'input window, operand 0, single buffered']
    #allocation4 [shape = 's32[1]{0}', space=sflag, size = 0x4, scoped, tag = 'scoped memory for gt_layer_forward.1']
    %10 = vsyncpa [#allocation4], 0
    // Predicated region
    $region2: #{gt_layer_forward.1} parent=1 // pred_check
      _
    $region3: #{gt_layer_forward.1} parent=1 // pred_check_branch
      %12 = sbr.rel (0) target = $region5
    $region4: #{gt_layer_forward.1} parent=1 // pred_region
      %s14 = ssub.s32 16, 16
      %15 = vsyncadd [#allocation4], %s14
      %s17 = sshll.u32 %s0, 4
      %s18 = int_to_ptr.vmem [resolvable:$true] %s17
      %20 = dma.vmem_to_smem %s18, 16, [#allocation3], [#allocation4]
    $region5: #{gt_layer_forward.1} parent=1 // pred_fallthru
      _
    // Predicated region
    $region6: #{gt_layer_forward.1} parent=1 // pred_check
      _
    $region7: #{gt_layer_forward.1} parent=1 // pred_check_branch
      %22 = sbr.rel (0) target = $region9
    $region8: #{gt_layer_forward.1} parent=1 // pred_region
      _
    $region9: #{gt_layer_forward.1} parent=1 // pred_fallthru
      _
    // Predicated region
    $region10: #{gt_layer_forward.1} parent=1 // pred_check
      _
    $region11: #{gt_layer_forward.1} parent=1 // pred_check_branch
      %24 = sbr.rel (0) target = $region13
    $region12: #{gt_layer_forward.1} parent=1 // pred_region
      _
    $region13: #{gt_layer_forward.1} parent=1 // pred_fallthru
      _
    // Predicated region
    $region14: #{gt_layer_forward.1} parent=1 // pred_check
      _
    $region15: #{gt_layer_forward.1} parent=1 // pred_check_branch
      %26 = sbr.rel (0) target = $region17
    $region16: #{gt_layer_forward.1} parent=1 // pred_region
      _
    $region17: #{gt_layer_forward.1} parent=1 // pred_fallthru
      _
    // Predicated region
    $region18: #{gt_layer_forward.1} parent=1 // pred_check
      _
    $region19: #{gt_layer_forward.1} parent=1 // pred_check_branch
      %28 = sbr.rel (0) target = $region21
    $region20: #{gt_layer_forward.1} parent=1 // pred_region
      _
    $region21: #{gt_layer_forward.1} parent=1 // pred_fallthru
      _
    // Predicated region
    $region22: #{gt_layer_forward.1} parent=1 // pred_check
      _
    $region23: #{gt_layer_forward.1} parent=1 // pred_check_branch
      %30 = sbr.rel (0) target = $region25
    $region24: #{gt_layer_forward.1} parent=1 // pred_region
      %31 = dma.done [#allocation4], 16
    $region25: #{gt_layer_forward.1} parent=1 // pred_fallthru
      _
    %32 = sfence
    %v33 = vld [vmem:[%s1] sm:$0xff]
    %v34 = vld [vmem:[%s1 + $0x8] sm:$0xff]
    %v35 = vld [vmem:[%s1 + $0x10] sm:$0xff]
    %v36 = vld [vmem:[%s1 + $0x18] sm:$0xff]
    %v37 = vld [vmem:[%s1 + $0x20] sm:$0xff]
    %v38 = vld [vmem:[%s1 + $0x28] sm:$0xff]
    %v39 = vld [vmem:[%s1 + $0x30] sm:$0xff]
    %v40 = vld [vmem:[%s1 + $0x38] sm:$0xff]
    %v41 = vld [vmem:[%s2] sm:$0xff]
    %v42 = vld [vmem:[%s2 + $0x8] sm:$0xff]
    %v43 = vld [vmem:[%s2 + $0x10] sm:$0xff]
    %v44 = vld [vmem:[%s2 + $0x18] sm:$0xff]
    %v45 = vld [vmem:[%s2 + $0x20] sm:$0xff]
    %v46 = vld [vmem:[%s2 + $0x28] sm:$0xff]
    %v47 = vld [vmem:[%s2 + $0x30] sm:$0xff]
    %v48 = vld [vmem:[%s2 + $0x38] sm:$0xff]
    %v49 = vld [vmem:[%s2 + $0x40] sm:$0xff]
    %v50 = vld [vmem:[%s2 + $0x48] sm:$0xff]
    %v51 = vld [vmem:[%s2 + $0x50] sm:$0xff]
    %v52 = vld [vmem:[%s2 + $0x58] sm:$0xff]
    %v53 = vld [vmem:[%s2 + $0x60] sm:$0xff]
    %v54 = vld [vmem:[%s2 + $0x68] sm:$0xff]
    %v55 = vld [vmem:[%s2 + $0x70] sm:$0xff]
    %v56 = vld [vmem:[%s2 + $0x78] sm:$0xff]
    %v57 = vld [vmem:[%s2 + $0x80] sm:$0xff]
    %v58 = vld [vmem:[%s2 + $0x88] sm:$0xff]
    %v59 = vld [vmem:[%s2 + $0x90] sm:$0xff]
    %v60 = vld [vmem:[%s2 + $0x98] sm:$0xff]
    %v61 = vld [vmem:[%s2 + $0xa0] sm:$0xff]
    %v62 = vld [vmem:[%s2 + $0xa8] sm:$0xff]
    %v63 = vld [vmem:[%s2 + $0xb0] sm:$0xff]
    %v64 = vld [vmem:[%s2 + $0xb8] sm:$0xff]
    %v65 = vld [vmem:[%s2 + $0xc0] sm:$0xff]
    %v66 = vld [vmem:[%s2 + $0xc8] sm:$0xff]
    %v67 = vld [vmem:[%s2 + $0xd0] sm:$0xff]
    %v68 = vld [vmem:[%s2 + $0xd8] sm:$0xff]
    %v69 = vld [vmem:[%s2 + $0xe0] sm:$0xff]
    %v70 = vld [vmem:[%s2 + $0xe8] sm:$0xff]
    %v71 = vld [vmem:[%s2 + $0xf0] sm:$0xff]
    %v72 = vld [vmem:[%s2 + $0xf8] sm:$0xff]
    %v73 = vld [vmem:[%s2 + $0x100] sm:$0xff]
    %v74 = vld [vmem:[%s2 + $0x108] sm:$0xff]
    %v75 = vld [vmem:[%s2 + $0x110] sm:$0xff]
    %v76 = vld [vmem:[%s2 + $0x118] sm:$0xff]
    %v77 = vld [vmem:[%s2 + $0x120] sm:$0xff]
    %v78 = vld [vmem:[%s2 + $0x128] sm:$0xff]
    %v79 = vld [vmem:[%s2 + $0x130] sm:$0xff]
    %v80 = vld [vmem:[%s2 + $0x138] sm:$0xff]
    %v81 = vld [vmem:[%s2 + $0x140] sm:$0xff]
    %v82 = vld [vmem:[%s2 + $0x148] sm:$0xff]
    %v83 = vld [vmem:[%s2 + $0x150] sm:$0xff]
    %v84 = vld [vmem:[%s2 + $0x158] sm:$0xff]
    %v85 = vld [vmem:[%s2 + $0x160] sm:$0xff]
    %v86 = vld [vmem:[%s2 + $0x168] sm:$0xff]
    %v87 = vld [vmem:[%s2 + $0x170] sm:$0xff]
    %v88 = vld [vmem:[%s2 + $0x178] sm:$0xff]
    %v89 = vld [vmem:[%s3] sm:$0xff]
    %v90 = vld [vmem:[%s3 + $0x8] sm:$0xff]
    %v91 = vld [vmem:[%s3 + $0x10] sm:$0xff]
    %v92 = vld [vmem:[%s3 + $0x18] sm:$0xff]
    %s93 = scalar_lea.vmem %s3, 32
    %v94 = vld [vmem:[%s93] sm:$0xff]
    %v95 = vld [vmem:[%s93 + $0x8] sm:$0xff]
    %v96 = vld [vmem:[%s93 + $0x10] sm:$0xff]
    %v97 = vld [vmem:[%s93 + $0x18] sm:$0xff]
    %s98 = scalar_lea.vmem %s3, 64
    %v99 = vld [vmem:[%s98] sm:$0xff]
    %v100 = vld [vmem:[%s98 + $0x8] sm:$0xff]
    %v101 = vld [vmem:[%s98 + $0x10] sm:$0xff]
    %v102 = vld [vmem:[%s98 + $0x18] sm:$0xff]
    %v103 = vld [vmem:[%s4] sm:$0xff]
    %s104 = sld [smem:[#allocation3]]
    %s105 = scalar_lea.vmem %s1, %s104
    %v106 = vld [vmem:[%s105] sm:$0x1]
    %vm107 = vcmask 253952
    %108 = vst.msk [vmem:[#allocation2] sm:$0x1] %vm107, %v106
    %s109 = sld [smem:[#allocation3 + $0x1]]
    %s110 = scalar_lea.vmem %s1, %s109
    %v111 = vld [vmem:[%s110] sm:$0x1]
    %112 = vst.msk [vmem:[#allocation2 + $0x1] sm:$0x1] %vm107, %v111
    %s113 = sld [smem:[#allocation3 + $0x2]]
    %s114 = scalar_lea.vmem %s1, %s113
    %v115 = vld [vmem:[%s114] sm:$0x1]
    %116 = vst.msk [vmem:[#allocation2 + $0x2] sm:$0x1] %vm107, %v115
    %s117 = sld [smem:[#allocation3 + $0x3]]
    %s118 = scalar_lea.vmem %s1, %s117
    %v119 = vld [vmem:[%s118] sm:$0x1]
    %120 = vst.msk [vmem:[#allocation2 + $0x3] sm:$0x1] %vm107, %v119
    %s121 = sld [smem:[#allocation3 + $0x4]]
    %s122 = scalar_lea.vmem %s1, %s121
    %v123 = vld [vmem:[%s122] sm:$0x1]
    %124 = vst.msk [vmem:[#allocation2 + $0x4] sm:$0x1] %vm107, %v123
    %s125 = sld [smem:[#allocation3 + $0x5]]
    %s126 = scalar_lea.vmem %s1, %s125
    %v127 = vld [vmem:[%s126] sm:$0x1]
    %128 = vst.msk [vmem:[#allocation2 + $0x5] sm:$0x1] %vm107, %v127
    %s129 = sld [smem:[#allocation3 + $0x6]]
    %s130 = scalar_lea.vmem %s1, %s129
    %v131 = vld [vmem:[%s130] sm:$0x1]
    %132 = vst.msk [vmem:[#allocation2 + $0x6] sm:$0x1] %vm107, %v131
    %s133 = sld [smem:[#allocation3 + $0x7]]
    %s134 = scalar_lea.vmem %s1, %s133
    %v135 = vld [vmem:[%s134] sm:$0x1]
    %136 = vst.msk [vmem:[#allocation2 + $0x7] sm:$0x1] %vm107, %v135
    %v137 = vld [vmem:[#allocation2] sm:$0xff]
    %vm138 = vcmask 261120
    %v140 = vsel %vm138, %v137, 0
    %142 = vmatprep.subr.mxu0 0.0
    %143 = vmatpush1.msra.mxu0 %v41
    %144 = vmatprep.subr.mxu0 0.0
    %145 = vmatpush1.msra.mxu0 %v42
    %146 = vmatprep.subr.mxu0 0.0
    %147 = vmatpush1.msra.mxu0 %v43
    %148 = vmatprep.subr.mxu0 0.0
    %149 = vmatpush1.msra.mxu0 %v44
    %150 = vmatprep.subr.mxu0 0.0
    %151 = vmatpush1.msra.mxu0 0.0
    %152 = vmatprep.subr.mxu0 0.0
    %153 = vmatpush1.msra.mxu0 0.0
    %154 = vmatprep.subr.mxu0 0.0
    %155 = vmatpush1.msra.mxu0 0.0
    %156 = vmatprep.subr.mxu0 0.0
    %157 = vmatpush1.msra.mxu0 0.0
    %158 = vmatprep.subr.mxu0 0.0
    %159 = vmatpush1.msra.mxu0 0.0
    %160 = vmatprep.subr.mxu0 0.0
    %161 = vmatpush1.msra.mxu0 0.0
    %162 = vmatprep.subr.mxu0 0.0
    %163 = vmatpush1.msra.mxu0 0.0
    %164 = vmatprep.subr.mxu0 0.0
    %165 = vmatpush1.msra.mxu0 0.0
    %166 = vmatprep.subr.mxu0 0.0
    %167 = vmatpush1.msra.mxu0 0.0
    %168 = vmatprep.subr.mxu0 0.0
    %169 = vmatpush1.msra.mxu0 0.0
    %170 = vmatprep.subr.mxu0 0.0
    %171 = vmatpush1.msra.mxu0 0.0
    %172 = vmatprep.subr.mxu0 0.0
    %173 = vmatpush1.msra.mxu0 0.0
    %174 = vmatprep.subr.mxu0 0.0
    %175 = vmatpush1.msra.mxu0 0.0
    %176 = vmatprep.subr.mxu0 0.0
    %177 = vmatpush1.msra.mxu0 0.0
    %178 = vmatprep.subr.mxu0 0.0
    %179 = vmatpush1.msra.mxu0 0.0
    %180 = vmatprep.subr.mxu0 0.0
    %181 = vmatpush1.msra.mxu0 0.0
    %182 = vmatprep.subr.mxu0 0.0
    %183 = vmatpush1.msra.mxu0 0.0
    %184 = vmatprep.subr.mxu0 0.0
    %185 = vmatpush1.msra.mxu0 0.0
    %186 = vmatprep.subr.mxu0 0.0
    %187 = vmatpush1.msra.mxu0 0.0
    %188 = vmatprep.subr.mxu0 0.0
    %189 = vmatpush1.msra.mxu0 0.0
    %190 = vmatprep.subr.mxu0 0.0
    %191 = vmatpush1.msra.mxu0 0.0
    %192 = vmatprep.subr.mxu0 0.0
    %193 = vmatpush1.msra.mxu0 0.0
    %194 = vmatprep.subr.mxu0 0.0
    %195 = vmatpush1.msra.mxu0 0.0
    %196 = vmatprep.subr.mxu0 0.0
    %197 = vmatpush1.msra.mxu0 0.0
    %198 = vmatprep.subr.mxu0 0.0
    %199 = vmatpush1.msra.mxu0 0.0
    %200 = vmatprep.subr.mxu0 0.0
    %201 = vmatpush1.msra.mxu0 0.0
    %202 = vmatprep.subr.mxu0 0.0
    %203 = vmatpush1.msra.mxu0 0.0
    %204 = vmatprep.subr.mxu0 0.0
    %205 = vmatpush1.msra.mxu0 0.0
    %206 = vmatprep.mubr.f32.mxu0 0.0
    %207 = vmatmul.mubr.f32.gmra.mrb[0].mxu0 %v140
    %v208 = vpop.f32.mrb[0].mxu0
    %v209 = vadd.f32 0.0, %v208
    %v210 = vpop.f32.mrb[0].mxu0
    %211 = vdwg.mxu0
    %212 = vmatprep.subr.mxu0 0.0
    %213 = vmatpush1.msra.mxu0 %v45
    %214 = vmatprep.subr.mxu0 0.0
    %215 = vmatpush1.msra.mxu0 %v46
    %216 = vmatprep.subr.mxu0 0.0
    %217 = vmatpush1.msra.mxu0 %v47
    %218 = vmatprep.subr.mxu0 0.0
    %219 = vmatpush1.msra.mxu0 %v48
    %220 = vmatprep.subr.mxu0 0.0
    %221 = vmatpush1.msra.mxu0 0.0
    %222 = vmatprep.subr.mxu0 0.0
    %223 = vmatpush1.msra.mxu0 0.0
    %224 = vmatprep.subr.mxu0 0.0
    %225 = vmatpush1.msra.mxu0 0.0
    %226 = vmatprep.subr.mxu0 0.0
    %227 = vmatpush1.msra.mxu0 0.0
    %228 = vmatprep.subr.mxu0 0.0
    %229 = vmatpush1.msra.mxu0 0.0
    %230 = vmatprep.subr.mxu0 0.0
    %231 = vmatpush1.msra.mxu0 0.0
    %232 = vmatprep.subr.mxu0 0.0
    %233 = vmatpush1.msra.mxu0 0.0
    %234 = vmatprep.subr.mxu0 0.0
    %235 = vmatpush1.msra.mxu0 0.0
    %236 = vmatprep.subr.mxu0 0.0
    %237 = vmatpush1.msra.mxu0 0.0
    %238 = vmatprep.subr.mxu0 0.0
    %239 = vmatpush1.msra.mxu0 0.0
    %240 = vmatprep.subr.mxu0 0.0
    %241 = vmatpush1.msra.mxu0 0.0
    %242 = vmatprep.subr.mxu0 0.0
    %243 = vmatpush1.msra.mxu0 0.0
    %244 = vmatprep.subr.mxu0 0.0
    %245 = vmatpush1.msra.mxu0 0.0
    %246 = vmatprep.subr.mxu0 0.0
    %247 = vmatpush1.msra.mxu0 0.0
    %248 = vmatprep.subr.mxu0 0.0
    %249 = vmatpush1.msra.mxu0 0.0
    %250 = vmatprep.subr.mxu0 0.0
    %251 = vmatpush1.msra.mxu0 0.0
    %252 = vmatprep.subr.mxu0 0.0
    %253 = vmatpush1.msra.mxu0 0.0
    %254 = vmatprep.subr.mxu0 0.0
    %255 = vmatpush1.msra.mxu0 0.0
    %256 = vmatprep.subr.mxu0 0.0
    %257 = vmatpush1.msra.mxu0 0.0
    %258 = vmatprep.subr.mxu0 0.0
    %259 = vmatpush1.msra.mxu0 0.0
    %260 = vmatprep.subr.mxu0 0.0
    %261 = vmatpush1.msra.mxu0 0.0
    %262 = vmatprep.subr.mxu0 0.0
    %263 = vmatpush1.msra.mxu0 0.0
    %264 = vmatprep.subr.mxu0 0.0
    %265 = vmatpush1.msra.mxu0 0.0
    %266 = vmatprep.subr.mxu0 0.0
    %267 = vmatpush1.msra.mxu0 0.0
    %268 = vmatprep.subr.mxu0 0.0
    %269 = vmatpush1.msra.mxu0 0.0
    %270 = vmatprep.subr.mxu0 0.0
    %271 = vmatpush1.msra.mxu0 0.0
    %272 = vmatprep.subr.mxu0 0.0
    %273 = vmatpush1.msra.mxu0 0.0
    %274 = vmatprep.subr.mxu0 0.0
    %275 = vmatpush1.msra.mxu0 0.0
    %276 = vmatprep.mubr.f32.mxu0 0.0
    %277 = vmatmul.mubr.f32.gmra.mrb[0].mxu0 %v140
    %v278 = vpop.f32.mrb[0].mxu0
    %v279 = vadd.f32 0.0, %v278
    %v280 = vpop.f32.mrb[0].mxu0
    %281 = vdwg.mxu0
    %282 = vmatprep.subr.mxu0 0.0
    %283 = vmatpush1.msra.mxu0 %v49
    %284 = vmatprep.subr.mxu0 0.0
    %285 = vmatpush1.msra.mxu0 %v50
    %286 = vmatprep.subr.mxu0 0.0
    %287 = vmatpush1.msra.mxu0 %v51
    %288 = vmatprep.subr.mxu0 0.0
    %289 = vmatpush1.msra.mxu0 %v52
    %290 = vmatprep.subr.mxu0 0.0
    %291 = vmatpush1.msra.mxu0 0.0
    %292 = vmatprep.subr.mxu0 0.0
    %293 = vmatpush1.msra.mxu0 0.0
    %294 = vmatprep.subr.mxu0 0.0
    %295 = vmatpush1.msra.mxu0 0.0
    %296 = vmatprep.subr.mxu0 0.0
    %297 = vmatpush1.msra.mxu0 0.0
    %298 = vmatprep.subr.mxu0 0.0
    %299 = vmatpush1.msra.mxu0 0.0
    %300 = vmatprep.subr.mxu0 0.0
    %301 = vmatpush1.msra.mxu0 0.0
    %302 = vmatprep.subr.mxu0 0.0
    %303 = vmatpush1.msra.mxu0 0.0
    %304 = vmatprep.subr.mxu0 0.0
    %305 = vmatpush1.msra.mxu0 0.0
    %306 = vmatprep.subr.mxu0 0.0
    %307 = vmatpush1.msra.mxu0 0.0
    %308 = vmatprep.subr.mxu0 0.0
    %309 = vmatpush1.msra.mxu0 0.0
    %310 = vmatprep.subr.mxu0 0.0
    %311 = vmatpush1.msra.mxu0 0.0
    %312 = vmatprep.subr.mxu0 0.0
    %313 = vmatpush1.msra.mxu0 0.0
    %314 = vmatprep.subr.mxu0 0.0
    %315 = vmatpush1.msra.mxu0 0.0
    %316 = vmatprep.subr.mxu0 0.0
    %317 = vmatpush1.msra.mxu0 0.0
    %318 = vmatprep.subr.mxu0 0.0
    %319 = vmatpush1.msra.mxu0 0.0
    %320 = vmatprep.subr.mxu0 0.0
    %321 = vmatpush1.msra.mxu0 0.0
    %322 = vmatprep.subr.mxu0 0.0
    %323 = vmatpush1.msra.mxu0 0.0
    %324 = vmatprep.subr.mxu0 0.0
    %325 = vmatpush1.msra.mxu0 0.0
    %326 = vmatprep.subr.mxu0 0.0
    %327 = vmatpush1.msra.mxu0 0.0
    %328 = vmatprep.subr.mxu0 0.0
    %329 = vmatpush1.msra.mxu0 0.0
    %330 = vmatprep.subr.mxu0 0.0
    %331 = vmatpush1.msra.mxu0 0.0
    %332 = vmatprep.subr.mxu0 0.0
    %333 = vmatpush1.msra.mxu0 0.0
    %334 = vmatprep.subr.mxu0 0.0
    %335 = vmatpush1.msra.mxu0 0.0
    %336 = vmatprep.subr.mxu0 0.0
    %337 = vmatpush1.msra.mxu0 0.0
    %338 = vmatprep.subr.mxu0 0.0
    %339 = vmatpush1.msra.mxu0 0.0
    %340 = vmatprep.subr.mxu0 0.0
    %341 = vmatpush1.msra.mxu0 0.0
    %342 = vmatprep.subr.mxu0 0.0
    %343 = vmatpush1.msra.mxu0 0.0
    %344 = vmatprep.subr.mxu0 0.0
    %345 = vmatpush1.msra.mxu0 0.0
    %346 = vmatprep.mubr.f32.mxu0 0.0
    %347 = vmatmul.mubr.f32.gmra.mrb[0].mxu0 %v140
    %v348 = vpop.f32.mrb[0].mxu0
    %v349 = vadd.f32 0.0, %v348
    %v350 = vpop.f32.mrb[0].mxu0
    %351 = vdwg.mxu0
    %352 = vmatprep.subr.mxu0 0.0
    %353 = vmatpush1.msra.mxu0 %v53
    %354 = vmatprep.subr.mxu0 0.0
    %355 = vmatpush1.msra.mxu0 %v54
    %356 = vmatprep.subr.mxu0 0.0
    %357 = vmatpush1.msra.mxu0 %v55
    %358 = vmatprep.subr.mxu0 0.0
    %359 = vmatpush1.msra.mxu0 %v56
    %360 = vmatprep.subr.mxu0 0.0
    %361 = vmatpush1.msra.mxu0 0.0
    %362 = vmatprep.subr.mxu0 0.0
    %363 = vmatpush1.msra.mxu0 0.0
    %364 = vmatprep.subr.mxu0 0.0
    %365 = vmatpush1.msra.mxu0 0.0
    %366 = vmatprep.subr.mxu0 0.0
    %367 = vmatpush1.msra.mxu0 0.0
    %368 = vmatprep.subr.mxu0 0.0
    %369 = vmatpush1.msra.mxu0 0.0
    %370 = vmatprep.subr.mxu0 0.0
    %371 = vmatpush1.msra.mxu0 0.0
    %372 = vmatprep.subr.mxu0 0.0
    %373 = vmatpush1.msra.mxu0 0.0
    %374 = vmatprep.subr.mxu0 0.0
    %375 = vmatpush1.msra.mxu0 0.0
    %376 = vmatprep.subr.mxu0 0.0
    %377 = vmatpush1.msra.mxu0 0.0
    %378 = vmatprep.subr.mxu0 0.0
    %379 = vmatpush1.msra.mxu0 0.0
    %380 = vmatprep.subr.mxu0 0.0
    %381 = vmatpush1.msra.mxu0 0.0
    %382 = vmatprep.subr.mxu0 0.0
    %383 = vmatpush1.msra.mxu0 0.0
    %384 = vmatprep.subr.mxu0 0.0
    %385 = vmatpush1.msra.mxu0 0.0
    %386 = vmatprep.subr.mxu0 0.0
    %387 = vmatpush1.msra.mxu0 0.0
    %388 = vmatprep.subr.mxu0 0.0
    %389 = vmatpush1.msra.mxu0 0.0
    %390 = vmatprep.subr.mxu0 0.0
    %391 = vmatpush1.msra.mxu0 0.0
    %392 = vmatprep.subr.mxu0 0.0
    %393 = vmatpush1.msra.mxu0 0.0
    %394 = vmatprep.subr.mxu0 0.0
    %395 = vmatpush1.msra.mxu0 0.0
    %396 = vmatprep.subr.mxu0 0.0
    %397 = vmatpush1.msra.mxu0 0.0
    %398 = vmatprep.subr.mxu0 0.0
    %399 = vmatpush1.msra.mxu0 0.0
    %400 = vmatprep.subr.mxu0 0.0
    %401 = vmatpush1.msra.mxu0 0.0
    %402 = vmatprep.subr.mxu0 0.0
    %403 = vmatpush1.msra.mxu0 0.0
    %404 = vmatprep.subr.mxu0 0.0
    %405 = vmatpush1.msra.mxu0 0.0
    %406 = vmatprep.subr.mxu0 0.0
    %407 = vmatpush1.msra.mxu0 0.0
    %408 = vmatprep.subr.mxu0 0.0
    %409 = vmatpush1.msra.mxu0 0.0
    %410 = vmatprep.subr.mxu0 0.0
    %411 = vmatpush1.msra.mxu0 0.0
    %412 = vmatprep.subr.mxu0 0.0
    %413 = vmatpush1.msra.mxu0 0.0
    %414 = vmatprep.subr.mxu0 0.0
    %415 = vmatpush1.msra.mxu0 0.0
    %416 = vmatprep.mubr.f32.mxu0 0.0
    %417 = vmatmul.mubr.f32.gmra.mrb[0].mxu0 %v140
    %v418 = vpop.f32.mrb[0].mxu0
    %v419 = vadd.f32 0.0, %v418
    %v420 = vpop.f32.mrb[0].mxu0
    %421 = vdwg.mxu0
    %v423 = vsel %vm138, %v33, 0
    %v426 = vsel %vm138, %v34, 0
    %v429 = vsel %vm138, %v35, 0
    %v432 = vsel %vm138, %v36, 0
    %v435 = vsel %vm138, %v37, 0
    %v438 = vsel %vm138, %v38, 0
    %v441 = vsel %vm138, %v39, 0
    %v444 = vsel %vm138, %v40, 0
    %446 = vmatprep.subr.mxu0 0.0
    %447 = vmatpush1.msra.mxu0 %v57
    %448 = vmatprep.subr.mxu0 0.0
    %449 = vmatpush1.msra.mxu0 %v58
    %450 = vmatprep.subr.mxu0 0.0
    %451 = vmatpush1.msra.mxu0 %v59
    %452 = vmatprep.subr.mxu0 0.0
    %453 = vmatpush1.msra.mxu0 %v60
    %454 = vmatprep.subr.mxu0 0.0
    %455 = vmatpush1.msra.mxu0 0.0
    %456 = vmatprep.subr.mxu0 0.0
    %457 = vmatpush1.msra.mxu0 0.0
    %458 = vmatprep.subr.mxu0 0.0
    %459 = vmatpush1.msra.mxu0 0.0
    %460 = vmatprep.subr.mxu0 0.0
    %461 = vmatpush1.msra.mxu0 0.0
    %462 = vmatprep.subr.mxu0 0.0
    %463 = vmatpush1.msra.mxu0 0.0
    %464 = vmatprep.subr.mxu0 0.0
    %465 = vmatpush1.msra.mxu0 0.0
    %466 = vmatprep.subr.mxu0 0.0
    %467 = vmatpush1.msra.mxu0 0.0
    %468 = vmatprep.subr.mxu0 0.0
    %469 = vmatpush1.msra.mxu0 0.0
    %470 = vmatprep.subr.mxu0 0.0
    %471 = vmatpush1.msra.mxu0 0.0
    %472 = vmatprep.subr.mxu0 0.0
    %473 = vmatpush1.msra.mxu0 0.0
    %474 = vmatprep.subr.mxu0 0.0
    %475 = vmatpush1.msra.mxu0 0.0
    %476 = vmatprep.subr.mxu0 0.0
    %477 = vmatpush1.msra.mxu0 0.0
    %478 = vmatprep.subr.mxu0 0.0
    %479 = vmatpush1.msra.mxu0 0.0
    %480 = vmatprep.subr.mxu0 0.0
    %481 = vmatpush1.msra.mxu0 0.0
    %482 = vmatprep.subr.mxu0 0.0
    %483 = vmatpush1.msra.mxu0 0.0
    %484 = vmatprep.subr.mxu0 0.0
    %485 = vmatpush1.msra.mxu0 0.0
    %486 = vmatprep.subr.mxu0 0.0
    %487 = vmatpush1.msra.mxu0 0.0
    %488 = vmatprep.subr.mxu0 0.0
    %489 = vmatpush1.msra.mxu0 0.0
    %490 = vmatprep.subr.mxu0 0.0
    %491 = vmatpush1.msra.mxu0 0.0
    %492 = vmatprep.subr.mxu0 0.0
    %493 = vmatpush1.msra.mxu0 0.0
    %494 = vmatprep.subr.mxu0 0.0
    %495 = vmatpush1.msra.mxu0 0.0
    %496 = vmatprep.subr.mxu0 0.0
    %497 = vmatpush1.msra.mxu0 0.0
    %498 = vmatprep.subr.mxu0 0.0
    %499 = vmatpush1.msra.mxu0 0.0
    %500 = vmatprep.subr.mxu0 0.0
    %501 = vmatpush1.msra.mxu0 0.0
    %502 = vmatprep.subr.mxu0 0.0
    %503 = vmatpush1.msra.mxu0 0.0
    %504 = vmatprep.subr.mxu0 0.0
    %505 = vmatpush1.msra.mxu0 0.0
    %506 = vmatprep.subr.mxu0 0.0
    %507 = vmatpush1.msra.mxu0 0.0
    %508 = vmatprep.subr.mxu0 0.0
    %509 = vmatpush1.msra.mxu0 0.0
    %510 = vmatprep.mubr.f32.mxu0 0.0
    %511 = vmatmul.mubr.f32.gmra.mrb[0].mxu0 %v423
    %v512 = vpop.f32.mrb[0].mxu0
    %v513 = vadd.f32 0.0, %v512
    %v514 = vpop.f32.mrb[0].mxu0
    %515 = vmatprep.mubr.f32.mxu0 0.0
    %516 = vmatmul.mubr.f32.gmra.mrb[0].mxu0 %v426
    %v517 = vpop.f32.mrb[0].mxu0
    %v518 = vadd.f32 0.0, %v517
    %v519 = vpop.f32.mrb[0].mxu0
    %520 = vmatprep.mubr.f32.mxu0 0.0
    %521 = vmatmul.mubr.f32.gmra.mrb[0].mxu0 %v429
    %v522 = vpop.f32.mrb[0].mxu0
    %v523 = vadd.f32 0.0, %v522
    %v524 = vpop.f32.mrb[0].mxu0
    %525 = vmatprep.mubr.f32.mxu0 0.0
    %526 = vmatmul.mubr.f32.gmra.mrb[0].mxu0 %v432
    %v527 = vpop.f32.mrb[0].mxu0
    %v528 = vadd.f32 0.0, %v527
    %v529 = vpop.f32.mrb[0].mxu0
    %530 = vmatprep.mubr.f32.mxu0 0.0
    %531 = vmatmul.mubr.f32.gmra.mrb[0].mxu0 %v435
    %v532 = vpop.f32.mrb[0].mxu0
    %v533 = vadd.f32 0.0, %v532
    %v534 = vpop.f32.mrb[0].mxu0
    %535 = vmatprep.mubr.f32.mxu0 0.0
    %536 = vmatmul.mubr.f32.gmra.mrb[0].mxu0 %v438
    %v537 = vpop.f32.mrb[0].mxu0
    %v538 = vadd.f32 0.0, %v537
    %v539 = vpop.f32.mrb[0].mxu0
    %540 = vmatprep.mubr.f32.mxu0 0.0
    %541 = vmatmul.mubr.f32.gmra.mrb[0].mxu0 %v441
    %v542 = vpop.f32.mrb[0].mxu0
    %v543 = vadd.f32 0.0, %v542
    %v544 = vpop.f32.mrb[0].mxu0
    %545 = vmatprep.mubr.f32.mxu0 0.0
    %546 = vmatmul.mubr.f32.gmra.mrb[0].mxu0 %v444
    %v547 = vpop.f32.mrb[0].mxu0
    %v548 = vadd.f32 0.0, %v547
    %v549 = vpop.f32.mrb[0].mxu0
    %550 = vdwg.mxu0
    %551 = vmatprep.subr.mxu0 0.0
    %552 = vmatpush1.msra.mxu0 %v61
    %553 = vmatprep.subr.mxu0 0.0
    %554 = vmatpush1.msra.mxu0 %v62
    %555 = vmatprep.subr.mxu0 0.0
    %556 = vmatpush1.msra.mxu0 %v63
    %557 = vmatprep.subr.mxu0 0.0
    %558 = vmatpush1.msra.mxu0 %v64
    %559 = vmatprep.subr.mxu0 0.0
    %560 = vmatpush1.msra.mxu0 0.0
    %561 = vmatprep.subr.mxu0 0.0
    %562 = vmatpush1.msra.mxu0 0.0
    %563 = vmatprep.subr.mxu0 0.0
    %564 = vmatpush1.msra.mxu0 0.0
    %565 = vmatprep.subr.mxu0 0.0
    %566 = vmatpush1.msra.mxu0 0.0
    %567 = vmatprep.subr.mxu0 0.0
    %568 = vmatpush1.msra.mxu0 0.0
    %569 = vmatprep.subr.mxu0 0.0
    %570 = vmatpush1.msra.mxu0 0.0
    %571 = vmatprep.subr.mxu0 0.0
    %572 = vmatpush1.msra.mxu0 0.0
    %573 = vmatprep.subr.mxu0 0.0
    %574 = vmatpush1.msra.mxu0 0.0
    %575 = vmatprep.subr.mxu0 0.0
    %576 = vmatpush1.msra.mxu0 0.0
    %577 = vmatprep.subr.mxu0 0.0
    %578 = vmatpush1.msra.mxu0 0.0
    %579 = vmatprep.subr.mxu0 0.0
    %580 = vmatpush1.msra.mxu0 0.0
    %581 = vmatprep.subr.mxu0 0.0
    %582 = vmatpush1.msra.mxu0 0.0
    %583 = vmatprep.subr.mxu0 0.0
    %584 = vmatpush1.msra.mxu0 0.0
    %585 = vmatprep.subr.mxu0 0.0
    %586 = vmatpush1.msra.mxu0 0.0
    %587 = vmatprep.subr.mxu0 0.0
    %588 = vmatpush1.msra.mxu0 0.0
    %589 = vmatprep.subr.mxu0 0.0
    %590 = vmatpush1.msra.mxu0 0.0
    %591 = vmatprep.subr.mxu0 0.0
    %592 = vmatpush1.msra.mxu0 0.0
    %593 = vmatprep.subr.mxu0 0.0
    %594 = vmatpush1.msra.mxu0 0.0
    %595 = vmatprep.subr.mxu0 0.0
    %596 = vmatpush1.msra.mxu0 0.0
    %597 = vmatprep.subr.mxu0 0.0
    %598 = vmatpush1.msra.mxu0 0.0
    %599 = vmatprep.subr.mxu0 0.0
    %600 = vmatpush1.msra.mxu0 0.0
    %601 = vmatprep.subr.mxu0 0.0
    %602 = vmatpush1.msra.mxu0 0.0
    %603 = vmatprep.subr.mxu0 0.0
    %604 = vmatpush1.msra.mxu0 0.0
    %605 = vmatprep.subr.mxu0 0.0
    %606 = vmatpush1.msra.mxu0 0.0
    %607 = vmatprep.subr.mxu0 0.0
    %608 = vmatpush1.msra.mxu0 0.0
    %609 = vmatprep.subr.mxu0 0.0
    %610 = vmatpush1.msra.mxu0 0.0
    %611 = vmatprep.subr.mxu0 0.0
    %612 = vmatpush1.msra.mxu0 0.0
    %613 = vmatprep.subr.mxu0 0.0
    %614 = vmatpush1.msra.mxu0 0.0
    %615 = vmatprep.mubr.f32.mxu0 0.0
    %616 = vmatmul.mubr.f32.gmra.mrb[0].mxu0 %v423
    %v617 = vpop.f32.mrb[0].mxu0
    %v618 = vadd.f32 0.0, %v617
    %v619 = vpop.f32.mrb[0].mxu0
    %620 = vmatprep.mubr.f32.mxu0 0.0
    %621 = vmatmul.mubr.f32.gmra.mrb[0].mxu0 %v426
    %v622 = vpop.f32.mrb[0].mxu0
    %v623 = vadd.f32 0.0, %v622
    %v624 = vpop.f32.mrb[0].mxu0
    %625 = vmatprep.mubr.f32.mxu0 0.0
    %626 = vmatmul.mubr.f32.gmra.mrb[0].mxu0 %v429
    %v627 = vpop.f32.mrb[0].mxu0
    %v628 = vadd.f32 0.0, %v627
    %v629 = vpop.f32.mrb[0].mxu0
    %630 = vmatprep.mubr.f32.mxu0 0.0
    %631 = vmatmul.mubr.f32.gmra.mrb[0].mxu0 %v432
    %v632 = vpop.f32.mrb[0].mxu0
    %v633 = vadd.f32 0.0, %v632
    %v634 = vpop.f32.mrb[0].mxu0
    %635 = vmatprep.mubr.f32.mxu0 0.0
    %636 = vmatmul.mubr.f32.gmra.mrb[0].mxu0 %v435
    %v637 = vpop.f32.mrb[0].mxu0
    %v638 = vadd.f32 0.0, %v637
    %v639 = vpop.f32.mrb[0].mxu0
    %640 = vmatprep.mubr.f32.mxu0 0.0
    %641 = vmatmul.mubr.f32.gmra.mrb[0].mxu0 %v438
    %v642 = vpop.f32.mrb[0].mxu0
    %v643 = vadd.f32 0.0, %v642
    %v644 = vpop.f32.mrb[0].mxu0
    %645 = vmatprep.mubr.f32.mxu0 0.0
    %646 = vmatmul.mubr.f32.gmra.mrb[0].mxu0 %v441
    %v647 = vpop.f32.mrb[0].mxu0
    %v648 = vadd.f32 0.0, %v647
    %v649 = vpop.f32.mrb[0].mxu0
    %650 = vmatprep.mubr.f32.mxu0 0.0
    %651 = vmatmul.mubr.f32.gmra.mrb[0].mxu0 %v444
    %v652 = vpop.f32.mrb[0].mxu0
    %v653 = vadd.f32 0.0, %v652
    %v654 = vpop.f32.mrb[0].mxu0
    %655 = vdwg.mxu0
    %656 = vmatprep.subr.mxu0 0.0
    %657 = vmatpush1.msra.mxu0 %v65
    %658 = vmatprep.subr.mxu0 0.0
    %659 = vmatpush1.msra.mxu0 %v66
    %660 = vmatprep.subr.mxu0 0.0
    %661 = vmatpush1.msra.mxu0 %v67
    %662 = vmatprep.subr.mxu0 0.0
    %663 = vmatpush1.msra.mxu0 %v68
    %664 = vmatprep.subr.mxu0 0.0
    %665 = vmatpush1.msra.mxu0 0.0
    %666 = vmatprep.subr.mxu0 0.0
    %667 = vmatpush1.msra.mxu0 0.0
    %668 = vmatprep.subr.mxu0 0.0
    %669 = vmatpush1.msra.mxu0 0.0
    %670 = vmatprep.subr.mxu0 0.0
    %671 = vmatpush1.msra.mxu0 0.0
    %672 = vmatprep.subr.mxu0 0.0
    %673 = vmatpush1.msra.mxu0 0.0
    %674 = vmatprep.subr.mxu0 0.0
    %675 = vmatpush1.msra.mxu0 0.0
    %676 = vmatprep.subr.mxu0 0.0
    %677 = vmatpush1.msra.mxu0 0.0
    %678 = vmatprep.subr.mxu0 0.0
    %679 = vmatpush1.msra.mxu0 0.0
    %680 = vmatprep.subr.mxu0 0.0
    %681 = vmatpush1.msra.mxu0 0.0
    %682 = vmatprep.subr.mxu0 0.0
    %683 = vmatpush1.msra.mxu0 0.0
    %684 = vmatprep.subr.mxu0 0.0
    %685 = vmatpush1.msra.mxu0 0.0
    %686 = vmatprep.subr.mxu0 0.0
    %687 = vmatpush1.msra.mxu0 0.0
    %688 = vmatprep.subr.mxu0 0.0
    %689 = vmatpush1.msra.mxu0 0.0
    %690 = vmatprep.subr.mxu0 0.0
    %691 = vmatpush1.msra.mxu0 0.0
    %692 = vmatprep.subr.mxu0 0.0
    %693 = vmatpush1.msra.mxu0 0.0
    %694 = vmatprep.subr.mxu0 0.0
    %695 = vmatpush1.msra.mxu0 0.0
    %696 = vmatprep.subr.mxu0 0.0
    %697 = vmatpush1.msra.mxu0 0.0
    %698 = vmatprep.subr.mxu0 0.0
    %699 = vmatpush1.msra.mxu0 0.0
    %700 = vmatprep.subr.mxu0 0.0
    %701 = vmatpush1.msra.mxu0 0.0
    %702 = vmatprep.subr.mxu0 0.0
    %703 = vmatpush1.msra.mxu0 0.0
    %704 = vmatprep.subr.mxu0 0.0
    %705 = vmatpush1.msra.mxu0 0.0
    %706 = vmatprep.subr.mxu0 0.0
    %707 = vmatpush1.msra.mxu0 0.0
    %708 = vmatprep.subr.mxu0 0.0
    %709 = vmatpush1.msra.mxu0 0.0
    %710 = vmatprep.subr.mxu0 0.0
    %711 = vmatpush1.msra.mxu0 0.0
    %712 = vmatprep.subr.mxu0 0.0
    %713 = vmatpush1.msra.mxu0 0.0
    %714 = vmatprep.subr.mxu0 0.0
    %715 = vmatpush1.msra.mxu0 0.0
    %716 = vmatprep.subr.mxu0 0.0
    %717 = vmatpush1.msra.mxu0 0.0
    %718 = vmatprep.subr.mxu0 0.0
    %719 = vmatpush1.msra.mxu0 0.0
    %720 = vmatprep.mubr.f32.mxu0 0.0
    %721 = vmatmul.mubr.f32.gmra.mrb[0].mxu0 %v423
    %v722 = vpop.f32.mrb[0].mxu0
    %v723 = vadd.f32 0.0, %v722
    %v724 = vpop.f32.mrb[0].mxu0
    %725 = vmatprep.mubr.f32.mxu0 0.0
    %726 = vmatmul.mubr.f32.gmra.mrb[0].mxu0 %v426
    %v727 = vpop.f32.mrb[0].mxu0
    %v728 = vadd.f32 0.0, %v727
    %v729 = vpop.f32.mrb[0].mxu0
    %730 = vmatprep.mubr.f32.mxu0 0.0
    %731 = vmatmul.mubr.f32.gmra.mrb[0].mxu0 %v429
    %v732 = vpop.f32.mrb[0].mxu0
    %v733 = vadd.f32 0.0, %v732
    %v734 = vpop.f32.mrb[0].mxu0
    %735 = vmatprep.mubr.f32.mxu0 0.0
    %736 = vmatmul.mubr.f32.gmra.mrb[0].mxu0 %v432
    %v737 = vpop.f32.mrb[0].mxu0
    %v738 = vadd.f32 0.0, %v737
    %v739 = vpop.f32.mrb[0].mxu0
    %740 = vmatprep.mubr.f32.mxu0 0.0
    %741 = vmatmul.mubr.f32.gmra.mrb[0].mxu0 %v435
    %v742 = vpop.f32.mrb[0].mxu0
    %v743 = vadd.f32 0.0, %v742
    %v744 = vpop.f32.mrb[0].mxu0
    %745 = vmatprep.mubr.f32.mxu0 0.0
    %746 = vmatmul.mubr.f32.gmra.mrb[0].mxu0 %v438
    %v747 = vpop.f32.mrb[0].mxu0
    %v748 = vadd.f32 0.0, %v747
    %v749 = vpop.f32.mrb[0].mxu0
    %750 = vmatprep.mubr.f32.mxu0 0.0
    %751 = vmatmul.mubr.f32.gmra.mrb[0].mxu0 %v441
    %v752 = vpop.f32.mrb[0].mxu0
    %v753 = vadd.f32 0.0, %v752
    %v754 = vpop.f32.mrb[0].mxu0
    %755 = vmatprep.mubr.f32.mxu0 0.0
    %756 = vmatmul.mubr.f32.gmra.mrb[0].mxu0 %v444
    %v757 = vpop.f32.mrb[0].mxu0
    %v758 = vadd.f32 0.0, %v757
    %v759 = vpop.f32.mrb[0].mxu0
    %760 = vdwg.mxu0
    %761 = vmatprep.subr.mxu0 0.0
    %762 = vmatpush1.msra.mxu0 %v69
    %763 = vmatprep.subr.mxu0 0.0
    %764 = vmatpush1.msra.mxu0 %v70
    %765 = vmatprep.subr.mxu0 0.0
    %766 = vmatpush1.msra.mxu0 %v71
    %767 = vmatprep.subr.mxu0 0.0
    %768 = vmatpush1.msra.mxu0 %v72
    %769 = vmatprep.subr.mxu0 0.0
    %770 = vmatpush1.msra.mxu0 0.0
    %771 = vmatprep.subr.mxu0 0.0
    %772 = vmatpush1.msra.mxu0 0.0
    %773 = vmatprep.subr.mxu0 0.0
    %774 = vmatpush1.msra.mxu0 0.0
    %775 = vmatprep.subr.mxu0 0.0
    %776 = vmatpush1.msra.mxu0 0.0
    %777 = vmatprep.subr.mxu0 0.0
    %778 = vmatpush1.msra.mxu0 0.0
    %779 = vmatprep.subr.mxu0 0.0
    %780 = vmatpush1.msra.mxu0 0.0
    %781 = vmatprep.subr.mxu0 0.0
    %782 = vmatpush1.msra.mxu0 0.0
    %783 = vmatprep.subr.mxu0 0.0
    %784 = vmatpush1.msra.mxu0 0.0
    %785 = vmatprep.subr.mxu0 0.0
    %786 = vmatpush1.msra.mxu0 0.0
    %787 = vmatprep.subr.mxu0 0.0
    %788 = vmatpush1.msra.mxu0 0.0
    %789 = vmatprep.subr.mxu0 0.0
    %790 = vmatpush1.msra.mxu0 0.0
    %791 = vmatprep.subr.mxu0 0.0
    %792 = vmatpush1.msra.mxu0 0.0
    %793 = vmatprep.subr.mxu0 0.0
    %794 = vmatpush1.msra.mxu0 0.0
    %795 = vmatprep.subr.mxu0 0.0
    %796 = vmatpush1.msra.mxu0 0.0
    %797 = vmatprep.subr.mxu0 0.0
    %798 = vmatpush1.msra.mxu0 0.0
    %799 = vmatprep.subr.mxu0 0.0
    %800 = vmatpush1.msra.mxu0 0.0
    %801 = vmatprep.subr.mxu0 0.0
    %802 = vmatpush1.msra.mxu0 0.0
    %803 = vmatprep.subr.mxu0 0.0
    %804 = vmatpush1.msra.mxu0 0.0
    %805 = vmatprep.subr.mxu0 0.0
    %806 = vmatpush1.msra.mxu0 0.0
    %807 = vmatprep.subr.mxu0 0.0
    %808 = vmatpush1.msra.mxu0 0.0
    %809 = vmatprep.subr.mxu0 0.0
    %810 = vmatpush1.msra.mxu0 0.0
    %811 = vmatprep.subr.mxu0 0.0
    %812 = vmatpush1.msra.mxu0 0.0
    %813 = vmatprep.subr.mxu0 0.0
    %814 = vmatpush1.msra.mxu0 0.0
    %815 = vmatprep.subr.mxu0 0.0
    %816 = vmatpush1.msra.mxu0 0.0
    %817 = vmatprep.subr.mxu0 0.0
    %818 = vmatpush1.msra.mxu0 0.0
    %819 = vmatprep.subr.mxu0 0.0
    %820 = vmatpush1.msra.mxu0 0.0
    %821 = vmatprep.subr.mxu0 0.0
    %822 = vmatpush1.msra.mxu0 0.0
    %823 = vmatprep.subr.mxu0 0.0
    %824 = vmatpush1.msra.mxu0 0.0
    %825 = vmatprep.mubr.f32.mxu0 0.0
    %826 = vmatmul.mubr.f32.gmra.mrb[0].mxu0 %v423
    %v827 = vpop.f32.mrb[0].mxu0
    %v828 = vadd.f32 0.0, %v827
    %v829 = vpop.f32.mrb[0].mxu0
    %830 = vmatprep.mubr.f32.mxu0 0.0
    %831 = vmatmul.mubr.f32.gmra.mrb[0].mxu0 %v426
    %v832 = vpop.f32.mrb[0].mxu0
    %v833 = vadd.f32 0.0, %v832
    %v834 = vpop.f32.mrb[0].mxu0
    %835 = vmatprep.mubr.f32.mxu0 0.0
    %836 = vmatmul.mubr.f32.gmra.mrb[0].mxu0 %v429
    %v837 = vpop.f32.mrb[0].mxu0
    %v838 = vadd.f32 0.0, %v837
    %v839 = vpop.f32.mrb[0].mxu0
    %840 = vmatprep.mubr.f32.mxu0 0.0
    %841 = vmatmul.mubr.f32.gmra.mrb[0].mxu0 %v432
    %v842 = vpop.f32.mrb[0].mxu0
    %v843 = vadd.f32 0.0, %v842
    %v844 = vpop.f32.mrb[0].mxu0
    %845 = vmatprep.mubr.f32.mxu0 0.0
    %846 = vmatmul.mubr.f32.gmra.mrb[0].mxu0 %v435
    %v847 = vpop.f32.mrb[0].mxu0
    %v848 = vadd.f32 0.0, %v847
    %v849 = vpop.f32.mrb[0].mxu0
    %850 = vmatprep.mubr.f32.mxu0 0.0
    %851 = vmatmul.mubr.f32.gmra.mrb[0].mxu0 %v438
    %v852 = vpop.f32.mrb[0].mxu0
    %v853 = vadd.f32 0.0, %v852
    %v854 = vpop.f32.mrb[0].mxu0
    %855 = vmatprep.mubr.f32.mxu0 0.0
    %856 = vmatmul.mubr.f32.gmra.mrb[0].mxu0 %v441
    %v857 = vpop.f32.mrb[0].mxu0
    %v858 = vadd.f32 0.0, %v857
    %v859 = vpop.f32.mrb[0].mxu0
    %860 = vmatprep.mubr.f32.mxu0 0.0
    %861 = vmatmul.mubr.f32.gmra.mrb[0].mxu0 %v444
    %v862 = vpop.f32.mrb[0].mxu0
    %v863 = vadd.f32 0.0, %v862
    %v864 = vpop.f32.mrb[0].mxu0
    %865 = vdwg.mxu0
    %866 = vmatprep.subr.mxu0 0.0
    %867 = vmatpush1.msra.mxu0 %v73
    %868 = vmatprep.subr.mxu0 0.0
    %869 = vmatpush1.msra.mxu0 %v74
    %870 = vmatprep.subr.mxu0 0.0
    %871 = vmatpush1.msra.mxu0 %v75
    %872 = vmatprep.subr.mxu0 0.0
    %873 = vmatpush1.msra.mxu0 %v76
    %874 = vmatprep.subr.mxu0 0.0
    %875 = vmatpush1.msra.mxu0 0.0
    %876 = vmatprep.subr.mxu0 0.0
    %877 = vmatpush1.msra.mxu0 0.0
    %878 = vmatprep.subr.mxu0 0.0
    %879 = vmatpush1.msra.mxu0 0.0
    %880 = vmatprep.subr.mxu0 0.0
    %881 = vmatpush1.msra.mxu0 0.0
    %882 = vmatprep.subr.mxu0 0.0
    %883 = vmatpush1.msra.mxu0 0.0
    %884 = vmatprep.subr.mxu0 0.0
    %885 = vmatpush1.msra.mxu0 0.0
    %886 = vmatprep.subr.mxu0 0.0
    %887 = vmatpush1.msra.mxu0 0.0
    %888 = vmatprep.subr.mxu0 0.0
    %889 = vmatpush1.msra.mxu0 0.0
    %890 = vmatprep.subr.mxu0 0.0
    %891 = vmatpush1.msra.mxu0 0.0
    %892 = vmatprep.subr.mxu0 0.0
    %893 = vmatpush1.msra.mxu0 0.0
    %894 = vmatprep.subr.mxu0 0.0
    %895 = vmatpush1.msra.mxu0 0.0
    %896 = vmatprep.subr.mxu0 0.0
    %897 = vmatpush1.msra.mxu0 0.0
    %898 = vmatprep.subr.mxu0 0.0
    %899 = vmatpush1.msra.mxu0 0.0
    %900 = vmatprep.subr.mxu0 0.0
    %901 = vmatpush1.msra.mxu0 0.0
    %902 = vmatprep.subr.mxu0 0.0
    %903 = vmatpush1.msra.mxu0 0.0
    %904 = vmatprep.subr.mxu0 0.0
    %905 = vmatpush1.msra.mxu0 0.0
    %906 = vmatprep.subr.mxu0 0.0
    %907 = vmatpush1.msra.mxu0 0.0
    %908 = vmatprep.subr.mxu0 0.0
    %909 = vmatpush1.msra.mxu0 0.0
    %910 = vmatprep.subr.mxu0 0.0
    %911 = vmatpush1.msra.mxu0 0.0
    %912 = vmatprep.subr.mxu0 0.0
    %913 = vmatpush1.msra.mxu0 0.0
    %914 = vmatprep.subr.mxu0 0.0
    %915 = vmatpush1.msra.mxu0 0.0
    %916 = vmatprep.subr.mxu0 0.0
    %917 = vmatpush1.msra.mxu0 0.0
    %918 = vmatprep.subr.mxu0 0.0
    %919 = vmatpush1.msra.mxu0 0.0
    %920 = vmatprep.subr.mxu0 0.0
    %921 = vmatpush1.msra.mxu0 0.0
    %922 = vmatprep.subr.mxu0 0.0
    %923 = vmatpush1.msra.mxu0 0.0
    %924 = vmatprep.subr.mxu0 0.0
    %925 = vmatpush1.msra.mxu0 0.0
    %926 = vmatprep.subr.mxu0 0.0
    %927 = vmatpush1.msra.mxu0 0.0
    %928 = vmatprep.subr.mxu0 0.0
    %929 = vmatpush1.msra.mxu0 0.0
    %930 = vmatprep.mubr.f32.mxu0 0.0
    %931 = vmatmul.mubr.f32.gmra.mrb[0].mxu0 %v423
    %v932 = vpop.f32.mrb[0].mxu0
    %v933 = vadd.f32 0.0, %v932
    %v934 = vpop.f32.mrb[0].mxu0
    %935 = vmatprep.mubr.f32.mxu0 0.0
    %936 = vmatmul.mubr.f32.gmra.mrb[0].mxu0 %v426
    %v937 = vpop.f32.mrb[0].mxu0
    %v938 = vadd.f32 0.0, %v937
    %v939 = vpop.f32.mrb[0].mxu0
    %940 = vmatprep.mubr.f32.mxu0 0.0
    %941 = vmatmul.mubr.f32.gmra.mrb[0].mxu0 %v429
    %v942 = vpop.f32.mrb[0].mxu0
    %v943 = vadd.f32 0.0, %v942
    %v944 = vpop.f32.mrb[0].mxu0
    %945 = vmatprep.mubr.f32.mxu0 0.0
    %946 = vmatmul.mubr.f32.gmra.mrb[0].mxu0 %v432
    %v947 = vpop.f32.mrb[0].mxu0
    %v948 = vadd.f32 0.0, %v947
    %v949 = vpop.f32.mrb[0].mxu0
    %950 = vmatprep.mubr.f32.mxu0 0.0
    %951 = vmatmul.mubr.f32.gmra.mrb[0].mxu0 %v435
    %v952 = vpop.f32.mrb[0].mxu0
    %v953 = vadd.f32 0.0, %v952
    %v954 = vpop.f32.mrb[0].mxu0
    %955 = vmatprep.mubr.f32.mxu0 0.0
    %956 = vmatmul.mubr.f32.gmra.mrb[0].mxu0 %v438
    %v957 = vpop.f32.mrb[0].mxu0
    %v958 = vadd.f32 0.0, %v957
    %v959 = vpop.f32.mrb[0].mxu0
    %960 = vmatprep.mubr.f32.mxu0 0.0
    %961 = vmatmul.mubr.f32.gmra.mrb[0].mxu0 %v441
    %v962 = vpop.f32.mrb[0].mxu0
    %v963 = vadd.f32 0.0, %v962
    %v964 = vpop.f32.mrb[0].mxu0
    %965 = vmatprep.mubr.f32.mxu0 0.0
    %966 = vmatmul.mubr.f32.gmra.mrb[0].mxu0 %v444
    %v967 = vpop.f32.mrb[0].mxu0
    %v968 = vadd.f32 0.0, %v967
    %v969 = vpop.f32.mrb[0].mxu0
    %970 = vdwg.mxu0
    %971 = vmatprep.subr.mxu0 0.0
    %972 = vmatpush1.msra.mxu0 %v77
    %973 = vmatprep.subr.mxu0 0.0
    %974 = vmatpush1.msra.mxu0 %v78
    %975 = vmatprep.subr.mxu0 0.0
    %976 = vmatpush1.msra.mxu0 %v79
    %977 = vmatprep.subr.mxu0 0.0
    %978 = vmatpush1.msra.mxu0 %v80
    %979 = vmatprep.subr.mxu0 0.0
    %980 = vmatpush1.msra.mxu0 0.0
    %981 = vmatprep.subr.mxu0 0.0
    %982 = vmatpush1.msra.mxu0 0.0
    %983 = vmatprep.subr.mxu0 0.0
    %984 = vmatpush1.msra.mxu0 0.0
    %985 = vmatprep.subr.mxu0 0.0
    %986 = vmatpush1.msra.mxu0 0.0
    %987 = vmatprep.subr.mxu0 0.0
    %988 = vmatpush1.msra.mxu0 0.0
    %989 = vmatprep.subr.mxu0 0.0
    %990 = vmatpush1.msra.mxu0 0.0
    %991 = vmatprep.subr.mxu0 0.0
    %992 = vmatpush1.msra.mxu0 0.0
    %993 = vmatprep.subr.mxu0 0.0
    %994 = vmatpush1.msra.mxu0 0.0
    %995 = vmatprep.subr.mxu0 0.0
    %996 = vmatpush1.msra.mxu0 0.0
    %997 = vmatprep.subr.mxu0 0.0
    %998 = vmatpush1.msra.mxu0 0.0
    %999 = vmatprep.subr.mxu0 0.0
    %1000 = vmatpush1.msra.mxu0 0.0
    %1001 = vmatprep.subr.mxu0 0.0
    %1002 = vmatpush1.msra.mxu0 0.0
    %1003 = vmatprep.subr.mxu0 0.0
    %1004 = vmatpush1.msra.mxu0 0.0
    %1005 = vmatprep.subr.mxu0 0.0
    %1006 = vmatpush1.msra.mxu0 0.0
    %1007 = vmatprep.subr.mxu0 0.0
    %1008 = vmatpush1.msra.mxu0 0.0
    %1009 = vmatprep.subr.mxu0 0.0
    %1010 = vmatpush1.msra.mxu0 0.0
    %1011 = vmatprep.subr.mxu0 0.0
    %1012 = vmatpush1.msra.mxu0 0.0
    %1013 = vmatprep.subr.mxu0 0.0
    %1014 = vmatpush1.msra.mxu0 0.0
    %1015 = vmatprep.subr.mxu0 0.0
    %1016 = vmatpush1.msra.mxu0 0.0
    %1017 = vmatprep.subr.mxu0 0.0
    %1018 = vmatpush1.msra.mxu0 0.0
    %1019 = vmatprep.subr.mxu0 0.0
    %1020 = vmatpush1.msra.mxu0 0.0
    %1021 = vmatprep.subr.mxu0 0.0
    %1022 = vmatpush1.msra.mxu0 0.0
    %1023 = vmatprep.subr.mxu0 0.0
    %1024 = vmatpush1.msra.mxu0 0.0
    %1025 = vmatprep.subr.mxu0 0.0
    %1026 = vmatpush1.msra.mxu0 0.0
    %1027 = vmatprep.subr.mxu0 0.0
    %1028 = vmatpush1.msra.mxu0 0.0
    %1029 = vmatprep.subr.mxu0 0.0
    %1030 = vmatpush1.msra.mxu0 0.0
    %1031 = vmatprep.subr.mxu0 0.0
    %1032 = vmatpush1.msra.mxu0 0.0
    %1033 = vmatprep.subr.mxu0 0.0
    %1034 = vmatpush1.msra.mxu0 0.0
    %1035 = vmatprep.mubr.f32.mxu0 0.0
    %1036 = vmatmul.mubr.f32.gmra.mrb[0].mxu0 %v423
    %v1037 = vpop.f32.mrb[0].mxu0
    %v1038 = vadd.f32 0.0, %v1037
    %v1039 = vpop.f32.mrb[0].mxu0
    %1040 = vmatprep.mubr.f32.mxu0 0.0
    %1041 = vmatmul.mubr.f32.gmra.mrb[0].mxu0 %v426
    %v1042 = vpop.f32.mrb[0].mxu0
    %v1043 = vadd.f32 0.0, %v1042
    %v1044 = vpop.f32.mrb[0].mxu0
    %1045 = vmatprep.mubr.f32.mxu0 0.0
    %1046 = vmatmul.mubr.f32.gmra.mrb[0].mxu0 %v429
    %v1047 = vpop.f32.mrb[0].mxu0
    %v1048 = vadd.f32 0.0, %v1047
    %v1049 = vpop.f32.mrb[0].mxu0
    %1050 = vmatprep.mubr.f32.mxu0 0.0
    %1051 = vmatmul.mubr.f32.gmra.mrb[0].mxu0 %v432
    %v1052 = vpop.f32.mrb[0].mxu0
    %v1053 = vadd.f32 0.0, %v1052
    %v1054 = vpop.f32.mrb[0].mxu0
    %1055 = vmatprep.mubr.f32.mxu0 0.0
    %1056 = vmatmul.mubr.f32.gmra.mrb[0].mxu0 %v435
    %v1057 = vpop.f32.mrb[0].mxu0
    %v1058 = vadd.f32 0.0, %v1057
    %v1059 = vpop.f32.mrb[0].mxu0
    %1060 = vmatprep.mubr.f32.mxu0 0.0
    %1061 = vmatmul.mubr.f32.gmra.mrb[0].mxu0 %v438
    %v1062 = vpop.f32.mrb[0].mxu0
    %v1063 = vadd.f32 0.0, %v1062
    %v1064 = vpop.f32.mrb[0].mxu0
    %1065 = vmatprep.mubr.f32.mxu0 0.0
    %1066 = vmatmul.mubr.f32.gmra.mrb[0].mxu0 %v441
    %v1067 = vpop.f32.mrb[0].mxu0
    %v1068 = vadd.f32 0.0, %v1067
    %v1069 = vpop.f32.mrb[0].mxu0
    %1070 = vmatprep.mubr.f32.mxu0 0.0
    %1071 = vmatmul.mubr.f32.gmra.mrb[0].mxu0 %v444
    %v1072 = vpop.f32.mrb[0].mxu0
    %v1073 = vadd.f32 0.0, %v1072
    %v1074 = vpop.f32.mrb[0].mxu0
    %1075 = vdwg.mxu0
    %1076 = vmatprep.subr.mxu0 0.0
    %1077 = vmatpush1.msra.mxu0 %v81
    %1078 = vmatprep.subr.mxu0 0.0
    %1079 = vmatpush1.msra.mxu0 %v82
    %1080 = vmatprep.subr.mxu0 0.0
    %1081 = vmatpush1.msra.mxu0 %v83
    %1082 = vmatprep.subr.mxu0 0.0
    %1083 = vmatpush1.msra.mxu0 %v84
    %1084 = vmatprep.subr.mxu0 0.0
    %1085 = vmatpush1.msra.mxu0 0.0
    %1086 = vmatprep.subr.mxu0 0.0
    %1087 = vmatpush1.msra.mxu0 0.0
    %1088 = vmatprep.subr.mxu0 0.0
    %1089 = vmatpush1.msra.mxu0 0.0
    %1090 = vmatprep.subr.mxu0 0.0
    %1091 = vmatpush1.msra.mxu0 0.0
    %1092 = vmatprep.subr.mxu0 0.0
    %1093 = vmatpush1.msra.mxu0 0.0
    %1094 = vmatprep.subr.mxu0 0.0
    %1095 = vmatpush1.msra.mxu0 0.0
    %1096 = vmatprep.subr.mxu0 0.0
    %1097 = vmatpush1.msra.mxu0 0.0
    %1098 = vmatprep.subr.mxu0 0.0
    %1099 = vmatpush1.msra.mxu0 0.0
    %1100 = vmatprep.subr.mxu0 0.0
    %1101 = vmatpush1.msra.mxu0 0.0
    %1102 = vmatprep.subr.mxu0 0.0
    %1103 = vmatpush1.msra.mxu0 0.0
    %1104 = vmatprep.subr.mxu0 0.0
    %1105 = vmatpush1.msra.mxu0 0.0
    %1106 = vmatprep.subr.mxu0 0.0
    %1107 = vmatpush1.msra.mxu0 0.0
    %1108 = vmatprep.subr.mxu0 0.0
    %1109 = vmatpush1.msra.mxu0 0.0
    %1110 = vmatprep.subr.mxu0 0.0
    %1111 = vmatpush1.msra.mxu0 0.0
    %1112 = vmatprep.subr.mxu0 0.0
    %1113 = vmatpush1.msra.mxu0 0.0
    %1114 = vmatprep.subr.mxu0 0.0
    %1115 = vmatpush1.msra.mxu0 0.0
    %1116 = vmatprep.subr.mxu0 0.0
    %1117 = vmatpush1.msra.mxu0 0.0
    %1118 = vmatprep.subr.mxu0 0.0
    %1119 = vmatpush1.msra.mxu0 0.0
    %1120 = vmatprep.subr.mxu0 0.0
    %1121 = vmatpush1.msra.mxu0 0.0
    %1122 = vmatprep.subr.mxu0 0.0
    %1123 = vmatpush1.msra.mxu0 0.0
    %1124 = vmatprep.subr.mxu0 0.0
    %1125 = vmatpush1.msra.mxu0 0.0
    %1126 = vmatprep.subr.mxu0 0.0
    %1127 = vmatpush1.msra.mxu0 0.0
    %1128 = vmatprep.subr.mxu0 0.0
    %1129 = vmatpush1.msra.mxu0 0.0
    %1130 = vmatprep.subr.mxu0 0.0
    %1131 = vmatpush1.msra.mxu0 0.0
    %1132 = vmatprep.subr.mxu0 0.0
    %1133 = vmatpush1.msra.mxu0 0.0
    %1134 = vmatprep.subr.mxu0 0.0
    %1135 = vmatpush1.msra.mxu0 0.0
    %1136 = vmatprep.subr.mxu0 0.0
    %1137 = vmatpush1.msra.mxu0 0.0
    %1138 = vmatprep.subr.mxu0 0.0
    %1139 = vmatpush1.msra.mxu0 0.0
    %1140 = vmatprep.mubr.f32.mxu0 0.0
    %1141 = vmatmul.mubr.f32.gmra.mrb[0].mxu0 %v423
    %v1142 = vpop.f32.mrb[0].mxu0
    %v1143 = vadd.f32 0.0, %v1142
    %v1144 = vpop.f32.mrb[0].mxu0
    %1145 = vmatprep.mubr.f32.mxu0 0.0
    %1146 = vmatmul.mubr.f32.gmra.mrb[0].mxu0 %v426
    %v1147 = vpop.f32.mrb[0].mxu0
    %v1148 = vadd.f32 0.0, %v1147
    %v1149 = vpop.f32.mrb[0].mxu0
    %1150 = vmatprep.mubr.f32.mxu0 0.0
    %1151 = vmatmul.mubr.f32.gmra.mrb[0].mxu0 %v429
    %v1152 = vpop.f32.mrb[0].mxu0
    %v1153 = vadd.f32 0.0, %v1152
    %v1154 = vpop.f32.mrb[0].mxu0
    %1155 = vmatprep.mubr.f32.mxu0 0.0
    %1156 = vmatmul.mubr.f32.gmra.mrb[0].mxu0 %v432
    %v1157 = vpop.f32.mrb[0].mxu0
    %v1158 = vadd.f32 0.0, %v1157
    %v1159 = vpop.f32.mrb[0].mxu0
    %1160 = vmatprep.mubr.f32.mxu0 0.0
    %1161 = vmatmul.mubr.f32.gmra.mrb[0].mxu0 %v435
    %v1162 = vpop.f32.mrb[0].mxu0
    %v1163 = vadd.f32 0.0, %v1162
    %v1164 = vpop.f32.mrb[0].mxu0
    %1165 = vmatprep.mubr.f32.mxu0 0.0
    %1166 = vmatmul.mubr.f32.gmra.mrb[0].mxu0 %v438
    %v1167 = vpop.f32.mrb[0].mxu0
    %v1168 = vadd.f32 0.0, %v1167
    %v1169 = vpop.f32.mrb[0].mxu0
    %1170 = vmatprep.mubr.f32.mxu0 0.0
    %1171 = vmatmul.mubr.f32.gmra.mrb[0].mxu0 %v441
    %v1172 = vpop.f32.mrb[0].mxu0
    %v1173 = vadd.f32 0.0, %v1172
    %v1174 = vpop.f32.mrb[0].mxu0
    %1175 = vmatprep.mubr.f32.mxu0 0.0
    %1176 = vmatmul.mubr.f32.gmra.mrb[0].mxu0 %v444
    %v1177 = vpop.f32.mrb[0].mxu0
    %v1178 = vadd.f32 0.0, %v1177
    %v1179 = vpop.f32.mrb[0].mxu0
    %1180 = vdwg.mxu0
    %1181 = vmatprep.subr.mxu0 0.0
    %1182 = vmatpush1.msra.mxu0 %v85
    %1183 = vmatprep.subr.mxu0 0.0
    %1184 = vmatpush1.msra.mxu0 %v86
    %1185 = vmatprep.subr.mxu0 0.0
    %1186 = vmatpush1.msra.mxu0 %v87
    %1187 = vmatprep.subr.mxu0 0.0
    %1188 = vmatpush1.msra.mxu0 %v88
    %1189 = vmatprep.subr.mxu0 0.0
    %1190 = vmatpush1.msra.mxu0 0.0
    %1191 = vmatprep.subr.mxu0 0.0
    %1192 = vmatpush1.msra.mxu0 0.0
    %1193 = vmatprep.subr.mxu0 0.0
    %1194 = vmatpush1.msra.mxu0 0.0
    %1195 = vmatprep.subr.mxu0 0.0
    %1196 = vmatpush1.msra.mxu0 0.0
    %1197 = vmatprep.subr.mxu0 0.0
    %1198 = vmatpush1.msra.mxu0 0.0
    %1199 = vmatprep.subr.mxu0 0.0
    %1200 = vmatpush1.msra.mxu0 0.0
    %1201 = vmatprep.subr.mxu0 0.0
    %1202 = vmatpush1.msra.mxu0 0.0
    %1203 = vmatprep.subr.mxu0 0.0
    %1204 = vmatpush1.msra.mxu0 0.0
    %1205 = vmatprep.subr.mxu0 0.0
    %1206 = vmatpush1.msra.mxu0 0.0
    %1207 = vmatprep.subr.mxu0 0.0
    %1208 = vmatpush1.msra.mxu0 0.0
    %1209 = vmatprep.subr.mxu0 0.0
    %1210 = vmatpush1.msra.mxu0 0.0
    %1211 = vmatprep.subr.mxu0 0.0
    %1212 = vmatpush1.msra.mxu0 0.0
    %1213 = vmatprep.subr.mxu0 0.0
    %1214 = vmatpush1.msra.mxu0 0.0
    %1215 = vmatprep.subr.mxu0 0.0
    %1216 = vmatpush1.msra.mxu0 0.0
    %1217 = vmatprep.subr.mxu0 0.0
    %1218 = vmatpush1.msra.mxu0 0.0
    %1219 = vmatprep.subr.mxu0 0.0
    %1220 = vmatpush1.msra.mxu0 0.0
    %1221 = vmatprep.subr.mxu0 0.0
    %1222 = vmatpush1.msra.mxu0 0.0
    %1223 = vmatprep.subr.mxu0 0.0
    %1224 = vmatpush1.msra.mxu0 0.0
    %1225 = vmatprep.subr.mxu0 0.0
    %1226 = vmatpush1.msra.mxu0 0.0
    %1227 = vmatprep.subr.mxu0 0.0
    %1228 = vmatpush1.msra.mxu0 0.0
    %1229 = vmatprep.subr.mxu0 0.0
    %1230 = vmatpush1.msra.mxu0 0.0
    %1231 = vmatprep.subr.mxu0 0.0
    %1232 = vmatpush1.msra.mxu0 0.0
    %1233 = vmatprep.subr.mxu0 0.0
    %1234 = vmatpush1.msra.mxu0 0.0
    %1235 = vmatprep.subr.mxu0 0.0
    %1236 = vmatpush1.msra.mxu0 0.0
    %1237 = vmatprep.subr.mxu0 0.0
    %1238 = vmatpush1.msra.mxu0 0.0
    %1239 = vmatprep.subr.mxu0 0.0
    %1240 = vmatpush1.msra.mxu0 0.0
    %1241 = vmatprep.subr.mxu0 0.0
    %1242 = vmatpush1.msra.mxu0 0.0
    %1243 = vmatprep.subr.mxu0 0.0
    %1244 = vmatpush1.msra.mxu0 0.0
    %1245 = vmatprep.mubr.f32.mxu0 0.0
    %1246 = vmatmul.mubr.f32.gmra.mrb[0].mxu0 %v423
    %v1247 = vpop.f32.mrb[0].mxu0
    %v1248 = vadd.f32 0.0, %v1247
    %v1249 = vpop.f32.mrb[0].mxu0
    %1250 = vmatprep.mubr.f32.mxu0 0.0
    %1251 = vmatmul.mubr.f32.gmra.mrb[0].mxu0 %v426
    %v1252 = vpop.f32.mrb[0].mxu0
    %v1253 = vadd.f32 0.0, %v1252
    %v1254 = vpop.f32.mrb[0].mxu0
    %1255 = vmatprep.mubr.f32.mxu0 0.0
    %1256 = vmatmul.mubr.f32.gmra.mrb[0].mxu0 %v429
    %v1257 = vpop.f32.mrb[0].mxu0
    %v1258 = vadd.f32 0.0, %v1257
    %v1259 = vpop.f32.mrb[0].mxu0
    %1260 = vmatprep.mubr.f32.mxu0 0.0
    %1261 = vmatmul.mubr.f32.gmra.mrb[0].mxu0 %v432
    %v1262 = vpop.f32.mrb[0].mxu0
    %v1263 = vadd.f32 0.0, %v1262
    %v1264 = vpop.f32.mrb[0].mxu0
    %1265 = vmatprep.mubr.f32.mxu0 0.0
    %1266 = vmatmul.mubr.f32.gmra.mrb[0].mxu0 %v435
    %v1267 = vpop.f32.mrb[0].mxu0
    %v1268 = vadd.f32 0.0, %v1267
    %v1269 = vpop.f32.mrb[0].mxu0
    %1270 = vmatprep.mubr.f32.mxu0 0.0
    %1271 = vmatmul.mubr.f32.gmra.mrb[0].mxu0 %v438
    %v1272 = vpop.f32.mrb[0].mxu0
    %v1273 = vadd.f32 0.0, %v1272
    %v1274 = vpop.f32.mrb[0].mxu0
    %1275 = vmatprep.mubr.f32.mxu0 0.0
    %1276 = vmatmul.mubr.f32.gmra.mrb[0].mxu0 %v441
    %v1277 = vpop.f32.mrb[0].mxu0
    %v1278 = vadd.f32 0.0, %v1277
    %v1279 = vpop.f32.mrb[0].mxu0
    %1280 = vmatprep.mubr.f32.mxu0 0.0
    %1281 = vmatmul.mubr.f32.gmra.mrb[0].mxu0 %v444
    %v1282 = vpop.f32.mrb[0].mxu0
    %v1283 = vadd.f32 0.0, %v1282
    %v1284 = vpop.f32.mrb[0].mxu0
    %1285 = vdwg.mxu0
    %vm1286 = vcmask 64512
    %v1288 = vsel %vm1286, %v209, 0
    %v1291 = vsel %vm1286, %v513, 0
    %v1294 = vsel %vm1286, %v518, 0
    %v1297 = vsel %vm1286, %v523, 0
    %v1300 = vsel %vm1286, %v528, 0
    %v1303 = vsel %vm1286, %v533, 0
    %v1306 = vsel %vm1286, %v538, 0
    %v1309 = vsel %vm1286, %v543, 0
    %v1312 = vsel %vm1286, %v548, 0
    %1314 = vmatprep.subr.mxu0 0.0
    %1315 = vmatpush1.xpose.msra.mxu0 %v1291
    %1316 = vmatprep.subr.mxu0 0.0
    %1317 = vmatpush1.xpose.msra.mxu0 %v1294
    %1318 = vmatprep.subr.mxu0 0.0
    %1319 = vmatpush1.xpose.msra.mxu0 %v1297
    %1320 = vmatprep.subr.mxu0 0.0
    %1321 = vmatpush1.xpose.msra.mxu0 %v1300
    %1322 = vmatprep.subr.mxu0 0.0
    %1323 = vmatpush1.xpose.msra.mxu0 %v1303
    %1324 = vmatprep.subr.mxu0 0.0
    %1325 = vmatpush1.xpose.msra.mxu0 %v1306
    %1326 = vmatprep.subr.mxu0 0.0
    %1327 = vmatpush1.xpose.msra.mxu0 %v1309
    %1328 = vmatprep.subr.mxu0 0.0
    %1329 = vmatpush1.xpose.msra.mxu0 %v1312
    %1330 = vmatprep.subr.mxu0 0.0
    %1331 = vmatpush1.xpose.msra.mxu0 0.0
    %1332 = vmatprep.subr.mxu0 0.0
    %1333 = vmatpush1.xpose.msra.mxu0 0.0
    %1334 = vmatprep.subr.mxu0 0.0
    %1335 = vmatpush1.xpose.msra.mxu0 0.0
    %1336 = vmatprep.subr.mxu0 0.0
    %1337 = vmatpush1.xpose.msra.mxu0 0.0
    %1338 = vmatprep.subr.mxu0 0.0
    %1339 = vmatpush1.xpose.msra.mxu0 0.0
    %1340 = vmatprep.subr.mxu0 0.0
    %1341 = vmatpush1.xpose.msra.mxu0 0.0
    %1342 = vmatprep.subr.mxu0 0.0
    %1343 = vmatpush1.xpose.msra.mxu0 0.0
    %1344 = vmatprep.subr.mxu0 0.0
    %1345 = vmatpush1.xpose.msra.mxu0 0.0
    %1346 = vmatprep.subr.mxu0 0.0
    %1347 = vmatpush1.xpose.msra.mxu0 0.0
    %1348 = vmatprep.subr.mxu0 0.0
    %1349 = vmatpush1.xpose.msra.mxu0 0.0
    %1350 = vmatprep.subr.mxu0 0.0
    %1351 = vmatpush1.xpose.msra.mxu0 0.0
    %1352 = vmatprep.subr.mxu0 0.0
    %1353 = vmatpush1.xpose.msra.mxu0 0.0
    %1354 = vmatprep.subr.mxu0 0.0
    %1355 = vmatpush1.xpose.msra.mxu0 0.0
    %1356 = vmatprep.subr.mxu0 0.0
    %1357 = vmatpush1.xpose.msra.mxu0 0.0
    %1358 = vmatprep.subr.mxu0 0.0
    %1359 = vmatpush1.xpose.msra.mxu0 0.0
    %1360 = vmatprep.subr.mxu0 0.0
    %1361 = vmatpush1.xpose.msra.mxu0 0.0
    %1362 = vmatprep.subr.mxu0 0.0
    %1363 = vmatpush1.xpose.msra.mxu0 0.0
    %1364 = vmatprep.subr.mxu0 0.0
    %1365 = vmatpush1.xpose.msra.mxu0 0.0
    %1366 = vmatprep.subr.mxu0 0.0
    %1367 = vmatpush1.xpose.msra.mxu0 0.0
    %1368 = vmatprep.subr.mxu0 0.0
    %1369 = vmatpush1.xpose.msra.mxu0 0.0
    %1370 = vmatprep.subr.mxu0 0.0
    %1371 = vmatpush1.xpose.msra.mxu0 0.0
    %1372 = vmatprep.subr.mxu0 0.0
    %1373 = vmatpush1.xpose.msra.mxu0 0.0
    %1374 = vmatprep.subr.mxu0 0.0
    %1375 = vmatpush1.xpose.msra.mxu0 0.0
    %1376 = vmatprep.subr.mxu0 0.0
    %1377 = vmatpush1.xpose.msra.mxu0 0.0
    %1378 = vmatprep.mubr.f32.mxu0 0.0
    %1379 = vmatmul.mubr.f32.gmra.mrb[0].mxu0 %v1288
    %v1380 = vpop.f32.mrb[0].mxu0
    %v1381 = vadd.f32 0.0, %v1380
    %v1382 = vpop.f32.mrb[0].mxu0
    %1383 = vdwg.mxu0
    %v1385 = vsel %vm1286, %v279, 0
    %v1388 = vsel %vm1286, %v618, 0
    %v1391 = vsel %vm1286, %v623, 0
    %v1394 = vsel %vm1286, %v628, 0
    %v1397 = vsel %vm1286, %v633, 0
    %v1400 = vsel %vm1286, %v638, 0
    %v1403 = vsel %vm1286, %v643, 0
    %v1406 = vsel %vm1286, %v648, 0
    %v1409 = vsel %vm1286, %v653, 0
    %1411 = vmatprep.subr.mxu0 0.0
    %1412 = vmatpush1.xpose.msra.mxu0 %v1388
    %1413 = vmatprep.subr.mxu0 0.0
    %1414 = vmatpush1.xpose.msra.mxu0 %v1391
    %1415 = vmatprep.subr.mxu0 0.0
    %1416 = vmatpush1.xpose.msra.mxu0 %v1394
    %1417 = vmatprep.subr.mxu0 0.0
    %1418 = vmatpush1.xpose.msra.mxu0 %v1397
    %1419 = vmatprep.subr.mxu0 0.0
    %1420 = vmatpush1.xpose.msra.mxu0 %v1400
    %1421 = vmatprep.subr.mxu0 0.0
    %1422 = vmatpush1.xpose.msra.mxu0 %v1403
    %1423 = vmatprep.subr.mxu0 0.0
    %1424 = vmatpush1.xpose.msra.mxu0 %v1406
    %1425 = vmatprep.subr.mxu0 0.0
    %1426 = vmatpush1.xpose.msra.mxu0 %v1409
    %1427 = vmatprep.subr.mxu0 0.0
    %1428 = vmatpush1.xpose.msra.mxu0 0.0
    %1429 = vmatprep.subr.mxu0 0.0
    %1430 = vmatpush1.xpose.msra.mxu0 0.0
    %1431 = vmatprep.subr.mxu0 0.0
    %1432 = vmatpush1.xpose.msra.mxu0 0.0
    %1433 = vmatprep.subr.mxu0 0.0
    %1434 = vmatpush1.xpose.msra.mxu0 0.0
    %1435 = vmatprep.subr.mxu0 0.0
    %1436 = vmatpush1.xpose.msra.mxu0 0.0
    %1437 = vmatprep.subr.mxu0 0.0
    %1438 = vmatpush1.xpose.msra.mxu0 0.0
    %1439 = vmatprep.subr.mxu0 0.0
    %1440 = vmatpush1.xpose.msra.mxu0 0.0
    %1441 = vmatprep.subr.mxu0 0.0
    %1442 = vmatpush1.xpose.msra.mxu0 0.0
    %1443 = vmatprep.subr.mxu0 0.0
    %1444 = vmatpush1.xpose.msra.mxu0 0.0
    %1445 = vmatprep.subr.mxu0 0.0
    %1446 = vmatpush1.xpose.msra.mxu0 0.0
    %1447 = vmatprep.subr.mxu0 0.0
    %1448 = vmatpush1.xpose.msra.mxu0 0.0
    %1449 = vmatprep.subr.mxu0 0.0
    %1450 = vmatpush1.xpose.msra.mxu0 0.0
    %1451 = vmatprep.subr.mxu0 0.0
    %1452 = vmatpush1.xpose.msra.mxu0 0.0
    %1453 = vmatprep.subr.mxu0 0.0
    %1454 = vmatpush1.xpose.msra.mxu0 0.0
    %1455 = vmatprep.subr.mxu0 0.0
    %1456 = vmatpush1.xpose.msra.mxu0 0.0
    %1457 = vmatprep.subr.mxu0 0.0
    %1458 = vmatpush1.xpose.msra.mxu0 0.0
    %1459 = vmatprep.subr.mxu0 0.0
    %1460 = vmatpush1.xpose.msra.mxu0 0.0
    %1461 = vmatprep.subr.mxu0 0.0
    %1462 = vmatpush1.xpose.msra.mxu0 0.0
    %1463 = vmatprep.subr.mxu0 0.0
    %1464 = vmatpush1.xpose.msra.mxu0 0.0
    %1465 = vmatprep.subr.mxu0 0.0
    %1466 = vmatpush1.xpose.msra.mxu0 0.0
    %1467 = vmatprep.subr.mxu0 0.0
    %1468 = vmatpush1.xpose.msra.mxu0 0.0
    %1469 = vmatprep.subr.mxu0 0.0
    %1470 = vmatpush1.xpose.msra.mxu0 0.0
    %1471 = vmatprep.subr.mxu0 0.0
    %1472 = vmatpush1.xpose.msra.mxu0 0.0
    %1473 = vmatprep.subr.mxu0 0.0
    %1474 = vmatpush1.xpose.msra.mxu0 0.0
    %1475 = vmatprep.mubr.f32.mxu0 0.0
    %1476 = vmatmul.mubr.f32.gmra.mrb[0].mxu0 %v1385
    %v1477 = vpop.f32.mrb[0].mxu0
    %v1478 = vadd.f32 0.0, %v1477
    %v1479 = vpop.f32.mrb[0].mxu0
    %1480 = vdwg.mxu0
    %v1482 = vsel %vm1286, %v349, 0
    %v1485 = vsel %vm1286, %v723, 0
    %v1488 = vsel %vm1286, %v728, 0
    %v1491 = vsel %vm1286, %v733, 0
    %v1494 = vsel %vm1286, %v738, 0
    %v1497 = vsel %vm1286, %v743, 0
    %v1500 = vsel %vm1286, %v748, 0
    %v1503 = vsel %vm1286, %v753, 0
    %v1506 = vsel %vm1286, %v758, 0
    %1508 = vmatprep.subr.mxu0 0.0
    %1509 = vmatpush1.xpose.msra.mxu0 %v1485
    %1510 = vmatprep.subr.mxu0 0.0
    %1511 = vmatpush1.xpose.msra.mxu0 %v1488
    %1512 = vmatprep.subr.mxu0 0.0
    %1513 = vmatpush1.xpose.msra.mxu0 %v1491
    %1514 = vmatprep.subr.mxu0 0.0
    %1515 = vmatpush1.xpose.msra.mxu0 %v1494
    %1516 = vmatprep.subr.mxu0 0.0
    %1517 = vmatpush1.xpose.msra.mxu0 %v1497
    %1518 = vmatprep.subr.mxu0 0.0
    %1519 = vmatpush1.xpose.msra.mxu0 %v1500
    %1520 = vmatprep.subr.mxu0 0.0
    %1521 = vmatpush1.xpose.msra.mxu0 %v1503
    %1522 = vmatprep.subr.mxu0 0.0
    %1523 = vmatpush1.xpose.msra.mxu0 %v1506
    %1524 = vmatprep.subr.mxu0 0.0
    %1525 = vmatpush1.xpose.msra.mxu0 0.0
    %1526 = vmatprep.subr.mxu0 0.0
    %1527 = vmatpush1.xpose.msra.mxu0 0.0
    %1528 = vmatprep.subr.mxu0 0.0
    %1529 = vmatpush1.xpose.msra.mxu0 0.0
    %1530 = vmatprep.subr.mxu0 0.0
    %1531 = vmatpush1.xpose.msra.mxu0 0.0
    %1532 = vmatprep.subr.mxu0 0.0
    %1533 = vmatpush1.xpose.msra.mxu0 0.0
    %1534 = vmatprep.subr.mxu0 0.0
    %1535 = vmatpush1.xpose.msra.mxu0 0.0
    %1536 = vmatprep.subr.mxu0 0.0
    %1537 = vmatpush1.xpose.msra.mxu0 0.0
    %1538 = vmatprep.subr.mxu0 0.0
    %1539 = vmatpush1.xpose.msra.mxu0 0.0
    %1540 = vmatprep.subr.mxu0 0.0
    %1541 = vmatpush1.xpose.msra.mxu0 0.0
    %1542 = vmatprep.subr.mxu0 0.0
    %1543 = vmatpush1.xpose.msra.mxu0 0.0
    %1544 = vmatprep.subr.mxu0 0.0
    %1545 = vmatpush1.xpose.msra.mxu0 0.0
    %1546 = vmatprep.subr.mxu0 0.0
    %1547 = vmatpush1.xpose.msra.mxu0 0.0
    %1548 = vmatprep.subr.mxu0 0.0
    %1549 = vmatpush1.xpose.msra.mxu0 0.0
    %1550 = vmatprep.subr.mxu0 0.0
    %1551 = vmatpush1.xpose.msra.mxu0 0.0
    %1552 = vmatprep.subr.mxu0 0.0
    %1553 = vmatpush1.xpose.msra.mxu0 0.0
    %1554 = vmatprep.subr.mxu0 0.0
    %1555 = vmatpush1.xpose.msra.mxu0 0.0
    %1556 = vmatprep.subr.mxu0 0.0
    %1557 = vmatpush1.xpose.msra.mxu0 0.0
    %1558 = vmatprep.subr.mxu0 0.0
    %1559 = vmatpush1.xpose.msra.mxu0 0.0
    %1560 = vmatprep.subr.mxu0 0.0
    %1561 = vmatpush1.xpose.msra.mxu0 0.0
    %1562 = vmatprep.subr.mxu0 0.0
    %1563 = vmatpush1.xpose.msra.mxu0 0.0
    %1564 = vmatprep.subr.mxu0 0.0
    %1565 = vmatpush1.xpose.msra.mxu0 0.0
    %1566 = vmatprep.subr.mxu0 0.0
    %1567 = vmatpush1.xpose.msra.mxu0 0.0
    %1568 = vmatprep.subr.mxu0 0.0
    %1569 = vmatpush1.xpose.msra.mxu0 0.0
    %1570 = vmatprep.subr.mxu0 0.0
    %1571 = vmatpush1.xpose.msra.mxu0 0.0
    %1572 = vmatprep.mubr.f32.mxu0 0.0
    %1573 = vmatmul.mubr.f32.gmra.mrb[0].mxu0 %v1482
    %v1574 = vpop.f32.mrb[0].mxu0
    %v1575 = vadd.f32 0.0, %v1574
    %v1576 = vpop.f32.mrb[0].mxu0
    %1577 = vdwg.mxu0
    %v1579 = vsel %vm1286, %v419, 0
    %v1582 = vsel %vm1286, %v828, 0
    %v1585 = vsel %vm1286, %v833, 0
    %v1588 = vsel %vm1286, %v838, 0
    %v1591 = vsel %vm1286, %v843, 0
    %v1594 = vsel %vm1286, %v848, 0
    %v1597 = vsel %vm1286, %v853, 0
    %v1600 = vsel %vm1286, %v858, 0
    %v1603 = vsel %vm1286, %v863, 0
    %1605 = vmatprep.subr.mxu0 0.0
    %1606 = vmatpush1.xpose.msra.mxu0 %v1582
    %1607 = vmatprep.subr.mxu0 0.0
    %1608 = vmatpush1.xpose.msra.mxu0 %v1585
    %1609 = vmatprep.subr.mxu0 0.0
    %1610 = vmatpush1.xpose.msra.mxu0 %v1588
    %1611 = vmatprep.subr.mxu0 0.0
    %1612 = vmatpush1.xpose.msra.mxu0 %v1591
    %1613 = vmatprep.subr.mxu0 0.0
    %1614 = vmatpush1.xpose.msra.mxu0 %v1594
    %1615 = vmatprep.subr.mxu0 0.0
    %1616 = vmatpush1.xpose.msra.mxu0 %v1597
    %1617 = vmatprep.subr.mxu0 0.0
    %1618 = vmatpush1.xpose.msra.mxu0 %v1600
    %1619 = vmatprep.subr.mxu0 0.0
    %1620 = vmatpush1.xpose.msra.mxu0 %v1603
    %1621 = vmatprep.subr.mxu0 0.0
    %1622 = vmatpush1.xpose.msra.mxu0 0.0
    %1623 = vmatprep.subr.mxu0 0.0
    %1624 = vmatpush1.xpose.msra.mxu0 0.0
    %1625 = vmatprep.subr.mxu0 0.0
    %1626 = vmatpush1.xpose.msra.mxu0 0.0
    %1627 = vmatprep.subr.mxu0 0.0
    %1628 = vmatpush1.xpose.msra.mxu0 0.0
    %1629 = vmatprep.subr.mxu0 0.0
    %1630 = vmatpush1.xpose.msra.mxu0 0.0
    %1631 = vmatprep.subr.mxu0 0.0
    %1632 = vmatpush1.xpose.msra.mxu0 0.0
    %1633 = vmatprep.subr.mxu0 0.0
    %1634 = vmatpush1.xpose.msra.mxu0 0.0
    %1635 = vmatprep.subr.mxu0 0.0
    %1636 = vmatpush1.xpose.msra.mxu0 0.0
    %1637 = vmatprep.subr.mxu0 0.0
    %1638 = vmatpush1.xpose.msra.mxu0 0.0
    %1639 = vmatprep.subr.mxu0 0.0
    %1640 = vmatpush1.xpose.msra.mxu0 0.0
    %1641 = vmatprep.subr.mxu0 0.0
    %1642 = vmatpush1.xpose.msra.mxu0 0.0
    %1643 = vmatprep.subr.mxu0 0.0
    %1644 = vmatpush1.xpose.msra.mxu0 0.0
    %1645 = vmatprep.subr.mxu0 0.0
    %1646 = vmatpush1.xpose.msra.mxu0 0.0
    %1647 = vmatprep.subr.mxu0 0.0
    %1648 = vmatpush1.xpose.msra.mxu0 0.0
    %1649 = vmatprep.subr.mxu0 0.0
    %1650 = vmatpush1.xpose.msra.mxu0 0.0
    %1651 = vmatprep.subr.mxu0 0.0
    %1652 = vmatpush1.xpose.msra.mxu0 0.0
    %1653 = vmatprep.subr.mxu0 0.0
    %1654 = vmatpush1.xpose.msra.mxu0 0.0
    %1655 = vmatprep.subr.mxu0 0.0
    %1656 = vmatpush1.xpose.msra.mxu0 0.0
    %1657 = vmatprep.subr.mxu0 0.0
    %1658 = vmatpush1.xpose.msra.mxu0 0.0
    %1659 = vmatprep.subr.mxu0 0.0
    %1660 = vmatpush1.xpose.msra.mxu0 0.0
    %1661 = vmatprep.subr.mxu0 0.0
    %1662 = vmatpush1.xpose.msra.mxu0 0.0
    %1663 = vmatprep.subr.mxu0 0.0
    %1664 = vmatpush1.xpose.msra.mxu0 0.0
    %1665 = vmatprep.subr.mxu0 0.0
    %1666 = vmatpush1.xpose.msra.mxu0 0.0
    %1667 = vmatprep.subr.mxu0 0.0
    %1668 = vmatpush1.xpose.msra.mxu0 0.0
    %1669 = vmatprep.mubr.f32.mxu0 0.0
    %1670 = vmatmul.mubr.f32.gmra.mrb[0].mxu0 %v1579
    %v1671 = vpop.f32.mrb[0].mxu0
    %v1672 = vadd.f32 0.0, %v1671
    %v1673 = vpop.f32.mrb[0].mxu0
    %1674 = vdwg.mxu0
    %vm1675 = vcmask 523264
    %v1676 = vsel %vm1675, %v1381, -inf
    %1677 = vmax.xlane.f32.xlu0 %v1676
    %v1678 = vpop.xlane.xlu0 %1677
    %v1679 = vsel %vm1675, %v1478, -inf
    %1680 = vmax.xlane.f32.xlu0 %v1679
    %v1681 = vpop.xlane.xlu0 %1680
    %v1682 = vsel %vm1675, %v1575, -inf
    %1683 = vmax.xlane.f32.xlu0 %v1682
    %v1684 = vpop.xlane.xlu0 %1683
    %v1685 = vsel %vm1675, %v1672, -inf
    %1686 = vmax.xlane.f32.xlu0 %v1685
    %v1687 = vpop.xlane.xlu0 %1686
    %v1688 = vsub.f32 %v1381, %v1678
    %v1689 = vsub.f32 %v1478, %v1681
    %v1690 = vsub.f32 %v1575, %v1684
    %v1691 = vsub.f32 %v1672, %v1687
    %v1692 = vmul.f32 %v1688, 1.442695
    %v1693 = vpow.pop %v1692
    %v1694 = vmul.f32 %v1689, 1.442695
    %v1695 = vpow.pop %v1694
    %v1696 = vmul.f32 %v1690, 1.442695
    %v1697 = vpow.pop %v1696
    %v1698 = vmul.f32 %v1691, 1.442695
    %v1699 = vpow.pop %v1698
    %v1700 = vsel %vm1675, %v1693, 0.0
    %1701 = vadd.xlane.f32.xlu0 %v1700
    %v1702 = vpop.xlane.xlu0 %1701
    %v1703 = vsel %vm1675, %v1695, 0.0
    %1704 = vadd.xlane.f32.xlu0 %v1703
    %v1705 = vpop.xlane.xlu0 %1704
    %v1706 = vsel %vm1675, %v1697, 0.0
    %1707 = vadd.xlane.f32.xlu0 %v1706
    %v1708 = vpop.xlane.xlu0 %1707
    %v1709 = vsel %vm1675, %v1699, 0.0
    %1710 = vadd.xlane.f32.xlu0 %v1709
    %v1711 = vpop.xlane.xlu0 %1710
    %v1712 = vrcp.pop %v1702
    %v1713 = vrcp.pop %v1705
    %v1714 = vrcp.pop %v1708
    %v1715 = vrcp.pop %v1711
    %v1716 = vmul.f32 %v1693, %v1712
    %v1717 = vmul.f32 %v1695, %v1713
    %v1718 = vmul.f32 %v1697, %v1714
    %v1719 = vmul.f32 %v1699, %v1715
    %v1721 = vsel %vm1675, %v1716, 0
    %1723 = vmatprep.subr.mxu0 0.0
    %1724 = vmatpush1.msra.mxu0 %v933
    %1725 = vmatprep.subr.mxu0 0.0
    %1726 = vmatpush1.msra.mxu0 %v938
    %1727 = vmatprep.subr.mxu0 0.0
    %1728 = vmatpush1.msra.mxu0 %v943
    %1729 = vmatprep.subr.mxu0 0.0
    %1730 = vmatpush1.msra.mxu0 %v948
    %1731 = vmatprep.subr.mxu0 0.0
    %1732 = vmatpush1.msra.mxu0 %v953
    %1733 = vmatprep.subr.mxu0 0.0
    %1734 = vmatpush1.msra.mxu0 %v958
    %1735 = vmatprep.subr.mxu0 0.0
    %1736 = vmatpush1.msra.mxu0 %v963
    %1737 = vmatprep.subr.mxu0 0.0
    %1738 = vmatpush1.msra.mxu0 %v968
    %1739 = vmatprep.subr.mxu0 0.0
    %1740 = vmatpush1.msra.mxu0 0.0
    %1741 = vmatprep.subr.mxu0 0.0
    %1742 = vmatpush1.msra.mxu0 0.0
    %1743 = vmatprep.subr.mxu0 0.0
    %1744 = vmatpush1.msra.mxu0 0.0
    %1745 = vmatprep.subr.mxu0 0.0
    %1746 = vmatpush1.msra.mxu0 0.0
    %1747 = vmatprep.subr.mxu0 0.0
    %1748 = vmatpush1.msra.mxu0 0.0
    %1749 = vmatprep.subr.mxu0 0.0
    %1750 = vmatpush1.msra.mxu0 0.0
    %1751 = vmatprep.subr.mxu0 0.0
    %1752 = vmatpush1.msra.mxu0 0.0
    %1753 = vmatprep.subr.mxu0 0.0
    %1754 = vmatpush1.msra.mxu0 0.0
    %1755 = vmatprep.subr.mxu0 0.0
    %1756 = vmatpush1.msra.mxu0 0.0
    %1757 = vmatprep.subr.mxu0 0.0
    %1758 = vmatpush1.msra.mxu0 0.0
    %1759 = vmatprep.subr.mxu0 0.0
    %1760 = vmatpush1.msra.mxu0 0.0
    %1761 = vmatprep.subr.mxu0 0.0
    %1762 = vmatpush1.msra.mxu0 0.0
    %1763 = vmatprep.subr.mxu0 0.0
    %1764 = vmatpush1.msra.mxu0 0.0
    %1765 = vmatprep.subr.mxu0 0.0
    %1766 = vmatpush1.msra.mxu0 0.0
    %1767 = vmatprep.subr.mxu0 0.0
    %1768 = vmatpush1.msra.mxu0 0.0
    %1769 = vmatprep.subr.mxu0 0.0
    %1770 = vmatpush1.msra.mxu0 0.0
    %1771 = vmatprep.subr.mxu0 0.0
    %1772 = vmatpush1.msra.mxu0 0.0
    %1773 = vmatprep.subr.mxu0 0.0
    %1774 = vmatpush1.msra.mxu0 0.0
    %1775 = vmatprep.subr.mxu0 0.0
    %1776 = vmatpush1.msra.mxu0 0.0
    %1777 = vmatprep.subr.mxu0 0.0
    %1778 = vmatpush1.msra.mxu0 0.0
    %1779 = vmatprep.subr.mxu0 0.0
    %1780 = vmatpush1.msra.mxu0 0.0
    %1781 = vmatprep.subr.mxu0 0.0
    %1782 = vmatpush1.msra.mxu0 0.0
    %1783 = vmatprep.subr.mxu0 0.0
    %1784 = vmatpush1.msra.mxu0 0.0
    %1785 = vmatprep.subr.mxu0 0.0
    %1786 = vmatpush1.msra.mxu0 0.0
    %1787 = vmatprep.mubr.f32.mxu0 0.0
    %1788 = vmatmul.mubr.f32.gmra.mrb[0].mxu0 %v1721
    %v1789 = vpop.f32.mrb[0].mxu0
    %v1790 = vadd.f32 0.0, %v1789
    %v1791 = vpop.f32.mrb[0].mxu0
    %1792 = vdwg.mxu0
    %v1794 = vsel %vm1675, %v1717, 0
    %1796 = vmatprep.subr.mxu0 0.0
    %1797 = vmatpush1.msra.mxu0 %v1038
    %1798 = vmatprep.subr.mxu0 0.0
    %1799 = vmatpush1.msra.mxu0 %v1043
    %1800 = vmatprep.subr.mxu0 0.0
    %1801 = vmatpush1.msra.mxu0 %v1048
    %1802 = vmatprep.subr.mxu0 0.0
    %1803 = vmatpush1.msra.mxu0 %v1053
    %1804 = vmatprep.subr.mxu0 0.0
    %1805 = vmatpush1.msra.mxu0 %v1058
    %1806 = vmatprep.subr.mxu0 0.0
    %1807 = vmatpush1.msra.mxu0 %v1063
    %1808 = vmatprep.subr.mxu0 0.0
    %1809 = vmatpush1.msra.mxu0 %v1068
    %1810 = vmatprep.subr.mxu0 0.0
    %1811 = vmatpush1.msra.mxu0 %v1073
    %1812 = vmatprep.subr.mxu0 0.0
    %1813 = vmatpush1.msra.mxu0 0.0
    %1814 = vmatprep.subr.mxu0 0.0
    %1815 = vmatpush1.msra.mxu0 0.0
    %1816 = vmatprep.subr.mxu0 0.0
    %1817 = vmatpush1.msra.mxu0 0.0
    %1818 = vmatprep.subr.mxu0 0.0
    %1819 = vmatpush1.msra.mxu0 0.0
    %1820 = vmatprep.subr.mxu0 0.0
    %1821 = vmatpush1.msra.mxu0 0.0
    %1822 = vmatprep.subr.mxu0 0.0
    %1823 = vmatpush1.msra.mxu0 0.0
    %1824 = vmatprep.subr.mxu0 0.0
    %1825 = vmatpush1.msra.mxu0 0.0
    %1826 = vmatprep.subr.mxu0 0.0
    %1827 = vmatpush1.msra.mxu0 0.0
    %1828 = vmatprep.subr.mxu0 0.0
    %1829 = vmatpush1.msra.mxu0 0.0
    %1830 = vmatprep.subr.mxu0 0.0
    %1831 = vmatpush1.msra.mxu0 0.0
    %1832 = vmatprep.subr.mxu0 0.0
    %1833 = vmatpush1.msra.mxu0 0.0
    %1834 = vmatprep.subr.mxu0 0.0
    %1835 = vmatpush1.msra.mxu0 0.0
    %1836 = vmatprep.subr.mxu0 0.0
    %1837 = vmatpush1.msra.mxu0 0.0
    %1838 = vmatprep.subr.mxu0 0.0
    %1839 = vmatpush1.msra.mxu0 0.0
    %1840 = vmatprep.subr.mxu0 0.0
    %1841 = vmatpush1.msra.mxu0 0.0
    %1842 = vmatprep.subr.mxu0 0.0
    %1843 = vmatpush1.msra.mxu0 0.0
    %1844 = vmatprep.subr.mxu0 0.0
    %1845 = vmatpush1.msra.mxu0 0.0
    %1846 = vmatprep.subr.mxu0 0.0
    %1847 = vmatpush1.msra.mxu0 0.0
    %1848 = vmatprep.subr.mxu0 0.0
    %1849 = vmatpush1.msra.mxu0 0.0
    %1850 = vmatprep.subr.mxu0 0.0
    %1851 = vmatpush1.msra.mxu0 0.0
    %1852 = vmatprep.subr.mxu0 0.0
    %1853 = vmatpush1.msra.mxu0 0.0
    %1854 = vmatprep.subr.mxu0 0.0
    %1855 = vmatpush1.msra.mxu0 0.0
    %1856 = vmatprep.subr.mxu0 0.0
    %1857 = vmatpush1.msra.mxu0 0.0
    %1858 = vmatprep.subr.mxu0 0.0
    %1859 = vmatpush1.msra.mxu0 0.0
    %1860 = vmatprep.mubr.f32.mxu0 0.0
    %1861 = vmatmul.mubr.f32.gmra.mrb[0].mxu0 %v1794
    %v1862 = vpop.f32.mrb[0].mxu0
    %v1863 = vadd.f32 0.0, %v1862
    %v1864 = vpop.f32.mrb[0].mxu0
    %1865 = vdwg.mxu0
    %v1867 = vsel %vm1675, %v1718, 0
    %1869 = vmatprep.subr.mxu0 0.0
    %1870 = vmatpush1.msra.mxu0 %v1143
    %1871 = vmatprep.subr.mxu0 0.0
    %1872 = vmatpush1.msra.mxu0 %v1148
    %1873 = vmatprep.subr.mxu0 0.0
    %1874 = vmatpush1.msra.mxu0 %v1153
    %1875 = vmatprep.subr.mxu0 0.0
    %1876 = vmatpush1.msra.mxu0 %v1158
    %1877 = vmatprep.subr.mxu0 0.0
    %1878 = vmatpush1.msra.mxu0 %v1163
    %1879 = vmatprep.subr.mxu0 0.0
    %1880 = vmatpush1.msra.mxu0 %v1168
    %1881 = vmatprep.subr.mxu0 0.0
    %1882 = vmatpush1.msra.mxu0 %v1173
    %1883 = vmatprep.subr.mxu0 0.0
    %1884 = vmatpush1.msra.mxu0 %v1178
    %1885 = vmatprep.subr.mxu0 0.0
    %1886 = vmatpush1.msra.mxu0 0.0
    %1887 = vmatprep.subr.mxu0 0.0
    %1888 = vmatpush1.msra.mxu0 0.0
    %1889 = vmatprep.subr.mxu0 0.0
    %1890 = vmatpush1.msra.mxu0 0.0
    %1891 = vmatprep.subr.mxu0 0.0
    %1892 = vmatpush1.msra.mxu0 0.0
    %1893 = vmatprep.subr.mxu0 0.0
    %1894 = vmatpush1.msra.mxu0 0.0
    %1895 = vmatprep.subr.mxu0 0.0
    %1896 = vmatpush1.msra.mxu0 0.0
    %1897 = vmatprep.subr.mxu0 0.0
    %1898 = vmatpush1.msra.mxu0 0.0
    %1899 = vmatprep.subr.mxu0 0.0
    %1900 = vmatpush1.msra.mxu0 0.0
    %1901 = vmatprep.subr.mxu0 0.0
    %1902 = vmatpush1.msra.mxu0 0.0
    %1903 = vmatprep.subr.mxu0 0.0
    %1904 = vmatpush1.msra.mxu0 0.0
    %1905 = vmatprep.subr.mxu0 0.0
    %1906 = vmatpush1.msra.mxu0 0.0
    %1907 = vmatprep.subr.mxu0 0.0
    %1908 = vmatpush1.msra.mxu0 0.0
    %1909 = vmatprep.subr.mxu0 0.0
    %1910 = vmatpush1.msra.mxu0 0.0
    %1911 = vmatprep.subr.mxu0 0.0
    %1912 = vmatpush1.msra.mxu0 0.0
    %1913 = vmatprep.subr.mxu0 0.0
    %1914 = vmatpush1.msra.mxu0 0.0
    %1915 = vmatprep.subr.mxu0 0.0
    %1916 = vmatpush1.msra.mxu0 0.0
    %1917 = vmatprep.subr.mxu0 0.0
    %1918 = vmatpush1.msra.mxu0 0.0
    %1919 = vmatprep.subr.mxu0 0.0
    %1920 = vmatpush1.msra.mxu0 0.0
    %1921 = vmatprep.subr.mxu0 0.0
    %1922 = vmatpush1.msra.mxu0 0.0
    %1923 = vmatprep.subr.mxu0 0.0
    %1924 = vmatpush1.msra.mxu0 0.0
    %1925 = vmatprep.subr.mxu0 0.0
    %1926 = vmatpush1.msra.mxu0 0.0
    %1927 = vmatprep.subr.mxu0 0.0
    %1928 = vmatpush1.msra.mxu0 0.0
    %1929 = vmatprep.subr.mxu0 0.0
    %1930 = vmatpush1.msra.mxu0 0.0
    %1931 = vmatprep.subr.mxu0 0.0
    %1932 = vmatpush1.msra.mxu0 0.0
    %1933 = vmatprep.mubr.f32.mxu0 0.0
    %1934 = vmatmul.mubr.f32.gmra.mrb[0].mxu0 %v1867
    %v1935 = vpop.f32.mrb[0].mxu0
    %v1936 = vadd.f32 0.0, %v1935
    %v1937 = vpop.f32.mrb[0].mxu0
    %1938 = vdwg.mxu0
    %v1940 = vsel %vm1675, %v1719, 0
    %1942 = vmatprep.subr.mxu0 0.0
    %1943 = vmatpush1.msra.mxu0 %v1248
    %1944 = vmatprep.subr.mxu0 0.0
    %1945 = vmatpush1.msra.mxu0 %v1253
    %1946 = vmatprep.subr.mxu0 0.0
    %1947 = vmatpush1.msra.mxu0 %v1258
    %1948 = vmatprep.subr.mxu0 0.0
    %1949 = vmatpush1.msra.mxu0 %v1263
    %1950 = vmatprep.subr.mxu0 0.0
    %1951 = vmatpush1.msra.mxu0 %v1268
    %1952 = vmatprep.subr.mxu0 0.0
    %1953 = vmatpush1.msra.mxu0 %v1273
    %1954 = vmatprep.subr.mxu0 0.0
    %1955 = vmatpush1.msra.mxu0 %v1278
    %1956 = vmatprep.subr.mxu0 0.0
    %1957 = vmatpush1.msra.mxu0 %v1283
    %1958 = vmatprep.subr.mxu0 0.0
    %1959 = vmatpush1.msra.mxu0 0.0
    %1960 = vmatprep.subr.mxu0 0.0
    %1961 = vmatpush1.msra.mxu0 0.0
    %1962 = vmatprep.subr.mxu0 0.0
    %1963 = vmatpush1.msra.mxu0 0.0
    %1964 = vmatprep.subr.mxu0 0.0
    %1965 = vmatpush1.msra.mxu0 0.0
    %1966 = vmatprep.subr.mxu0 0.0
    %1967 = vmatpush1.msra.mxu0 0.0
    %1968 = vmatprep.subr.mxu0 0.0
    %1969 = vmatpush1.msra.mxu0 0.0
    %1970 = vmatprep.subr.mxu0 0.0
    %1971 = vmatpush1.msra.mxu0 0.0
    %1972 = vmatprep.subr.mxu0 0.0
    %1973 = vmatpush1.msra.mxu0 0.0
    %1974 = vmatprep.subr.mxu0 0.0
    %1975 = vmatpush1.msra.mxu0 0.0
    %1976 = vmatprep.subr.mxu0 0.0
    %1977 = vmatpush1.msra.mxu0 0.0
    %1978 = vmatprep.subr.mxu0 0.0
    %1979 = vmatpush1.msra.mxu0 0.0
    %1980 = vmatprep.subr.mxu0 0.0
    %1981 = vmatpush1.msra.mxu0 0.0
    %1982 = vmatprep.subr.mxu0 0.0
    %1983 = vmatpush1.msra.mxu0 0.0
    %1984 = vmatprep.subr.mxu0 0.0
    %1985 = vmatpush1.msra.mxu0 0.0
    %1986 = vmatprep.subr.mxu0 0.0
    %1987 = vmatpush1.msra.mxu0 0.0
    %1988 = vmatprep.subr.mxu0 0.0
    %1989 = vmatpush1.msra.mxu0 0.0
    %1990 = vmatprep.subr.mxu0 0.0
    %1991 = vmatpush1.msra.mxu0 0.0
    %1992 = vmatprep.subr.mxu0 0.0
    %1993 = vmatpush1.msra.mxu0 0.0
    %1994 = vmatprep.subr.mxu0 0.0
    %1995 = vmatpush1.msra.mxu0 0.0
    %1996 = vmatprep.subr.mxu0 0.0
    %1997 = vmatpush1.msra.mxu0 0.0
    %1998 = vmatprep.subr.mxu0 0.0
    %1999 = vmatpush1.msra.mxu0 0.0
    %2000 = vmatprep.subr.mxu0 0.0
    %2001 = vmatpush1.msra.mxu0 0.0
    %2002 = vmatprep.subr.mxu0 0.0
    %2003 = vmatpush1.msra.mxu0 0.0
    %2004 = vmatprep.subr.mxu0 0.0
    %2005 = vmatpush1.msra.mxu0 0.0
    %2006 = vmatprep.mubr.f32.mxu0 0.0
    %2007 = vmatmul.mubr.f32.gmra.mrb[0].mxu0 %v1940
    %v2008 = vpop.f32.mrb[0].mxu0
    %v2009 = vadd.f32 0.0, %v2008
    %v2010 = vpop.f32.mrb[0].mxu0
    %2011 = vdwg.mxu0
    %v2013 = vsel %vm1286, %v1863, 0
    %2015 = vmatprep.subr.mxu0 0.0
    %2016 = vmatpush1.msra.mxu0 %v90
    %2017 = vmatprep.subr.mxu0 0.0
    %2018 = vmatpush1.msra.mxu0 0.0
    %2019 = vmatprep.subr.mxu0 0.0
    %2020 = vmatpush1.msra.mxu0 0.0
    %2021 = vmatprep.subr.mxu0 0.0
    %2022 = vmatpush1.msra.mxu0 0.0
    %2023 = vmatprep.subr.mxu0 0.0
    %2024 = vmatpush1.msra.mxu0 0.0
    %2025 = vmatprep.subr.mxu0 0.0
    %2026 = vmatpush1.msra.mxu0 0.0
    %2027 = vmatprep.subr.mxu0 0.0
    %2028 = vmatpush1.msra.mxu0 0.0
    %2029 = vmatprep.subr.mxu0 0.0
    %2030 = vmatpush1.msra.mxu0 0.0
    %2031 = vmatprep.subr.mxu0 0.0
    %2032 = vmatpush1.msra.mxu0 0.0
    %2033 = vmatprep.subr.mxu0 0.0
    %2034 = vmatpush1.msra.mxu0 0.0
    %2035 = vmatprep.subr.mxu0 0.0
    %2036 = vmatpush1.msra.mxu0 0.0
    %2037 = vmatprep.subr.mxu0 0.0
    %2038 = vmatpush1.msra.mxu0 0.0
    %2039 = vmatprep.subr.mxu0 0.0
    %2040 = vmatpush1.msra.mxu0 0.0
    %2041 = vmatprep.subr.mxu0 0.0
    %2042 = vmatpush1.msra.mxu0 0.0
    %2043 = vmatprep.subr.mxu0 0.0
    %2044 = vmatpush1.msra.mxu0 0.0
    %2045 = vmatprep.subr.mxu0 0.0
    %2046 = vmatpush1.msra.mxu0 0.0
    %2047 = vmatprep.subr.mxu0 0.0
    %2048 = vmatpush1.msra.mxu0 0.0
    %2049 = vmatprep.subr.mxu0 0.0
    %2050 = vmatpush1.msra.mxu0 0.0
    %2051 = vmatprep.subr.mxu0 0.0
    %2052 = vmatpush1.msra.mxu0 0.0
    %2053 = vmatprep.subr.mxu0 0.0
    %2054 = vmatpush1.msra.mxu0 0.0
    %2055 = vmatprep.subr.mxu0 0.0
    %2056 = vmatpush1.msra.mxu0 0.0
    %2057 = vmatprep.subr.mxu0 0.0
    %2058 = vmatpush1.msra.mxu0 0.0
    %2059 = vmatprep.subr.mxu0 0.0
    %2060 = vmatpush1.msra.mxu0 0.0
    %2061 = vmatprep.subr.mxu0 0.0
    %2062 = vmatpush1.msra.mxu0 0.0
    %2063 = vmatprep.subr.mxu0 0.0
    %2064 = vmatpush1.msra.mxu0 0.0
    %2065 = vmatprep.subr.mxu0 0.0
    %2066 = vmatpush1.msra.mxu0 0.0
    %2067 = vmatprep.subr.mxu0 0.0
    %2068 = vmatpush1.msra.mxu0 0.0
    %2069 = vmatprep.subr.mxu0 0.0
    %2070 = vmatpush1.msra.mxu0 0.0
    %2071 = vmatprep.subr.mxu0 0.0
    %2072 = vmatpush1.msra.mxu0 0.0
    %2073 = vmatprep.subr.mxu0 0.0
    %2074 = vmatpush1.msra.mxu0 0.0
    %2075 = vmatprep.subr.mxu0 0.0
    %2076 = vmatpush1.msra.mxu0 0.0
    %2077 = vmatprep.subr.mxu0 0.0
    %2078 = vmatpush1.msra.mxu0 0.0
    %2079 = vmatprep.mubr.f32.mxu0 0.0
    %2080 = vmatmul.mubr.f32.gmra.mrb[0].mxu0 %v2013
    %v2081 = vpop.f32.mrb[0].mxu0
    %v2082 = vadd.f32 0.0, %v2081
    %v2083 = vpop.f32.mrb[0].mxu0
    %2084 = vdwg.mxu0
    %v2086 = vsel %vm1286, %v1790, 0
    %2088 = vmatprep.subr.mxu0 0.0
    %2089 = vmatpush1.msra.mxu0 %v89
    %2090 = vmatprep.subr.mxu0 0.0
    %2091 = vmatpush1.msra.mxu0 0.0
    %2092 = vmatprep.subr.mxu0 0.0
    %2093 = vmatpush1.msra.mxu0 0.0
    %2094 = vmatprep.subr.mxu0 0.0
    %2095 = vmatpush1.msra.mxu0 0.0
    %2096 = vmatprep.subr.mxu0 0.0
    %2097 = vmatpush1.msra.mxu0 0.0
    %2098 = vmatprep.subr.mxu0 0.0
    %2099 = vmatpush1.msra.mxu0 0.0
    %2100 = vmatprep.subr.mxu0 0.0
    %2101 = vmatpush1.msra.mxu0 0.0
    %2102 = vmatprep.subr.mxu0 0.0
    %2103 = vmatpush1.msra.mxu0 0.0
    %2104 = vmatprep.subr.mxu0 0.0
    %2105 = vmatpush1.msra.mxu0 0.0
    %2106 = vmatprep.subr.mxu0 0.0
    %2107 = vmatpush1.msra.mxu0 0.0
    %2108 = vmatprep.subr.mxu0 0.0
    %2109 = vmatpush1.msra.mxu0 0.0
    %2110 = vmatprep.subr.mxu0 0.0
    %2111 = vmatpush1.msra.mxu0 0.0
    %2112 = vmatprep.subr.mxu0 0.0
    %2113 = vmatpush1.msra.mxu0 0.0
    %2114 = vmatprep.subr.mxu0 0.0
    %2115 = vmatpush1.msra.mxu0 0.0
    %2116 = vmatprep.subr.mxu0 0.0
    %2117 = vmatpush1.msra.mxu0 0.0
    %2118 = vmatprep.subr.mxu0 0.0
    %2119 = vmatpush1.msra.mxu0 0.0
    %2120 = vmatprep.subr.mxu0 0.0
    %2121 = vmatpush1.msra.mxu0 0.0
    %2122 = vmatprep.subr.mxu0 0.0
    %2123 = vmatpush1.msra.mxu0 0.0
    %2124 = vmatprep.subr.mxu0 0.0
    %2125 = vmatpush1.msra.mxu0 0.0
    %2126 = vmatprep.subr.mxu0 0.0
    %2127 = vmatpush1.msra.mxu0 0.0
    %2128 = vmatprep.subr.mxu0 0.0
    %2129 = vmatpush1.msra.mxu0 0.0
    %2130 = vmatprep.subr.mxu0 0.0
    %2131 = vmatpush1.msra.mxu0 0.0
    %2132 = vmatprep.subr.mxu0 0.0
    %2133 = vmatpush1.msra.mxu0 0.0
    %2134 = vmatprep.subr.mxu0 0.0
    %2135 = vmatpush1.msra.mxu0 0.0
    %2136 = vmatprep.subr.mxu0 0.0
    %2137 = vmatpush1.msra.mxu0 0.0
    %2138 = vmatprep.subr.mxu0 0.0
    %2139 = vmatpush1.msra.mxu0 0.0
    %2140 = vmatprep.subr.mxu0 0.0
    %2141 = vmatpush1.msra.mxu0 0.0
    %2142 = vmatprep.subr.mxu0 0.0
    %2143 = vmatpush1.msra.mxu0 0.0
    %2144 = vmatprep.subr.mxu0 0.0
    %2145 = vmatpush1.msra.mxu0 0.0
    %2146 = vmatprep.subr.mxu0 0.0
    %2147 = vmatpush1.msra.mxu0 0.0
    %2148 = vmatprep.subr.mxu0 0.0
    %2149 = vmatpush1.msra.mxu0 0.0
    %2150 = vmatprep.subr.mxu0 0.0
    %2151 = vmatpush1.msra.mxu0 0.0
    %2152 = vmatprep.mubr.f32.mxu0 0.0
    %2153 = vmatmul.mubr.f32.gmra.mrb[0].mxu0 %v2086
    %v2154 = vpop.f32.mrb[0].mxu0
    %v2155 = vadd.f32 %v2082, %v2154
    %v2156 = vpop.f32.mrb[0].mxu0
    %2157 = vdwg.mxu0
    %v2159 = vsel %vm1286, %v1936, 0
    %2161 = vmatprep.subr.mxu0 0.0
    %2162 = vmatpush1.msra.mxu0 %v91
    %2163 = vmatprep.subr.mxu0 0.0
    %2164 = vmatpush1.msra.mxu0 0.0
    %2165 = vmatprep.subr.mxu0 0.0
    %2166 = vmatpush1.msra.mxu0 0.0
    %2167 = vmatprep.subr.mxu0 0.0
    %2168 = vmatpush1.msra.mxu0 0.0
    %2169 = vmatprep.subr.mxu0 0.0
    %2170 = vmatpush1.msra.mxu0 0.0
    %2171 = vmatprep.subr.mxu0 0.0
    %2172 = vmatpush1.msra.mxu0 0.0
    %2173 = vmatprep.subr.mxu0 0.0
    %2174 = vmatpush1.msra.mxu0 0.0
    %2175 = vmatprep.subr.mxu0 0.0
    %2176 = vmatpush1.msra.mxu0 0.0
    %2177 = vmatprep.subr.mxu0 0.0
    %2178 = vmatpush1.msra.mxu0 0.0
    %2179 = vmatprep.subr.mxu0 0.0
    %2180 = vmatpush1.msra.mxu0 0.0
    %2181 = vmatprep.subr.mxu0 0.0
    %2182 = vmatpush1.msra.mxu0 0.0
    %2183 = vmatprep.subr.mxu0 0.0
    %2184 = vmatpush1.msra.mxu0 0.0
    %2185 = vmatprep.subr.mxu0 0.0
    %2186 = vmatpush1.msra.mxu0 0.0
    %2187 = vmatprep.subr.mxu0 0.0
    %2188 = vmatpush1.msra.mxu0 0.0
    %2189 = vmatprep.subr.mxu0 0.0
    %2190 = vmatpush1.msra.mxu0 0.0
    %2191 = vmatprep.subr.mxu0 0.0
    %2192 = vmatpush1.msra.mxu0 0.0
    %2193 = vmatprep.subr.mxu0 0.0
    %2194 = vmatpush1.msra.mxu0 0.0
    %2195 = vmatprep.subr.mxu0 0.0
    %2196 = vmatpush1.msra.mxu0 0.0
    %2197 = vmatprep.subr.mxu0 0.0
    %2198 = vmatpush1.msra.mxu0 0.0
    %2199 = vmatprep.subr.mxu0 0.0
    %2200 = vmatpush1.msra.mxu0 0.0
    %2201 = vmatprep.subr.mxu0 0.0
    %2202 = vmatpush1.msra.mxu0 0.0
    %2203 = vmatprep.subr.mxu0 0.0
    %2204 = vmatpush1.msra.mxu0 0.0
    %2205 = vmatprep.subr.mxu0 0.0
    %2206 = vmatpush1.msra.mxu0 0.0
    %2207 = vmatprep.subr.mxu0 0.0
    %2208 = vmatpush1.msra.mxu0 0.0
    %2209 = vmatprep.subr.mxu0 0.0
    %2210 = vmatpush1.msra.mxu0 0.0
    %2211 = vmatprep.subr.mxu0 0.0
    %2212 = vmatpush1.msra.mxu0 0.0
    %2213 = vmatprep.subr.mxu0 0.0
    %2214 = vmatpush1.msra.mxu0 0.0
    %2215 = vmatprep.subr.mxu0 0.0
    %2216 = vmatpush1.msra.mxu0 0.0
    %2217 = vmatprep.subr.mxu0 0.0
    %2218 = vmatpush1.msra.mxu0 0.0
    %2219 = vmatprep.subr.mxu0 0.0
    %2220 = vmatpush1.msra.mxu0 0.0
    %2221 = vmatprep.subr.mxu0 0.0
    %2222 = vmatpush1.msra.mxu0 0.0
    %2223 = vmatprep.subr.mxu0 0.0
    %2224 = vmatpush1.msra.mxu0 0.0
    %2225 = vmatprep.mubr.f32.mxu0 0.0
    %2226 = vmatmul.mubr.f32.gmra.mrb[0].mxu0 %v2159
    %v2227 = vpop.f32.mrb[0].mxu0
    %v2228 = vadd.f32 0.0, %v2227
    %v2229 = vpop.f32.mrb[0].mxu0
    %2230 = vdwg.mxu0
    %v2231 = vadd.f32 %v2155, %v2228
    %v2233 = vsel %vm1286, %v2009, 0
    %2235 = vmatprep.subr.mxu0 0.0
    %2236 = vmatpush1.msra.mxu0 %v92
    %2237 = vmatprep.subr.mxu0 0.0
    %2238 = vmatpush1.msra.mxu0 0.0
    %2239 = vmatprep.subr.mxu0 0.0
    %2240 = vmatpush1.msra.mxu0 0.0
    %2241 = vmatprep.subr.mxu0 0.0
    %2242 = vmatpush1.msra.mxu0 0.0
    %2243 = vmatprep.subr.mxu0 0.0
    %2244 = vmatpush1.msra.mxu0 0.0
    %2245 = vmatprep.subr.mxu0 0.0
    %2246 = vmatpush1.msra.mxu0 0.0
    %2247 = vmatprep.subr.mxu0 0.0
    %2248 = vmatpush1.msra.mxu0 0.0
    %2249 = vmatprep.subr.mxu0 0.0
    %2250 = vmatpush1.msra.mxu0 0.0
    %2251 = vmatprep.subr.mxu0 0.0
    %2252 = vmatpush1.msra.mxu0 0.0
    %2253 = vmatprep.subr.mxu0 0.0
    %2254 = vmatpush1.msra.mxu0 0.0
    %2255 = vmatprep.subr.mxu0 0.0
    %2256 = vmatpush1.msra.mxu0 0.0
    %2257 = vmatprep.subr.mxu0 0.0
    %2258 = vmatpush1.msra.mxu0 0.0
    %2259 = vmatprep.subr.mxu0 0.0
    %2260 = vmatpush1.msra.mxu0 0.0
    %2261 = vmatprep.subr.mxu0 0.0
    %2262 = vmatpush1.msra.mxu0 0.0
    %2263 = vmatprep.subr.mxu0 0.0
    %2264 = vmatpush1.msra.mxu0 0.0
    %2265 = vmatprep.subr.mxu0 0.0
    %2266 = vmatpush1.msra.mxu0 0.0
    %2267 = vmatprep.subr.mxu0 0.0
    %2268 = vmatpush1.msra.mxu0 0.0
    %2269 = vmatprep.subr.mxu0 0.0
    %2270 = vmatpush1.msra.mxu0 0.0
    %2271 = vmatprep.subr.mxu0 0.0
    %2272 = vmatpush1.msra.mxu0 0.0
    %2273 = vmatprep.subr.mxu0 0.0
    %2274 = vmatpush1.msra.mxu0 0.0
    %2275 = vmatprep.subr.mxu0 0.0
    %2276 = vmatpush1.msra.mxu0 0.0
    %2277 = vmatprep.subr.mxu0 0.0
    %2278 = vmatpush1.msra.mxu0 0.0
    %2279 = vmatprep.subr.mxu0 0.0
    %2280 = vmatpush1.msra.mxu0 0.0
    %2281 = vmatprep.subr.mxu0 0.0
    %2282 = vmatpush1.msra.mxu0 0.0
    %2283 = vmatprep.subr.mxu0 0.0
    %2284 = vmatpush1.msra.mxu0 0.0
    %2285 = vmatprep.subr.mxu0 0.0
    %2286 = vmatpush1.msra.mxu0 0.0
    %2287 = vmatprep.subr.mxu0 0.0
    %2288 = vmatpush1.msra.mxu0 0.0
    %2289 = vmatprep.subr.mxu0 0.0
    %2290 = vmatpush1.msra.mxu0 0.0
    %2291 = vmatprep.subr.mxu0 0.0
    %2292 = vmatpush1.msra.mxu0 0.0
    %2293 = vmatprep.subr.mxu0 0.0
    %2294 = vmatpush1.msra.mxu0 0.0
    %2295 = vmatprep.subr.mxu0 0.0
    %2296 = vmatpush1.msra.mxu0 0.0
    %2297 = vmatprep.subr.mxu0 0.0
    %2298 = vmatpush1.msra.mxu0 0.0
    %2299 = vmatprep.mubr.f32.mxu0 0.0
    %2300 = vmatmul.mubr.f32.gmra.mrb[0].mxu0 %v2233
    %v2301 = vpop.f32.mrb[0].mxu0
    %v2302 = vadd.f32 0.0, %v2301
    %v2303 = vpop.f32.mrb[0].mxu0
    %2304 = vdwg.mxu0
    %v2305 = vadd.f32 %v2231, %v2302
    %v2306 = vadd.f32 %v2305, %v137
    %2307 = vmatprep.subr.mxu0 0.0
    %2308 = vmatpush1.msra.mxu0 %v41
    %2309 = vmatprep.subr.mxu0 0.0
    %2310 = vmatpush1.msra.mxu0 %v42
    %2311 = vmatprep.subr.mxu0 0.0
    %2312 = vmatpush1.msra.mxu0 %v43
    %2313 = vmatprep.subr.mxu0 0.0
    %2314 = vmatpush1.msra.mxu0 %v44
    %2315 = vmatprep.subr.mxu0 0.0
    %2316 = vmatpush1.msra.mxu0 0.0
    %2317 = vmatprep.subr.mxu0 0.0
    %2318 = vmatpush1.msra.mxu0 0.0
    %2319 = vmatprep.subr.mxu0 0.0
    %2320 = vmatpush1.msra.mxu0 0.0
    %2321 = vmatprep.subr.mxu0 0.0
    %2322 = vmatpush1.msra.mxu0 0.0
    %2323 = vmatprep.subr.mxu0 0.0
    %2324 = vmatpush1.msra.mxu0 0.0
    %2325 = vmatprep.subr.mxu0 0.0
    %2326 = vmatpush1.msra.mxu0 0.0
    %2327 = vmatprep.subr.mxu0 0.0
    %2328 = vmatpush1.msra.mxu0 0.0
    %2329 = vmatprep.subr.mxu0 0.0
    %2330 = vmatpush1.msra.mxu0 0.0
    %2331 = vmatprep.subr.mxu0 0.0
    %2332 = vmatpush1.msra.mxu0 0.0
    %2333 = vmatprep.subr.mxu0 0.0
    %2334 = vmatpush1.msra.mxu0 0.0
    %2335 = vmatprep.subr.mxu0 0.0
    %2336 = vmatpush1.msra.mxu0 0.0
    %2337 = vmatprep.subr.mxu0 0.0
    %2338 = vmatpush1.msra.mxu0 0.0
    %2339 = vmatprep.subr.mxu0 0.0
    %2340 = vmatpush1.msra.mxu0 0.0
    %2341 = vmatprep.subr.mxu0 0.0
    %2342 = vmatpush1.msra.mxu0 0.0
    %2343 = vmatprep.subr.mxu0 0.0
    %2344 = vmatpush1.msra.mxu0 0.0
    %2345 = vmatprep.subr.mxu0 0.0
    %2346 = vmatpush1.msra.mxu0 0.0
    %2347 = vmatprep.subr.mxu0 0.0
    %2348 = vmatpush1.msra.mxu0 0.0
    %2349 = vmatprep.subr.mxu0 0.0
    %2350 = vmatpush1.msra.mxu0 0.0
    %2351 = vmatprep.subr.mxu0 0.0
    %2352 = vmatpush1.msra.mxu0 0.0
    %2353 = vmatprep.subr.mxu0 0.0
    %2354 = vmatpush1.msra.mxu0 0.0
    %2355 = vmatprep.subr.mxu0 0.0
    %2356 = vmatpush1.msra.mxu0 0.0
    %2357 = vmatprep.subr.mxu0 0.0
    %2358 = vmatpush1.msra.mxu0 0.0
    %2359 = vmatprep.subr.mxu0 0.0
    %2360 = vmatpush1.msra.mxu0 0.0
    %2361 = vmatprep.subr.mxu0 0.0
    %2362 = vmatpush1.msra.mxu0 0.0
    %2363 = vmatprep.subr.mxu0 0.0
    %2364 = vmatpush1.msra.mxu0 0.0
    %2365 = vmatprep.subr.mxu0 0.0
    %2366 = vmatpush1.msra.mxu0 0.0
    %2367 = vmatprep.subr.mxu0 0.0
    %2368 = vmatpush1.msra.mxu0 0.0
    %2369 = vmatprep.subr.mxu0 0.0
    %2370 = vmatpush1.msra.mxu0 0.0
    %2371 = vmatprep.mubr.f32.mxu0 0.0
    %2372 = vmatmul.mubr.f32.gmra.mrb[0].mxu0 %v423
    %v2373 = vpop.f32.mrb[0].mxu0
    %v2374 = vadd.f32 0.0, %v2373
    %v2375 = vpop.f32.mrb[0].mxu0
    %2376 = vmatprep.mubr.f32.mxu0 0.0
    %2377 = vmatmul.mubr.f32.gmra.mrb[0].mxu0 %v426
    %v2378 = vpop.f32.mrb[0].mxu0
    %v2379 = vadd.f32 0.0, %v2378
    %v2380 = vpop.f32.mrb[0].mxu0
    %2381 = vmatprep.mubr.f32.mxu0 0.0
    %2382 = vmatmul.mubr.f32.gmra.mrb[0].mxu0 %v429
    %v2383 = vpop.f32.mrb[0].mxu0
    %v2384 = vadd.f32 0.0, %v2383
    %v2385 = vpop.f32.mrb[0].mxu0
    %2386 = vmatprep.mubr.f32.mxu0 0.0
    %2387 = vmatmul.mubr.f32.gmra.mrb[0].mxu0 %v432
    %v2388 = vpop.f32.mrb[0].mxu0
    %v2389 = vadd.f32 0.0, %v2388
    %v2390 = vpop.f32.mrb[0].mxu0
    %2391 = vmatprep.mubr.f32.mxu0 0.0
    %2392 = vmatmul.mubr.f32.gmra.mrb[0].mxu0 %v435
    %v2393 = vpop.f32.mrb[0].mxu0
    %v2394 = vadd.f32 0.0, %v2393
    %v2395 = vpop.f32.mrb[0].mxu0
    %2396 = vmatprep.mubr.f32.mxu0 0.0
    %2397 = vmatmul.mubr.f32.gmra.mrb[0].mxu0 %v438
    %v2398 = vpop.f32.mrb[0].mxu0
    %v2399 = vadd.f32 0.0, %v2398
    %v2400 = vpop.f32.mrb[0].mxu0
    %2401 = vmatprep.mubr.f32.mxu0 0.0
    %2402 = vmatmul.mubr.f32.gmra.mrb[0].mxu0 %v441
    %v2403 = vpop.f32.mrb[0].mxu0
    %v2404 = vadd.f32 0.0, %v2403
    %v2405 = vpop.f32.mrb[0].mxu0
    %2406 = vmatprep.mubr.f32.mxu0 0.0
    %2407 = vmatmul.mubr.f32.gmra.mrb[0].mxu0 %v444
    %v2408 = vpop.f32.mrb[0].mxu0
    %v2409 = vadd.f32 0.0, %v2408
    %v2410 = vpop.f32.mrb[0].mxu0
    %2411 = vdwg.mxu0
    %2412 = vmatprep.subr.mxu0 0.0
    %2413 = vmatpush1.msra.mxu0 %v45
    %2414 = vmatprep.subr.mxu0 0.0
    %2415 = vmatpush1.msra.mxu0 %v46
    %2416 = vmatprep.subr.mxu0 0.0
    %2417 = vmatpush1.msra.mxu0 %v47
    %2418 = vmatprep.subr.mxu0 0.0
    %2419 = vmatpush1.msra.mxu0 %v48
    %2420 = vmatprep.subr.mxu0 0.0
    %2421 = vmatpush1.msra.mxu0 0.0
    %2422 = vmatprep.subr.mxu0 0.0
    %2423 = vmatpush1.msra.mxu0 0.0
    %2424 = vmatprep.subr.mxu0 0.0
    %2425 = vmatpush1.msra.mxu0 0.0
    %2426 = vmatprep.subr.mxu0 0.0
    %2427 = vmatpush1.msra.mxu0 0.0
    %2428 = vmatprep.subr.mxu0 0.0
    %2429 = vmatpush1.msra.mxu0 0.0
    %2430 = vmatprep.subr.mxu0 0.0
    %2431 = vmatpush1.msra.mxu0 0.0
    %2432 = vmatprep.subr.mxu0 0.0
    %2433 = vmatpush1.msra.mxu0 0.0
    %2434 = vmatprep.subr.mxu0 0.0
    %2435 = vmatpush1.msra.mxu0 0.0
    %2436 = vmatprep.subr.mxu0 0.0
    %2437 = vmatpush1.msra.mxu0 0.0
    %2438 = vmatprep.subr.mxu0 0.0
    %2439 = vmatpush1.msra.mxu0 0.0
    %2440 = vmatprep.subr.mxu0 0.0
    %2441 = vmatpush1.msra.mxu0 0.0
    %2442 = vmatprep.subr.mxu0 0.0
    %2443 = vmatpush1.msra.mxu0 0.0
    %2444 = vmatprep.subr.mxu0 0.0
    %2445 = vmatpush1.msra.mxu0 0.0
    %2446 = vmatprep.subr.mxu0 0.0
    %2447 = vmatpush1.msra.mxu0 0.0
    %2448 = vmatprep.subr.mxu0 0.0
    %2449 = vmatpush1.msra.mxu0 0.0
    %2450 = vmatprep.subr.mxu0 0.0
    %2451 = vmatpush1.msra.mxu0 0.0
    %2452 = vmatprep.subr.mxu0 0.0
    %2453 = vmatpush1.msra.mxu0 0.0
    %2454 = vmatprep.subr.mxu0 0.0
    %2455 = vmatpush1.msra.mxu0 0.0
    %2456 = vmatprep.subr.mxu0 0.0
    %2457 = vmatpush1.msra.mxu0 0.0
    %2458 = vmatprep.subr.mxu0 0.0
    %2459 = vmatpush1.msra.mxu0 0.0
    %2460 = vmatprep.subr.mxu0 0.0
    %2461 = vmatpush1.msra.mxu0 0.0
    %2462 = vmatprep.subr.mxu0 0.0
    %2463 = vmatpush1.msra.mxu0 0.0
    %2464 = vmatprep.subr.mxu0 0.0
    %2465 = vmatpush1.msra.mxu0 0.0
    %2466 = vmatprep.subr.mxu0 0.0
    %2467 = vmatpush1.msra.mxu0 0.0
    %2468 = vmatprep.subr.mxu0 0.0
    %2469 = vmatpush1.msra.mxu0 0.0
    %2470 = vmatprep.subr.mxu0 0.0
    %2471 = vmatpush1.msra.mxu0 0.0
    %2472 = vmatprep.subr.mxu0 0.0
    %2473 = vmatpush1.msra.mxu0 0.0
    %2474 = vmatprep.subr.mxu0 0.0
    %2475 = vmatpush1.msra.mxu0 0.0
    %2476 = vmatprep.mubr.f32.mxu0 0.0
    %2477 = vmatmul.mubr.f32.gmra.mrb[0].mxu0 %v423
    %v2478 = vpop.f32.mrb[0].mxu0
    %v2479 = vadd.f32 0.0, %v2478
    %v2480 = vpop.f32.mrb[0].mxu0
    %2481 = vmatprep.mubr.f32.mxu0 0.0
    %2482 = vmatmul.mubr.f32.gmra.mrb[0].mxu0 %v426
    %v2483 = vpop.f32.mrb[0].mxu0
    %v2484 = vadd.f32 0.0, %v2483
    %v2485 = vpop.f32.mrb[0].mxu0
    %2486 = vmatprep.mubr.f32.mxu0 0.0
    %2487 = vmatmul.mubr.f32.gmra.mrb[0].mxu0 %v429
    %v2488 = vpop.f32.mrb[0].mxu0
    %v2489 = vadd.f32 0.0, %v2488
    %v2490 = vpop.f32.mrb[0].mxu0
    %2491 = vmatprep.mubr.f32.mxu0 0.0
    %2492 = vmatmul.mubr.f32.gmra.mrb[0].mxu0 %v432
    %v2493 = vpop.f32.mrb[0].mxu0
    %v2494 = vadd.f32 0.0, %v2493
    %v2495 = vpop.f32.mrb[0].mxu0
    %2496 = vmatprep.mubr.f32.mxu0 0.0
    %2497 = vmatmul.mubr.f32.gmra.mrb[0].mxu0 %v435
    %v2498 = vpop.f32.mrb[0].mxu0
    %v2499 = vadd.f32 0.0, %v2498
    %v2500 = vpop.f32.mrb[0].mxu0
    %2501 = vmatprep.mubr.f32.mxu0 0.0
    %2502 = vmatmul.mubr.f32.gmra.mrb[0].mxu0 %v438
    %v2503 = vpop.f32.mrb[0].mxu0
    %v2504 = vadd.f32 0.0, %v2503
    %v2505 = vpop.f32.mrb[0].mxu0
    %2506 = vmatprep.mubr.f32.mxu0 0.0
    %2507 = vmatmul.mubr.f32.gmra.mrb[0].mxu0 %v441
    %v2508 = vpop.f32.mrb[0].mxu0
    %v2509 = vadd.f32 0.0, %v2508
    %v2510 = vpop.f32.mrb[0].mxu0
    %2511 = vmatprep.mubr.f32.mxu0 0.0
    %2512 = vmatmul.mubr.f32.gmra.mrb[0].mxu0 %v444
    %v2513 = vpop.f32.mrb[0].mxu0
    %v2514 = vadd.f32 0.0, %v2513
    %v2515 = vpop.f32.mrb[0].mxu0
    %2516 = vdwg.mxu0
    %2517 = vmatprep.subr.mxu0 0.0
    %2518 = vmatpush1.msra.mxu0 %v49
    %2519 = vmatprep.subr.mxu0 0.0
    %2520 = vmatpush1.msra.mxu0 %v50
    %2521 = vmatprep.subr.mxu0 0.0
    %2522 = vmatpush1.msra.mxu0 %v51
    %2523 = vmatprep.subr.mxu0 0.0
    %2524 = vmatpush1.msra.mxu0 %v52
    %2525 = vmatprep.subr.mxu0 0.0
    %2526 = vmatpush1.msra.mxu0 0.0
    %2527 = vmatprep.subr.mxu0 0.0
    %2528 = vmatpush1.msra.mxu0 0.0
    %2529 = vmatprep.subr.mxu0 0.0
    %2530 = vmatpush1.msra.mxu0 0.0
    %2531 = vmatprep.subr.mxu0 0.0
    %2532 = vmatpush1.msra.mxu0 0.0
    %2533 = vmatprep.subr.mxu0 0.0
    %2534 = vmatpush1.msra.mxu0 0.0
    %2535 = vmatprep.subr.mxu0 0.0
    %2536 = vmatpush1.msra.mxu0 0.0
    %2537 = vmatprep.subr.mxu0 0.0
    %2538 = vmatpush1.msra.mxu0 0.0
    %2539 = vmatprep.subr.mxu0 0.0
    %2540 = vmatpush1.msra.mxu0 0.0
    %2541 = vmatprep.subr.mxu0 0.0
    %2542 = vmatpush1.msra.mxu0 0.0
    %2543 = vmatprep.subr.mxu0 0.0
    %2544 = vmatpush1.msra.mxu0 0.0
    %2545 = vmatprep.subr.mxu0 0.0
    %2546 = vmatpush1.msra.mxu0 0.0
    %2547 = vmatprep.subr.mxu0 0.0
    %2548 = vmatpush1.msra.mxu0 0.0
    %2549 = vmatprep.subr.mxu0 0.0
    %2550 = vmatpush1.msra.mxu0 0.0
    %2551 = vmatprep.subr.mxu0 0.0
    %2552 = vmatpush1.msra.mxu0 0.0
    %2553 = vmatprep.subr.mxu0 0.0
    %2554 = vmatpush1.msra.mxu0 0.0
    %2555 = vmatprep.subr.mxu0 0.0
    %2556 = vmatpush1.msra.mxu0 0.0
    %2557 = vmatprep.subr.mxu0 0.0
    %2558 = vmatpush1.msra.mxu0 0.0
    %2559 = vmatprep.subr.mxu0 0.0
    %2560 = vmatpush1.msra.mxu0 0.0
    %2561 = vmatprep.subr.mxu0 0.0
    %2562 = vmatpush1.msra.mxu0 0.0
    %2563 = vmatprep.subr.mxu0 0.0
    %2564 = vmatpush1.msra.mxu0 0.0
    %2565 = vmatprep.subr.mxu0 0.0
    %2566 = vmatpush1.msra.mxu0 0.0
    %2567 = vmatprep.subr.mxu0 0.0
    %2568 = vmatpush1.msra.mxu0 0.0
    %2569 = vmatprep.subr.mxu0 0.0
    %2570 = vmatpush1.msra.mxu0 0.0
    %2571 = vmatprep.subr.mxu0 0.0
    %2572 = vmatpush1.msra.mxu0 0.0
    %2573 = vmatprep.subr.mxu0 0.0
    %2574 = vmatpush1.msra.mxu0 0.0
    %2575 = vmatprep.subr.mxu0 0.0
    %2576 = vmatpush1.msra.mxu0 0.0
    %2577 = vmatprep.subr.mxu0 0.0
    %2578 = vmatpush1.msra.mxu0 0.0
    %2579 = vmatprep.subr.mxu0 0.0
    %2580 = vmatpush1.msra.mxu0 0.0
    %2581 = vmatprep.mubr.f32.mxu0 0.0
    %2582 = vmatmul.mubr.f32.gmra.mrb[0].mxu0 %v423
    %v2583 = vpop.f32.mrb[0].mxu0
    %v2584 = vadd.f32 0.0, %v2583
    %v2585 = vpop.f32.mrb[0].mxu0
    %2586 = vmatprep.mubr.f32.mxu0 0.0
    %2587 = vmatmul.mubr.f32.gmra.mrb[0].mxu0 %v426
    %v2588 = vpop.f32.mrb[0].mxu0
    %v2589 = vadd.f32 0.0, %v2588
    %v2590 = vpop.f32.mrb[0].mxu0
    %2591 = vmatprep.mubr.f32.mxu0 0.0
    %2592 = vmatmul.mubr.f32.gmra.mrb[0].mxu0 %v429
    %v2593 = vpop.f32.mrb[0].mxu0
    %v2594 = vadd.f32 0.0, %v2593
    %v2595 = vpop.f32.mrb[0].mxu0
    %2596 = vmatprep.mubr.f32.mxu0 0.0
    %2597 = vmatmul.mubr.f32.gmra.mrb[0].mxu0 %v432
    %v2598 = vpop.f32.mrb[0].mxu0
    %v2599 = vadd.f32 0.0, %v2598
    %v2600 = vpop.f32.mrb[0].mxu0
    %2601 = vmatprep.mubr.f32.mxu0 0.0
    %2602 = vmatmul.mubr.f32.gmra.mrb[0].mxu0 %v435
    %v2603 = vpop.f32.mrb[0].mxu0
    %v2604 = vadd.f32 0.0, %v2603
    %v2605 = vpop.f32.mrb[0].mxu0
    %2606 = vmatprep.mubr.f32.mxu0 0.0
    %2607 = vmatmul.mubr.f32.gmra.mrb[0].mxu0 %v438
    %v2608 = vpop.f32.mrb[0].mxu0
    %v2609 = vadd.f32 0.0, %v2608
    %v2610 = vpop.f32.mrb[0].mxu0
    %2611 = vmatprep.mubr.f32.mxu0 0.0
    %2612 = vmatmul.mubr.f32.gmra.mrb[0].mxu0 %v441
    %v2613 = vpop.f32.mrb[0].mxu0
    %v2614 = vadd.f32 0.0, %v2613
    %v2615 = vpop.f32.mrb[0].mxu0
    %2616 = vmatprep.mubr.f32.mxu0 0.0
    %2617 = vmatmul.mubr.f32.gmra.mrb[0].mxu0 %v444
    %v2618 = vpop.f32.mrb[0].mxu0
    %v2619 = vadd.f32 0.0, %v2618
    %v2620 = vpop.f32.mrb[0].mxu0
    %2621 = vdwg.mxu0
    %2622 = vmatprep.subr.mxu0 0.0
    %2623 = vmatpush1.msra.mxu0 %v53
    %2624 = vmatprep.subr.mxu0 0.0
    %2625 = vmatpush1.msra.mxu0 %v54
    %2626 = vmatprep.subr.mxu0 0.0
    %2627 = vmatpush1.msra.mxu0 %v55
    %2628 = vmatprep.subr.mxu0 0.0
    %2629 = vmatpush1.msra.mxu0 %v56
    %2630 = vmatprep.subr.mxu0 0.0
    %2631 = vmatpush1.msra.mxu0 0.0
    %2632 = vmatprep.subr.mxu0 0.0
    %2633 = vmatpush1.msra.mxu0 0.0
    %2634 = vmatprep.subr.mxu0 0.0
    %2635 = vmatpush1.msra.mxu0 0.0
    %2636 = vmatprep.subr.mxu0 0.0
    %2637 = vmatpush1.msra.mxu0 0.0
    %2638 = vmatprep.subr.mxu0 0.0
    %2639 = vmatpush1.msra.mxu0 0.0
    %2640 = vmatprep.subr.mxu0 0.0
    %2641 = vmatpush1.msra.mxu0 0.0
    %2642 = vmatprep.subr.mxu0 0.0
    %2643 = vmatpush1.msra.mxu0 0.0
    %2644 = vmatprep.subr.mxu0 0.0
    %2645 = vmatpush1.msra.mxu0 0.0
    %2646 = vmatprep.subr.mxu0 0.0
    %2647 = vmatpush1.msra.mxu0 0.0
    %2648 = vmatprep.subr.mxu0 0.0
    %2649 = vmatpush1.msra.mxu0 0.0
    %2650 = vmatprep.subr.mxu0 0.0
    %2651 = vmatpush1.msra.mxu0 0.0
    %2652 = vmatprep.subr.mxu0 0.0
    %2653 = vmatpush1.msra.mxu0 0.0
    %2654 = vmatprep.subr.mxu0 0.0
    %2655 = vmatpush1.msra.mxu0 0.0
    %2656 = vmatprep.subr.mxu0 0.0
    %2657 = vmatpush1.msra.mxu0 0.0
    %2658 = vmatprep.subr.mxu0 0.0
    %2659 = vmatpush1.msra.mxu0 0.0
    %2660 = vmatprep.subr.mxu0 0.0
    %2661 = vmatpush1.msra.mxu0 0.0
    %2662 = vmatprep.subr.mxu0 0.0
    %2663 = vmatpush1.msra.mxu0 0.0
    %2664 = vmatprep.subr.mxu0 0.0
    %2665 = vmatpush1.msra.mxu0 0.0
    %2666 = vmatprep.subr.mxu0 0.0
    %2667 = vmatpush1.msra.mxu0 0.0
    %2668 = vmatprep.subr.mxu0 0.0
    %2669 = vmatpush1.msra.mxu0 0.0
    %2670 = vmatprep.subr.mxu0 0.0
    %2671 = vmatpush1.msra.mxu0 0.0
    %2672 = vmatprep.subr.mxu0 0.0
    %2673 = vmatpush1.msra.mxu0 0.0
    %2674 = vmatprep.subr.mxu0 0.0
    %2675 = vmatpush1.msra.mxu0 0.0
    %2676 = vmatprep.subr.mxu0 0.0
    %2677 = vmatpush1.msra.mxu0 0.0
    %2678 = vmatprep.subr.mxu0 0.0
    %2679 = vmatpush1.msra.mxu0 0.0
    %2680 = vmatprep.subr.mxu0 0.0
    %2681 = vmatpush1.msra.mxu0 0.0
    %2682 = vmatprep.subr.mxu0 0.0
    %2683 = vmatpush1.msra.mxu0 0.0
    %2684 = vmatprep.subr.mxu0 0.0
    %2685 = vmatpush1.msra.mxu0 0.0
    %2686 = vmatprep.mubr.f32.mxu0 0.0
    %2687 = vmatmul.mubr.f32.gmra.mrb[0].mxu0 %v423
    %v2688 = vpop.f32.mrb[0].mxu0
    %v2689 = vadd.f32 0.0, %v2688
    %v2690 = vpop.f32.mrb[0].mxu0
    %2691 = vmatprep.mubr.f32.mxu0 0.0
    %2692 = vmatmul.mubr.f32.gmra.mrb[0].mxu0 %v426
    %v2693 = vpop.f32.mrb[0].mxu0
    %v2694 = vadd.f32 0.0, %v2693
    %v2695 = vpop.f32.mrb[0].mxu0
    %2696 = vmatprep.mubr.f32.mxu0 0.0
    %2697 = vmatmul.mubr.f32.gmra.mrb[0].mxu0 %v429
    %v2698 = vpop.f32.mrb[0].mxu0
    %v2699 = vadd.f32 0.0, %v2698
    %v2700 = vpop.f32.mrb[0].mxu0
    %2701 = vmatprep.mubr.f32.mxu0 0.0
    %2702 = vmatmul.mubr.f32.gmra.mrb[0].mxu0 %v432
    %v2703 = vpop.f32.mrb[0].mxu0
    %v2704 = vadd.f32 0.0, %v2703
    %v2705 = vpop.f32.mrb[0].mxu0
    %2706 = vmatprep.mubr.f32.mxu0 0.0
    %2707 = vmatmul.mubr.f32.gmra.mrb[0].mxu0 %v435
    %v2708 = vpop.f32.mrb[0].mxu0
    %v2709 = vadd.f32 0.0, %v2708
    %v2710 = vpop.f32.mrb[0].mxu0
    %2711 = vmatprep.mubr.f32.mxu0 0.0
    %2712 = vmatmul.mubr.f32.gmra.mrb[0].mxu0 %v438
    %v2713 = vpop.f32.mrb[0].mxu0
    %v2714 = vadd.f32 0.0, %v2713
    %v2715 = vpop.f32.mrb[0].mxu0
    %2716 = vmatprep.mubr.f32.mxu0 0.0
    %2717 = vmatmul.mubr.f32.gmra.mrb[0].mxu0 %v441
    %v2718 = vpop.f32.mrb[0].mxu0
    %v2719 = vadd.f32 0.0, %v2718
    %v2720 = vpop.f32.mrb[0].mxu0
    %2721 = vmatprep.mubr.f32.mxu0 0.0
    %2722 = vmatmul.mubr.f32.gmra.mrb[0].mxu0 %v444
    %v2723 = vpop.f32.mrb[0].mxu0
    %v2724 = vadd.f32 0.0, %v2723
    %v2725 = vpop.f32.mrb[0].mxu0
    %2726 = vdwg.mxu0
    %v2728 = vsel %vm138, %v2306, 0
    %2730 = vmatprep.subr.mxu0 0.0
    %2731 = vmatpush1.msra.mxu0 %v57
    %2732 = vmatprep.subr.mxu0 0.0
    %2733 = vmatpush1.msra.mxu0 %v58
    %2734 = vmatprep.subr.mxu0 0.0
    %2735 = vmatpush1.msra.mxu0 %v59
    %2736 = vmatprep.subr.mxu0 0.0
    %2737 = vmatpush1.msra.mxu0 %v60
    %2738 = vmatprep.subr.mxu0 0.0
    %2739 = vmatpush1.msra.mxu0 0.0
    %2740 = vmatprep.subr.mxu0 0.0
    %2741 = vmatpush1.msra.mxu0 0.0
    %2742 = vmatprep.subr.mxu0 0.0
    %2743 = vmatpush1.msra.mxu0 0.0
    %2744 = vmatprep.subr.mxu0 0.0
    %2745 = vmatpush1.msra.mxu0 0.0
    %2746 = vmatprep.subr.mxu0 0.0
    %2747 = vmatpush1.msra.mxu0 0.0
    %2748 = vmatprep.subr.mxu0 0.0
    %2749 = vmatpush1.msra.mxu0 0.0
    %2750 = vmatprep.subr.mxu0 0.0
    %2751 = vmatpush1.msra.mxu0 0.0
    %2752 = vmatprep.subr.mxu0 0.0
    %2753 = vmatpush1.msra.mxu0 0.0
    %2754 = vmatprep.subr.mxu0 0.0
    %2755 = vmatpush1.msra.mxu0 0.0
    %2756 = vmatprep.subr.mxu0 0.0
    %2757 = vmatpush1.msra.mxu0 0.0
    %2758 = vmatprep.subr.mxu0 0.0
    %2759 = vmatpush1.msra.mxu0 0.0
    %2760 = vmatprep.subr.mxu0 0.0
    %2761 = vmatpush1.msra.mxu0 0.0
    %2762 = vmatprep.subr.mxu0 0.0
    %2763 = vmatpush1.msra.mxu0 0.0
    %2764 = vmatprep.subr.mxu0 0.0
    %2765 = vmatpush1.msra.mxu0 0.0
    %2766 = vmatprep.subr.mxu0 0.0
    %2767 = vmatpush1.msra.mxu0 0.0
    %2768 = vmatprep.subr.mxu0 0.0
    %2769 = vmatpush1.msra.mxu0 0.0
    %2770 = vmatprep.subr.mxu0 0.0
    %2771 = vmatpush1.msra.mxu0 0.0
    %2772 = vmatprep.subr.mxu0 0.0
    %2773 = vmatpush1.msra.mxu0 0.0
    %2774 = vmatprep.subr.mxu0 0.0
    %2775 = vmatpush1.msra.mxu0 0.0
    %2776 = vmatprep.subr.mxu0 0.0
    %2777 = vmatpush1.msra.mxu0 0.0
    %2778 = vmatprep.subr.mxu0 0.0
    %2779 = vmatpush1.msra.mxu0 0.0
    %2780 = vmatprep.subr.mxu0 0.0
    %2781 = vmatpush1.msra.mxu0 0.0
    %2782 = vmatprep.subr.mxu0 0.0
    %2783 = vmatpush1.msra.mxu0 0.0
    %2784 = vmatprep.subr.mxu0 0.0
    %2785 = vmatpush1.msra.mxu0 0.0
    %2786 = vmatprep.subr.mxu0 0.0
    %2787 = vmatpush1.msra.mxu0 0.0
    %2788 = vmatprep.subr.mxu0 0.0
    %2789 = vmatpush1.msra.mxu0 0.0
    %2790 = vmatprep.subr.mxu0 0.0
    %2791 = vmatpush1.msra.mxu0 0.0
    %2792 = vmatprep.subr.mxu0 0.0
    %2793 = vmatpush1.msra.mxu0 0.0
    %2794 = vmatprep.mubr.f32.mxu0 0.0
    %2795 = vmatmul.mubr.f32.gmra.mrb[0].mxu0 %v2728
    %v2796 = vpop.f32.mrb[0].mxu0
    %v2797 = vadd.f32 0.0, %v2796
    %v2798 = vpop.f32.mrb[0].mxu0
    %2799 = vdwg.mxu0
    %2800 = vmatprep.subr.mxu0 0.0
    %2801 = vmatpush1.msra.mxu0 %v61
    %2802 = vmatprep.subr.mxu0 0.0
    %2803 = vmatpush1.msra.mxu0 %v62
    %2804 = vmatprep.subr.mxu0 0.0
    %2805 = vmatpush1.msra.mxu0 %v63
    %2806 = vmatprep.subr.mxu0 0.0
    %2807 = vmatpush1.msra.mxu0 %v64
    %2808 = vmatprep.subr.mxu0 0.0
    %2809 = vmatpush1.msra.mxu0 0.0
    %2810 = vmatprep.subr.mxu0 0.0
    %2811 = vmatpush1.msra.mxu0 0.0
    %2812 = vmatprep.subr.mxu0 0.0
    %2813 = vmatpush1.msra.mxu0 0.0
    %2814 = vmatprep.subr.mxu0 0.0
    %2815 = vmatpush1.msra.mxu0 0.0
    %2816 = vmatprep.subr.mxu0 0.0
    %2817 = vmatpush1.msra.mxu0 0.0
    %2818 = vmatprep.subr.mxu0 0.0
    %2819 = vmatpush1.msra.mxu0 0.0
    %2820 = vmatprep.subr.mxu0 0.0
    %2821 = vmatpush1.msra.mxu0 0.0
    %2822 = vmatprep.subr.mxu0 0.0
    %2823 = vmatpush1.msra.mxu0 0.0
    %2824 = vmatprep.subr.mxu0 0.0
    %2825 = vmatpush1.msra.mxu0 0.0
    %2826 = vmatprep.subr.mxu0 0.0
    %2827 = vmatpush1.msra.mxu0 0.0
    %2828 = vmatprep.subr.mxu0 0.0
    %2829 = vmatpush1.msra.mxu0 0.0
    %2830 = vmatprep.subr.mxu0 0.0
    %2831 = vmatpush1.msra.mxu0 0.0
    %2832 = vmatprep.subr.mxu0 0.0
    %2833 = vmatpush1.msra.mxu0 0.0
    %2834 = vmatprep.subr.mxu0 0.0
    %2835 = vmatpush1.msra.mxu0 0.0
    %2836 = vmatprep.subr.mxu0 0.0
    %2837 = vmatpush1.msra.mxu0 0.0
    %2838 = vmatprep.subr.mxu0 0.0
    %2839 = vmatpush1.msra.mxu0 0.0
    %2840 = vmatprep.subr.mxu0 0.0
    %2841 = vmatpush1.msra.mxu0 0.0
    %2842 = vmatprep.subr.mxu0 0.0
    %2843 = vmatpush1.msra.mxu0 0.0
    %2844 = vmatprep.subr.mxu0 0.0
    %2845 = vmatpush1.msra.mxu0 0.0
    %2846 = vmatprep.subr.mxu0 0.0
    %2847 = vmatpush1.msra.mxu0 0.0
    %2848 = vmatprep.subr.mxu0 0.0
    %2849 = vmatpush1.msra.mxu0 0.0
    %2850 = vmatprep.subr.mxu0 0.0
    %2851 = vmatpush1.msra.mxu0 0.0
    %2852 = vmatprep.subr.mxu0 0.0
    %2853 = vmatpush1.msra.mxu0 0.0
    %2854 = vmatprep.subr.mxu0 0.0
    %2855 = vmatpush1.msra.mxu0 0.0
    %2856 = vmatprep.subr.mxu0 0.0
    %2857 = vmatpush1.msra.mxu0 0.0
    %2858 = vmatprep.subr.mxu0 0.0
    %2859 = vmatpush1.msra.mxu0 0.0
    %2860 = vmatprep.subr.mxu0 0.0
    %2861 = vmatpush1.msra.mxu0 0.0
    %2862 = vmatprep.subr.mxu0 0.0
    %2863 = vmatpush1.msra.mxu0 0.0
    %2864 = vmatprep.mubr.f32.mxu0 0.0
    %2865 = vmatmul.mubr.f32.gmra.mrb[0].mxu0 %v2728
    %v2866 = vpop.f32.mrb[0].mxu0
    %v2867 = vadd.f32 0.0, %v2866
    %v2868 = vpop.f32.mrb[0].mxu0
    %2869 = vdwg.mxu0
    %2870 = vmatprep.subr.mxu0 0.0
    %2871 = vmatpush1.msra.mxu0 %v65
    %2872 = vmatprep.subr.mxu0 0.0
    %2873 = vmatpush1.msra.mxu0 %v66
    %2874 = vmatprep.subr.mxu0 0.0
    %2875 = vmatpush1.msra.mxu0 %v67
    %2876 = vmatprep.subr.mxu0 0.0
    %2877 = vmatpush1.msra.mxu0 %v68
    %2878 = vmatprep.subr.mxu0 0.0
    %2879 = vmatpush1.msra.mxu0 0.0
    %2880 = vmatprep.subr.mxu0 0.0
    %2881 = vmatpush1.msra.mxu0 0.0
    %2882 = vmatprep.subr.mxu0 0.0
    %2883 = vmatpush1.msra.mxu0 0.0
    %2884 = vmatprep.subr.mxu0 0.0
    %2885 = vmatpush1.msra.mxu0 0.0
    %2886 = vmatprep.subr.mxu0 0.0
    %2887 = vmatpush1.msra.mxu0 0.0
    %2888 = vmatprep.subr.mxu0 0.0
    %2889 = vmatpush1.msra.mxu0 0.0
    %2890 = vmatprep.subr.mxu0 0.0
    %2891 = vmatpush1.msra.mxu0 0.0
    %2892 = vmatprep.subr.mxu0 0.0
    %2893 = vmatpush1.msra.mxu0 0.0
    %2894 = vmatprep.subr.mxu0 0.0
    %2895 = vmatpush1.msra.mxu0 0.0
    %2896 = vmatprep.subr.mxu0 0.0
    %2897 = vmatpush1.msra.mxu0 0.0
    %2898 = vmatprep.subr.mxu0 0.0
    %2899 = vmatpush1.msra.mxu0 0.0
    %2900 = vmatprep.subr.mxu0 0.0
    %2901 = vmatpush1.msra.mxu0 0.0
    %2902 = vmatprep.subr.mxu0 0.0
    %2903 = vmatpush1.msra.mxu0 0.0
    %2904 = vmatprep.subr.mxu0 0.0
    %2905 = vmatpush1.msra.mxu0 0.0
    %2906 = vmatprep.subr.mxu0 0.0
    %2907 = vmatpush1.msra.mxu0 0.0
    %2908 = vmatprep.subr.mxu0 0.0
    %2909 = vmatpush1.msra.mxu0 0.0
    %2910 = vmatprep.subr.mxu0 0.0
    %2911 = vmatpush1.msra.mxu0 0.0
    %2912 = vmatprep.subr.mxu0 0.0
    %2913 = vmatpush1.msra.mxu0 0.0
    %2914 = vmatprep.subr.mxu0 0.0
    %2915 = vmatpush1.msra.mxu0 0.0
    %2916 = vmatprep.subr.mxu0 0.0
    %2917 = vmatpush1.msra.mxu0 0.0
    %2918 = vmatprep.subr.mxu0 0.0
    %2919 = vmatpush1.msra.mxu0 0.0
    %2920 = vmatprep.subr.mxu0 0.0
    %2921 = vmatpush1.msra.mxu0 0.0
    %2922 = vmatprep.subr.mxu0 0.0
    %2923 = vmatpush1.msra.mxu0 0.0
    %2924 = vmatprep.subr.mxu0 0.0
    %2925 = vmatpush1.msra.mxu0 0.0
    %2926 = vmatprep.subr.mxu0 0.0
    %2927 = vmatpush1.msra.mxu0 0.0
    %2928 = vmatprep.subr.mxu0 0.0
    %2929 = vmatpush1.msra.mxu0 0.0
    %2930 = vmatprep.subr.mxu0 0.0
    %2931 = vmatpush1.msra.mxu0 0.0
    %2932 = vmatprep.subr.mxu0 0.0
    %2933 = vmatpush1.msra.mxu0 0.0
    %2934 = vmatprep.mubr.f32.mxu0 0.0
    %2935 = vmatmul.mubr.f32.gmra.mrb[0].mxu0 %v2728
    %v2936 = vpop.f32.mrb[0].mxu0
    %v2937 = vadd.f32 0.0, %v2936
    %v2938 = vpop.f32.mrb[0].mxu0
    %2939 = vdwg.mxu0
    %2940 = vmatprep.subr.mxu0 0.0
    %2941 = vmatpush1.msra.mxu0 %v69
    %2942 = vmatprep.subr.mxu0 0.0
    %2943 = vmatpush1.msra.mxu0 %v70
    %2944 = vmatprep.subr.mxu0 0.0
    %2945 = vmatpush1.msra.mxu0 %v71
    %2946 = vmatprep.subr.mxu0 0.0
    %2947 = vmatpush1.msra.mxu0 %v72
    %2948 = vmatprep.subr.mxu0 0.0
    %2949 = vmatpush1.msra.mxu0 0.0
    %2950 = vmatprep.subr.mxu0 0.0
    %2951 = vmatpush1.msra.mxu0 0.0
    %2952 = vmatprep.subr.mxu0 0.0
    %2953 = vmatpush1.msra.mxu0 0.0
    %2954 = vmatprep.subr.mxu0 0.0
    %2955 = vmatpush1.msra.mxu0 0.0
    %2956 = vmatprep.subr.mxu0 0.0
    %2957 = vmatpush1.msra.mxu0 0.0
    %2958 = vmatprep.subr.mxu0 0.0
    %2959 = vmatpush1.msra.mxu0 0.0
    %2960 = vmatprep.subr.mxu0 0.0
    %2961 = vmatpush1.msra.mxu0 0.0
    %2962 = vmatprep.subr.mxu0 0.0
    %2963 = vmatpush1.msra.mxu0 0.0
    %2964 = vmatprep.subr.mxu0 0.0
    %2965 = vmatpush1.msra.mxu0 0.0
    %2966 = vmatprep.subr.mxu0 0.0
    %2967 = vmatpush1.msra.mxu0 0.0
    %2968 = vmatprep.subr.mxu0 0.0
    %2969 = vmatpush1.msra.mxu0 0.0
    %2970 = vmatprep.subr.mxu0 0.0
    %2971 = vmatpush1.msra.mxu0 0.0
    %2972 = vmatprep.subr.mxu0 0.0
    %2973 = vmatpush1.msra.mxu0 0.0
    %2974 = vmatprep.subr.mxu0 0.0
    %2975 = vmatpush1.msra.mxu0 0.0
    %2976 = vmatprep.subr.mxu0 0.0
    %2977 = vmatpush1.msra.mxu0 0.0
    %2978 = vmatprep.subr.mxu0 0.0
    %2979 = vmatpush1.msra.mxu0 0.0
    %2980 = vmatprep.subr.mxu0 0.0
    %2981 = vmatpush1.msra.mxu0 0.0
    %2982 = vmatprep.subr.mxu0 0.0
    %2983 = vmatpush1.msra.mxu0 0.0
    %2984 = vmatprep.subr.mxu0 0.0
    %2985 = vmatpush1.msra.mxu0 0.0
    %2986 = vmatprep.subr.mxu0 0.0
    %2987 = vmatpush1.msra.mxu0 0.0
    %2988 = vmatprep.subr.mxu0 0.0
    %2989 = vmatpush1.msra.mxu0 0.0
    %2990 = vmatprep.subr.mxu0 0.0
    %2991 = vmatpush1.msra.mxu0 0.0
    %2992 = vmatprep.subr.mxu0 0.0
    %2993 = vmatpush1.msra.mxu0 0.0
    %2994 = vmatprep.subr.mxu0 0.0
    %2995 = vmatpush1.msra.mxu0 0.0
    %2996 = vmatprep.subr.mxu0 0.0
    %2997 = vmatpush1.msra.mxu0 0.0
    %2998 = vmatprep.subr.mxu0 0.0
    %2999 = vmatpush1.msra.mxu0 0.0
    %3000 = vmatprep.subr.mxu0 0.0
    %3001 = vmatpush1.msra.mxu0 0.0
    %3002 = vmatprep.subr.mxu0 0.0
    %3003 = vmatpush1.msra.mxu0 0.0
    %3004 = vmatprep.mubr.f32.mxu0 0.0
    %3005 = vmatmul.mubr.f32.gmra.mrb[0].mxu0 %v2728
    %v3006 = vpop.f32.mrb[0].mxu0
    %v3007 = vadd.f32 0.0, %v3006
    %v3008 = vpop.f32.mrb[0].mxu0
    %3009 = vdwg.mxu0
    %3010 = vmatprep.subr.mxu0 0.0
    %3011 = vmatpush1.msra.mxu0 %v73
    %3012 = vmatprep.subr.mxu0 0.0
    %3013 = vmatpush1.msra.mxu0 %v74
    %3014 = vmatprep.subr.mxu0 0.0
    %3015 = vmatpush1.msra.mxu0 %v75
    %3016 = vmatprep.subr.mxu0 0.0
    %3017 = vmatpush1.msra.mxu0 %v76
    %3018 = vmatprep.subr.mxu0 0.0
    %3019 = vmatpush1.msra.mxu0 0.0
    %3020 = vmatprep.subr.mxu0 0.0
    %3021 = vmatpush1.msra.mxu0 0.0
    %3022 = vmatprep.subr.mxu0 0.0
    %3023 = vmatpush1.msra.mxu0 0.0
    %3024 = vmatprep.subr.mxu0 0.0
    %3025 = vmatpush1.msra.mxu0 0.0
    %3026 = vmatprep.subr.mxu0 0.0
    %3027 = vmatpush1.msra.mxu0 0.0
    %3028 = vmatprep.subr.mxu0 0.0
    %3029 = vmatpush1.msra.mxu0 0.0
    %3030 = vmatprep.subr.mxu0 0.0
    %3031 = vmatpush1.msra.mxu0 0.0
    %3032 = vmatprep.subr.mxu0 0.0
    %3033 = vmatpush1.msra.mxu0 0.0
    %3034 = vmatprep.subr.mxu0 0.0
    %3035 = vmatpush1.msra.mxu0 0.0
    %3036 = vmatprep.subr.mxu0 0.0
    %3037 = vmatpush1.msra.mxu0 0.0
    %3038 = vmatprep.subr.mxu0 0.0
    %3039 = vmatpush1.msra.mxu0 0.0
    %3040 = vmatprep.subr.mxu0 0.0
    %3041 = vmatpush1.msra.mxu0 0.0
    %3042 = vmatprep.subr.mxu0 0.0
    %3043 = vmatpush1.msra.mxu0 0.0
    %3044 = vmatprep.subr.mxu0 0.0
    %3045 = vmatpush1.msra.mxu0 0.0
    %3046 = vmatprep.subr.mxu0 0.0
    %3047 = vmatpush1.msra.mxu0 0.0
    %3048 = vmatprep.subr.mxu0 0.0
    %3049 = vmatpush1.msra.mxu0 0.0
    %3050 = vmatprep.subr.mxu0 0.0
    %3051 = vmatpush1.msra.mxu0 0.0
    %3052 = vmatprep.subr.mxu0 0.0
    %3053 = vmatpush1.msra.mxu0 0.0
    %3054 = vmatprep.subr.mxu0 0.0
    %3055 = vmatpush1.msra.mxu0 0.0
    %3056 = vmatprep.subr.mxu0 0.0
    %3057 = vmatpush1.msra.mxu0 0.0
    %3058 = vmatprep.subr.mxu0 0.0
    %3059 = vmatpush1.msra.mxu0 0.0
    %3060 = vmatprep.subr.mxu0 0.0
    %3061 = vmatpush1.msra.mxu0 0.0
    %3062 = vmatprep.subr.mxu0 0.0
    %3063 = vmatpush1.msra.mxu0 0.0
    %3064 = vmatprep.subr.mxu0 0.0
    %3065 = vmatpush1.msra.mxu0 0.0
    %3066 = vmatprep.subr.mxu0 0.0
    %3067 = vmatpush1.msra.mxu0 0.0
    %3068 = vmatprep.subr.mxu0 0.0
    %3069 = vmatpush1.msra.mxu0 0.0
    %3070 = vmatprep.subr.mxu0 0.0
    %3071 = vmatpush1.msra.mxu0 0.0
    %3072 = vmatprep.subr.mxu0 0.0
    %3073 = vmatpush1.msra.mxu0 0.0
    %3074 = vmatprep.mubr.f32.mxu0 0.0
    %3075 = vmatmul.mubr.f32.gmra.mrb[0].mxu0 %v2728
    %v3076 = vpop.f32.mrb[0].mxu0
    %v3077 = vadd.f32 0.0, %v3076
    %v3078 = vpop.f32.mrb[0].mxu0
    %3079 = vdwg.mxu0
    %3080 = vmatprep.subr.mxu0 0.0
    %3081 = vmatpush1.msra.mxu0 %v77
    %3082 = vmatprep.subr.mxu0 0.0
    %3083 = vmatpush1.msra.mxu0 %v78
    %3084 = vmatprep.subr.mxu0 0.0
    %3085 = vmatpush1.msra.mxu0 %v79
    %3086 = vmatprep.subr.mxu0 0.0
    %3087 = vmatpush1.msra.mxu0 %v80
    %3088 = vmatprep.subr.mxu0 0.0
    %3089 = vmatpush1.msra.mxu0 0.0
    %3090 = vmatprep.subr.mxu0 0.0
    %3091 = vmatpush1.msra.mxu0 0.0
    %3092 = vmatprep.subr.mxu0 0.0
    %3093 = vmatpush1.msra.mxu0 0.0
    %3094 = vmatprep.subr.mxu0 0.0
    %3095 = vmatpush1.msra.mxu0 0.0
    %3096 = vmatprep.subr.mxu0 0.0
    %3097 = vmatpush1.msra.mxu0 0.0
    %3098 = vmatprep.subr.mxu0 0.0
    %3099 = vmatpush1.msra.mxu0 0.0
    %3100 = vmatprep.subr.mxu0 0.0
    %3101 = vmatpush1.msra.mxu0 0.0
    %3102 = vmatprep.subr.mxu0 0.0
    %3103 = vmatpush1.msra.mxu0 0.0
    %3104 = vmatprep.subr.mxu0 0.0
    %3105 = vmatpush1.msra.mxu0 0.0
    %3106 = vmatprep.subr.mxu0 0.0
    %3107 = vmatpush1.msra.mxu0 0.0
    %3108 = vmatprep.subr.mxu0 0.0
    %3109 = vmatpush1.msra.mxu0 0.0
    %3110 = vmatprep.subr.mxu0 0.0
    %3111 = vmatpush1.msra.mxu0 0.0
    %3112 = vmatprep.subr.mxu0 0.0
    %3113 = vmatpush1.msra.mxu0 0.0
    %3114 = vmatprep.subr.mxu0 0.0
    %3115 = vmatpush1.msra.mxu0 0.0
    %3116 = vmatprep.subr.mxu0 0.0
    %3117 = vmatpush1.msra.mxu0 0.0
    %3118 = vmatprep.subr.mxu0 0.0
    %3119 = vmatpush1.msra.mxu0 0.0
    %3120 = vmatprep.subr.mxu0 0.0
    %3121 = vmatpush1.msra.mxu0 0.0
    %3122 = vmatprep.subr.mxu0 0.0
    %3123 = vmatpush1.msra.mxu0 0.0
    %3124 = vmatprep.subr.mxu0 0.0
    %3125 = vmatpush1.msra.mxu0 0.0
    %3126 = vmatprep.subr.mxu0 0.0
    %3127 = vmatpush1.msra.mxu0 0.0
    %3128 = vmatprep.subr.mxu0 0.0
    %3129 = vmatpush1.msra.mxu0 0.0
    %3130 = vmatprep.subr.mxu0 0.0
    %3131 = vmatpush1.msra.mxu0 0.0
    %3132 = vmatprep.subr.mxu0 0.0
    %3133 = vmatpush1.msra.mxu0 0.0
    %3134 = vmatprep.subr.mxu0 0.0
    %3135 = vmatpush1.msra.mxu0 0.0
    %3136 = vmatprep.subr.mxu0 0.0
    %3137 = vmatpush1.msra.mxu0 0.0
    %3138 = vmatprep.subr.mxu0 0.0
    %3139 = vmatpush1.msra.mxu0 0.0
    %3140 = vmatprep.subr.mxu0 0.0
    %3141 = vmatpush1.msra.mxu0 0.0
    %3142 = vmatprep.subr.mxu0 0.0
    %3143 = vmatpush1.msra.mxu0 0.0
    %3144 = vmatprep.mubr.f32.mxu0 0.0
    %3145 = vmatmul.mubr.f32.gmra.mrb[0].mxu0 %v2728
    %v3146 = vpop.f32.mrb[0].mxu0
    %v3147 = vadd.f32 0.0, %v3146
    %v3148 = vpop.f32.mrb[0].mxu0
    %3149 = vdwg.mxu0
    %3150 = vmatprep.subr.mxu0 0.0
    %3151 = vmatpush1.msra.mxu0 %v81
    %3152 = vmatprep.subr.mxu0 0.0
    %3153 = vmatpush1.msra.mxu0 %v82
    %3154 = vmatprep.subr.mxu0 0.0
    %3155 = vmatpush1.msra.mxu0 %v83
    %3156 = vmatprep.subr.mxu0 0.0
    %3157 = vmatpush1.msra.mxu0 %v84
    %3158 = vmatprep.subr.mxu0 0.0
    %3159 = vmatpush1.msra.mxu0 0.0
    %3160 = vmatprep.subr.mxu0 0.0
    %3161 = vmatpush1.msra.mxu0 0.0
    %3162 = vmatprep.subr.mxu0 0.0
    %3163 = vmatpush1.msra.mxu0 0.0
    %3164 = vmatprep.subr.mxu0 0.0
    %3165 = vmatpush1.msra.mxu0 0.0
    %3166 = vmatprep.subr.mxu0 0.0
    %3167 = vmatpush1.msra.mxu0 0.0
    %3168 = vmatprep.subr.mxu0 0.0
    %3169 = vmatpush1.msra.mxu0 0.0
    %3170 = vmatprep.subr.mxu0 0.0
    %3171 = vmatpush1.msra.mxu0 0.0
    %3172 = vmatprep.subr.mxu0 0.0
    %3173 = vmatpush1.msra.mxu0 0.0
    %3174 = vmatprep.subr.mxu0 0.0
    %3175 = vmatpush1.msra.mxu0 0.0
    %3176 = vmatprep.subr.mxu0 0.0
    %3177 = vmatpush1.msra.mxu0 0.0
    %3178 = vmatprep.subr.mxu0 0.0
    %3179 = vmatpush1.msra.mxu0 0.0
    %3180 = vmatprep.subr.mxu0 0.0
    %3181 = vmatpush1.msra.mxu0 0.0
    %3182 = vmatprep.subr.mxu0 0.0
    %3183 = vmatpush1.msra.mxu0 0.0
    %3184 = vmatprep.subr.mxu0 0.0
    %3185 = vmatpush1.msra.mxu0 0.0
    %3186 = vmatprep.subr.mxu0 0.0
    %3187 = vmatpush1.msra.mxu0 0.0
    %3188 = vmatprep.subr.mxu0 0.0
    %3189 = vmatpush1.msra.mxu0 0.0
    %3190 = vmatprep.subr.mxu0 0.0
    %3191 = vmatpush1.msra.mxu0 0.0
    %3192 = vmatprep.subr.mxu0 0.0
    %3193 = vmatpush1.msra.mxu0 0.0
    %3194 = vmatprep.subr.mxu0 0.0
    %3195 = vmatpush1.msra.mxu0 0.0
    %3196 = vmatprep.subr.mxu0 0.0
    %3197 = vmatpush1.msra.mxu0 0.0
    %3198 = vmatprep.subr.mxu0 0.0
    %3199 = vmatpush1.msra.mxu0 0.0
    %3200 = vmatprep.subr.mxu0 0.0
    %3201 = vmatpush1.msra.mxu0 0.0
    %3202 = vmatprep.subr.mxu0 0.0
    %3203 = vmatpush1.msra.mxu0 0.0
    %3204 = vmatprep.subr.mxu0 0.0
    %3205 = vmatpush1.msra.mxu0 0.0
    %3206 = vmatprep.subr.mxu0 0.0
    %3207 = vmatpush1.msra.mxu0 0.0
    %3208 = vmatprep.subr.mxu0 0.0
    %3209 = vmatpush1.msra.mxu0 0.0
    %3210 = vmatprep.subr.mxu0 0.0
    %3211 = vmatpush1.msra.mxu0 0.0
    %3212 = vmatprep.subr.mxu0 0.0
    %3213 = vmatpush1.msra.mxu0 0.0
    %3214 = vmatprep.mubr.f32.mxu0 0.0
    %3215 = vmatmul.mubr.f32.gmra.mrb[0].mxu0 %v2728
    %v3216 = vpop.f32.mrb[0].mxu0
    %v3217 = vadd.f32 0.0, %v3216
    %v3218 = vpop.f32.mrb[0].mxu0
    %3219 = vdwg.mxu0
    %3220 = vmatprep.subr.mxu0 0.0
    %3221 = vmatpush1.msra.mxu0 %v85
    %3222 = vmatprep.subr.mxu0 0.0
    %3223 = vmatpush1.msra.mxu0 %v86
    %3224 = vmatprep.subr.mxu0 0.0
    %3225 = vmatpush1.msra.mxu0 %v87
    %3226 = vmatprep.subr.mxu0 0.0
    %3227 = vmatpush1.msra.mxu0 %v88
    %3228 = vmatprep.subr.mxu0 0.0
    %3229 = vmatpush1.msra.mxu0 0.0
    %3230 = vmatprep.subr.mxu0 0.0
    %3231 = vmatpush1.msra.mxu0 0.0
    %3232 = vmatprep.subr.mxu0 0.0
    %3233 = vmatpush1.msra.mxu0 0.0
    %3234 = vmatprep.subr.mxu0 0.0
    %3235 = vmatpush1.msra.mxu0 0.0
    %3236 = vmatprep.subr.mxu0 0.0
    %3237 = vmatpush1.msra.mxu0 0.0
    %3238 = vmatprep.subr.mxu0 0.0
    %3239 = vmatpush1.msra.mxu0 0.0
    %3240 = vmatprep.subr.mxu0 0.0
    %3241 = vmatpush1.msra.mxu0 0.0
    %3242 = vmatprep.subr.mxu0 0.0
    %3243 = vmatpush1.msra.mxu0 0.0
    %3244 = vmatprep.subr.mxu0 0.0
    %3245 = vmatpush1.msra.mxu0 0.0
    %3246 = vmatprep.subr.mxu0 0.0
    %3247 = vmatpush1.msra.mxu0 0.0
    %3248 = vmatprep.subr.mxu0 0.0
    %3249 = vmatpush1.msra.mxu0 0.0
    %3250 = vmatprep.subr.mxu0 0.0
    %3251 = vmatpush1.msra.mxu0 0.0
    %3252 = vmatprep.subr.mxu0 0.0
    %3253 = vmatpush1.msra.mxu0 0.0
    %3254 = vmatprep.subr.mxu0 0.0
    %3255 = vmatpush1.msra.mxu0 0.0
    %3256 = vmatprep.subr.mxu0 0.0
    %3257 = vmatpush1.msra.mxu0 0.0
    %3258 = vmatprep.subr.mxu0 0.0
    %3259 = vmatpush1.msra.mxu0 0.0
    %3260 = vmatprep.subr.mxu0 0.0
    %3261 = vmatpush1.msra.mxu0 0.0
    %3262 = vmatprep.subr.mxu0 0.0
    %3263 = vmatpush1.msra.mxu0 0.0
    %3264 = vmatprep.subr.mxu0 0.0
    %3265 = vmatpush1.msra.mxu0 0.0
    %3266 = vmatprep.subr.mxu0 0.0
    %3267 = vmatpush1.msra.mxu0 0.0
    %3268 = vmatprep.subr.mxu0 0.0
    %3269 = vmatpush1.msra.mxu0 0.0
    %3270 = vmatprep.subr.mxu0 0.0
    %3271 = vmatpush1.msra.mxu0 0.0
    %3272 = vmatprep.subr.mxu0 0.0
    %3273 = vmatpush1.msra.mxu0 0.0
    %3274 = vmatprep.subr.mxu0 0.0
    %3275 = vmatpush1.msra.mxu0 0.0
    %3276 = vmatprep.subr.mxu0 0.0
    %3277 = vmatpush1.msra.mxu0 0.0
    %3278 = vmatprep.subr.mxu0 0.0
    %3279 = vmatpush1.msra.mxu0 0.0
    %3280 = vmatprep.subr.mxu0 0.0
    %3281 = vmatpush1.msra.mxu0 0.0
    %3282 = vmatprep.subr.mxu0 0.0
    %3283 = vmatpush1.msra.mxu0 0.0
    %3284 = vmatprep.mubr.f32.mxu0 0.0
    %3285 = vmatmul.mubr.f32.gmra.mrb[0].mxu0 %v2728
    %v3286 = vpop.f32.mrb[0].mxu0
    %v3287 = vadd.f32 0.0, %v3286
    %v3288 = vpop.f32.mrb[0].mxu0
    %3289 = vdwg.mxu0
    %v3291 = vsel %vm1286, %v2374, 0
    %v3294 = vsel %vm1286, %v2379, 0
    %v3297 = vsel %vm1286, %v2384, 0
    %v3300 = vsel %vm1286, %v2389, 0
    %v3303 = vsel %vm1286, %v2394, 0
    %v3306 = vsel %vm1286, %v2399, 0
    %v3309 = vsel %vm1286, %v2404, 0
    %v3312 = vsel %vm1286, %v2409, 0
    %v3315 = vsel %vm1286, %v2797, 0
    %3317 = vmatprep.subr.mxu0 0.0
    %3318 = vmatpush1.xpose.msra.mxu0 %v3315
    %3319 = vmatprep.subr.mxu0 0.0
    %3320 = vmatpush1.xpose.msra.mxu0 0.0
    %3321 = vmatprep.subr.mxu0 0.0
    %3322 = vmatpush1.xpose.msra.mxu0 0.0
    %3323 = vmatprep.subr.mxu0 0.0
    %3324 = vmatpush1.xpose.msra.mxu0 0.0
    %3325 = vmatprep.subr.mxu0 0.0
    %3326 = vmatpush1.xpose.msra.mxu0 0.0
    %3327 = vmatprep.subr.mxu0 0.0
    %3328 = vmatpush1.xpose.msra.mxu0 0.0
    %3329 = vmatprep.subr.mxu0 0.0
    %3330 = vmatpush1.xpose.msra.mxu0 0.0
    %3331 = vmatprep.subr.mxu0 0.0
    %3332 = vmatpush1.xpose.msra.mxu0 0.0
    %3333 = vmatprep.subr.mxu0 0.0
    %3334 = vmatpush1.xpose.msra.mxu0 0.0
    %3335 = vmatprep.subr.mxu0 0.0
    %3336 = vmatpush1.xpose.msra.mxu0 0.0
    %3337 = vmatprep.subr.mxu0 0.0
    %3338 = vmatpush1.xpose.msra.mxu0 0.0
    %3339 = vmatprep.subr.mxu0 0.0
    %3340 = vmatpush1.xpose.msra.mxu0 0.0
    %3341 = vmatprep.subr.mxu0 0.0
    %3342 = vmatpush1.xpose.msra.mxu0 0.0
    %3343 = vmatprep.subr.mxu0 0.0
    %3344 = vmatpush1.xpose.msra.mxu0 0.0
    %3345 = vmatprep.subr.mxu0 0.0
    %3346 = vmatpush1.xpose.msra.mxu0 0.0
    %3347 = vmatprep.subr.mxu0 0.0
    %3348 = vmatpush1.xpose.msra.mxu0 0.0
    %3349 = vmatprep.subr.mxu0 0.0
    %3350 = vmatpush1.xpose.msra.mxu0 0.0
    %3351 = vmatprep.subr.mxu0 0.0
    %3352 = vmatpush1.xpose.msra.mxu0 0.0
    %3353 = vmatprep.subr.mxu0 0.0
    %3354 = vmatpush1.xpose.msra.mxu0 0.0
    %3355 = vmatprep.subr.mxu0 0.0
    %3356 = vmatpush1.xpose.msra.mxu0 0.0
    %3357 = vmatprep.subr.mxu0 0.0
    %3358 = vmatpush1.xpose.msra.mxu0 0.0
    %3359 = vmatprep.subr.mxu0 0.0
    %3360 = vmatpush1.xpose.msra.mxu0 0.0
    %3361 = vmatprep.subr.mxu0 0.0
    %3362 = vmatpush1.xpose.msra.mxu0 0.0
    %3363 = vmatprep.subr.mxu0 0.0
    %3364 = vmatpush1.xpose.msra.mxu0 0.0
    %3365 = vmatprep.subr.mxu0 0.0
    %3366 = vmatpush1.xpose.msra.mxu0 0.0
    %3367 = vmatprep.subr.mxu0 0.0
    %3368 = vmatpush1.xpose.msra.mxu0 0.0
    %3369 = vmatprep.subr.mxu0 0.0
    %3370 = vmatpush1.xpose.msra.mxu0 0.0
    %3371 = vmatprep.subr.mxu0 0.0
    %3372 = vmatpush1.xpose.msra.mxu0 0.0
    %3373 = vmatprep.subr.mxu0 0.0
    %3374 = vmatpush1.xpose.msra.mxu0 0.0
    %3375 = vmatprep.subr.mxu0 0.0
    %3376 = vmatpush1.xpose.msra.mxu0 0.0
    %3377 = vmatprep.subr.mxu0 0.0
    %3378 = vmatpush1.xpose.msra.mxu0 0.0
    %3379 = vmatprep.subr.mxu0 0.0
    %3380 = vmatpush1.xpose.msra.mxu0 0.0
    %3381 = vmatprep.mubr.f32.mxu0 0.0
    %3382 = vmatmul.mubr.f32.gmra.mrb[0].mxu0 %v3291
    %v3383 = vpop.f32.mrb[0].mxu0
    %v3384 = vadd.f32 0.0, %v3383
    %v3385 = vpop.f32.mrb[0].mxu0
    %3386 = vmatprep.mubr.f32.mxu0 0.0
    %3387 = vmatmul.mubr.f32.gmra.mrb[0].mxu0 %v3294
    %v3388 = vpop.f32.mrb[0].mxu0
    %v3389 = vadd.f32 0.0, %v3388
    %v3390 = vpop.f32.mrb[0].mxu0
    %3391 = vmatprep.mubr.f32.mxu0 0.0
    %3392 = vmatmul.mubr.f32.gmra.mrb[0].mxu0 %v3297
    %v3393 = vpop.f32.mrb[0].mxu0
    %v3394 = vadd.f32 0.0, %v3393
    %v3395 = vpop.f32.mrb[0].mxu0
    %3396 = vmatprep.mubr.f32.mxu0 0.0
    %3397 = vmatmul.mubr.f32.gmra.mrb[0].mxu0 %v3300
    %v3398 = vpop.f32.mrb[0].mxu0
    %v3399 = vadd.f32 0.0, %v3398
    %v3400 = vpop.f32.mrb[0].mxu0
    %3401 = vmatprep.mubr.f32.mxu0 0.0
    %3402 = vmatmul.mubr.f32.gmra.mrb[0].mxu0 %v3303
    %v3403 = vpop.f32.mrb[0].mxu0
    %v3404 = vadd.f32 0.0, %v3403
    %v3405 = vpop.f32.mrb[0].mxu0
    %3406 = vmatprep.mubr.f32.mxu0 0.0
    %3407 = vmatmul.mubr.f32.gmra.mrb[0].mxu0 %v3306
    %v3408 = vpop.f32.mrb[0].mxu0
    %v3409 = vadd.f32 0.0, %v3408
    %v3410 = vpop.f32.mrb[0].mxu0
    %3411 = vmatprep.mubr.f32.mxu0 0.0
    %3412 = vmatmul.mubr.f32.gmra.mrb[0].mxu0 %v3309
    %v3413 = vpop.f32.mrb[0].mxu0
    %v3414 = vadd.f32 0.0, %v3413
    %v3415 = vpop.f32.mrb[0].mxu0
    %3416 = vmatprep.mubr.f32.mxu0 0.0
    %3417 = vmatmul.mubr.f32.gmra.mrb[0].mxu0 %v3312
    %v3418 = vpop.f32.mrb[0].mxu0
    %v3419 = vadd.f32 0.0, %v3418
    %v3420 = vpop.f32.mrb[0].mxu0
    %3421 = vdwg.mxu0
    %v3423 = vsel %vm1286, %v2479, 0
    %v3426 = vsel %vm1286, %v2484, 0
    %v3429 = vsel %vm1286, %v2489, 0
    %v3432 = vsel %vm1286, %v2494, 0
    %v3435 = vsel %vm1286, %v2499, 0
    %v3438 = vsel %vm1286, %v2504, 0
    %v3441 = vsel %vm1286, %v2509, 0
    %v3444 = vsel %vm1286, %v2514, 0
    %v3447 = vsel %vm1286, %v2867, 0
    %3449 = vmatprep.subr.mxu0 0.0
    %3450 = vmatpush1.xpose.msra.mxu0 %v3447
    %3451 = vmatprep.subr.mxu0 0.0
    %3452 = vmatpush1.xpose.msra.mxu0 0.0
    %3453 = vmatprep.subr.mxu0 0.0
    %3454 = vmatpush1.xpose.msra.mxu0 0.0
    %3455 = vmatprep.subr.mxu0 0.0
    %3456 = vmatpush1.xpose.msra.mxu0 0.0
    %3457 = vmatprep.subr.mxu0 0.0
    %3458 = vmatpush1.xpose.msra.mxu0 0.0
    %3459 = vmatprep.subr.mxu0 0.0
    %3460 = vmatpush1.xpose.msra.mxu0 0.0
    %3461 = vmatprep.subr.mxu0 0.0
    %3462 = vmatpush1.xpose.msra.mxu0 0.0
    %3463 = vmatprep.subr.mxu0 0.0
    %3464 = vmatpush1.xpose.msra.mxu0 0.0
    %3465 = vmatprep.subr.mxu0 0.0
    %3466 = vmatpush1.xpose.msra.mxu0 0.0
    %3467 = vmatprep.subr.mxu0 0.0
    %3468 = vmatpush1.xpose.msra.mxu0 0.0
    %3469 = vmatprep.subr.mxu0 0.0
    %3470 = vmatpush1.xpose.msra.mxu0 0.0
    %3471 = vmatprep.subr.mxu0 0.0
    %3472 = vmatpush1.xpose.msra.mxu0 0.0
    %3473 = vmatprep.subr.mxu0 0.0
    %3474 = vmatpush1.xpose.msra.mxu0 0.0
    %3475 = vmatprep.subr.mxu0 0.0
    %3476 = vmatpush1.xpose.msra.mxu0 0.0
    %3477 = vmatprep.subr.mxu0 0.0
    %3478 = vmatpush1.xpose.msra.mxu0 0.0
    %3479 = vmatprep.subr.mxu0 0.0
    %3480 = vmatpush1.xpose.msra.mxu0 0.0
    %3481 = vmatprep.subr.mxu0 0.0
    %3482 = vmatpush1.xpose.msra.mxu0 0.0
    %3483 = vmatprep.subr.mxu0 0.0
    %3484 = vmatpush1.xpose.msra.mxu0 0.0
    %3485 = vmatprep.subr.mxu0 0.0
    %3486 = vmatpush1.xpose.msra.mxu0 0.0
    %3487 = vmatprep.subr.mxu0 0.0
    %3488 = vmatpush1.xpose.msra.mxu0 0.0
    %3489 = vmatprep.subr.mxu0 0.0
    %3490 = vmatpush1.xpose.msra.mxu0 0.0
    %3491 = vmatprep.subr.mxu0 0.0
    %3492 = vmatpush1.xpose.msra.mxu0 0.0
    %3493 = vmatprep.subr.mxu0 0.0
    %3494 = vmatpush1.xpose.msra.mxu0 0.0
    %3495 = vmatprep.subr.mxu0 0.0
    %3496 = vmatpush1.xpose.msra.mxu0 0.0
    %3497 = vmatprep.subr.mxu0 0.0
    %3498 = vmatpush1.xpose.msra.mxu0 0.0
    %3499 = vmatprep.subr.mxu0 0.0
    %3500 = vmatpush1.xpose.msra.mxu0 0.0
    %3501 = vmatprep.subr.mxu0 0.0
    %3502 = vmatpush1.xpose.msra.mxu0 0.0
    %3503 = vmatprep.subr.mxu0 0.0
    %3504 = vmatpush1.xpose.msra.mxu0 0.0
    %3505 = vmatprep.subr.mxu0 0.0
    %3506 = vmatpush1.xpose.msra.mxu0 0.0
    %3507 = vmatprep.subr.mxu0 0.0
    %3508 = vmatpush1.xpose.msra.mxu0 0.0
    %3509 = vmatprep.subr.mxu0 0.0
    %3510 = vmatpush1.xpose.msra.mxu0 0.0
    %3511 = vmatprep.subr.mxu0 0.0
    %3512 = vmatpush1.xpose.msra.mxu0 0.0
    %3513 = vmatprep.mubr.f32.mxu0 0.0
    %3514 = vmatmul.mubr.f32.gmra.mrb[0].mxu0 %v3423
    %v3515 = vpop.f32.mrb[0].mxu0
    %v3516 = vadd.f32 0.0, %v3515
    %v3517 = vpop.f32.mrb[0].mxu0
    %3518 = vmatprep.mubr.f32.mxu0 0.0
    %3519 = vmatmul.mubr.f32.gmra.mrb[0].mxu0 %v3426
    %v3520 = vpop.f32.mrb[0].mxu0
    %v3521 = vadd.f32 0.0, %v3520
    %v3522 = vpop.f32.mrb[0].mxu0
    %3523 = vmatprep.mubr.f32.mxu0 0.0
    %3524 = vmatmul.mubr.f32.gmra.mrb[0].mxu0 %v3429
    %v3525 = vpop.f32.mrb[0].mxu0
    %v3526 = vadd.f32 0.0, %v3525
    %v3527 = vpop.f32.mrb[0].mxu0
    %3528 = vmatprep.mubr.f32.mxu0 0.0
    %3529 = vmatmul.mubr.f32.gmra.mrb[0].mxu0 %v3432
    %v3530 = vpop.f32.mrb[0].mxu0
    %v3531 = vadd.f32 0.0, %v3530
    %v3532 = vpop.f32.mrb[0].mxu0
    %3533 = vmatprep.mubr.f32.mxu0 0.0
    %3534 = vmatmul.mubr.f32.gmra.mrb[0].mxu0 %v3435
    %v3535 = vpop.f32.mrb[0].mxu0
    %v3536 = vadd.f32 0.0, %v3535
    %v3537 = vpop.f32.mrb[0].mxu0
    %3538 = vmatprep.mubr.f32.mxu0 0.0
    %3539 = vmatmul.mubr.f32.gmra.mrb[0].mxu0 %v3438
    %v3540 = vpop.f32.mrb[0].mxu0
    %v3541 = vadd.f32 0.0, %v3540
    %v3542 = vpop.f32.mrb[0].mxu0
    %3543 = vmatprep.mubr.f32.mxu0 0.0
    %3544 = vmatmul.mubr.f32.gmra.mrb[0].mxu0 %v3441
    %v3545 = vpop.f32.mrb[0].mxu0
    %v3546 = vadd.f32 0.0, %v3545
    %v3547 = vpop.f32.mrb[0].mxu0
    %3548 = vmatprep.mubr.f32.mxu0 0.0
    %3549 = vmatmul.mubr.f32.gmra.mrb[0].mxu0 %v3444
    %v3550 = vpop.f32.mrb[0].mxu0
    %v3551 = vadd.f32 0.0, %v3550
    %v3552 = vpop.f32.mrb[0].mxu0
    %3553 = vdwg.mxu0
    %v3555 = vsel %vm1286, %v2584, 0
    %v3558 = vsel %vm1286, %v2589, 0
    %v3561 = vsel %vm1286, %v2594, 0
    %v3564 = vsel %vm1286, %v2599, 0
    %v3567 = vsel %vm1286, %v2604, 0
    %v3570 = vsel %vm1286, %v2609, 0
    %v3573 = vsel %vm1286, %v2614, 0
    %v3576 = vsel %vm1286, %v2619, 0
    %v3579 = vsel %vm1286, %v2937, 0
    %3581 = vmatprep.subr.mxu0 0.0
    %3582 = vmatpush1.xpose.msra.mxu0 %v3579
    %3583 = vmatprep.subr.mxu0 0.0
    %3584 = vmatpush1.xpose.msra.mxu0 0.0
    %3585 = vmatprep.subr.mxu0 0.0
    %3586 = vmatpush1.xpose.msra.mxu0 0.0
    %3587 = vmatprep.subr.mxu0 0.0
    %3588 = vmatpush1.xpose.msra.mxu0 0.0
    %3589 = vmatprep.subr.mxu0 0.0
    %3590 = vmatpush1.xpose.msra.mxu0 0.0
    %3591 = vmatprep.subr.mxu0 0.0
    %3592 = vmatpush1.xpose.msra.mxu0 0.0
    %3593 = vmatprep.subr.mxu0 0.0
    %3594 = vmatpush1.xpose.msra.mxu0 0.0
    %3595 = vmatprep.subr.mxu0 0.0
    %3596 = vmatpush1.xpose.msra.mxu0 0.0
    %3597 = vmatprep.subr.mxu0 0.0
    %3598 = vmatpush1.xpose.msra.mxu0 0.0
    %3599 = vmatprep.subr.mxu0 0.0
    %3600 = vmatpush1.xpose.msra.mxu0 0.0
    %3601 = vmatprep.subr.mxu0 0.0
    %3602 = vmatpush1.xpose.msra.mxu0 0.0
    %3603 = vmatprep.subr.mxu0 0.0
    %3604 = vmatpush1.xpose.msra.mxu0 0.0
    %3605 = vmatprep.subr.mxu0 0.0
    %3606 = vmatpush1.xpose.msra.mxu0 0.0
    %3607 = vmatprep.subr.mxu0 0.0
    %3608 = vmatpush1.xpose.msra.mxu0 0.0
    %3609 = vmatprep.subr.mxu0 0.0
    %3610 = vmatpush1.xpose.msra.mxu0 0.0
    %3611 = vmatprep.subr.mxu0 0.0
    %3612 = vmatpush1.xpose.msra.mxu0 0.0
    %3613 = vmatprep.subr.mxu0 0.0
    %3614 = vmatpush1.xpose.msra.mxu0 0.0
    %3615 = vmatprep.subr.mxu0 0.0
    %3616 = vmatpush1.xpose.msra.mxu0 0.0
    %3617 = vmatprep.subr.mxu0 0.0
    %3618 = vmatpush1.xpose.msra.mxu0 0.0
    %3619 = vmatprep.subr.mxu0 0.0
    %3620 = vmatpush1.xpose.msra.mxu0 0.0
    %3621 = vmatprep.subr.mxu0 0.0
    %3622 = vmatpush1.xpose.msra.mxu0 0.0
    %3623 = vmatprep.subr.mxu0 0.0
    %3624 = vmatpush1.xpose.msra.mxu0 0.0
    %3625 = vmatprep.subr.mxu0 0.0
    %3626 = vmatpush1.xpose.msra.mxu0 0.0
    %3627 = vmatprep.subr.mxu0 0.0
    %3628 = vmatpush1.xpose.msra.mxu0 0.0
    %3629 = vmatprep.subr.mxu0 0.0
    %3630 = vmatpush1.xpose.msra.mxu0 0.0
    %3631 = vmatprep.subr.mxu0 0.0
    %3632 = vmatpush1.xpose.msra.mxu0 0.0
    %3633 = vmatprep.subr.mxu0 0.0
    %3634 = vmatpush1.xpose.msra.mxu0 0.0
    %3635 = vmatprep.subr.mxu0 0.0
    %3636 = vmatpush1.xpose.msra.mxu0 0.0
    %3637 = vmatprep.subr.mxu0 0.0
    %3638 = vmatpush1.xpose.msra.mxu0 0.0
    %3639 = vmatprep.subr.mxu0 0.0
    %3640 = vmatpush1.xpose.msra.mxu0 0.0
    %3641 = vmatprep.subr.mxu0 0.0
    %3642 = vmatpush1.xpose.msra.mxu0 0.0
    %3643 = vmatprep.subr.mxu0 0.0
    %3644 = vmatpush1.xpose.msra.mxu0 0.0
    %3645 = vmatprep.mubr.f32.mxu0 0.0
    %3646 = vmatmul.mubr.f32.gmra.mrb[0].mxu0 %v3555
    %v3647 = vpop.f32.mrb[0].mxu0
    %v3648 = vadd.f32 0.0, %v3647
    %v3649 = vpop.f32.mrb[0].mxu0
    %3650 = vmatprep.mubr.f32.mxu0 0.0
    %3651 = vmatmul.mubr.f32.gmra.mrb[0].mxu0 %v3558
    %v3652 = vpop.f32.mrb[0].mxu0
    %v3653 = vadd.f32 0.0, %v3652
    %v3654 = vpop.f32.mrb[0].mxu0
    %3655 = vmatprep.mubr.f32.mxu0 0.0
    %3656 = vmatmul.mubr.f32.gmra.mrb[0].mxu0 %v3561
    %v3657 = vpop.f32.mrb[0].mxu0
    %v3658 = vadd.f32 0.0, %v3657
    %v3659 = vpop.f32.mrb[0].mxu0
    %3660 = vmatprep.mubr.f32.mxu0 0.0
    %3661 = vmatmul.mubr.f32.gmra.mrb[0].mxu0 %v3564
    %v3662 = vpop.f32.mrb[0].mxu0
    %v3663 = vadd.f32 0.0, %v3662
    %v3664 = vpop.f32.mrb[0].mxu0
    %3665 = vmatprep.mubr.f32.mxu0 0.0
    %3666 = vmatmul.mubr.f32.gmra.mrb[0].mxu0 %v3567
    %v3667 = vpop.f32.mrb[0].mxu0
    %v3668 = vadd.f32 0.0, %v3667
    %v3669 = vpop.f32.mrb[0].mxu0
    %3670 = vmatprep.mubr.f32.mxu0 0.0
    %3671 = vmatmul.mubr.f32.gmra.mrb[0].mxu0 %v3570
    %v3672 = vpop.f32.mrb[0].mxu0
    %v3673 = vadd.f32 0.0, %v3672
    %v3674 = vpop.f32.mrb[0].mxu0
    %3675 = vmatprep.mubr.f32.mxu0 0.0
    %3676 = vmatmul.mubr.f32.gmra.mrb[0].mxu0 %v3573
    %v3677 = vpop.f32.mrb[0].mxu0
    %v3678 = vadd.f32 0.0, %v3677
    %v3679 = vpop.f32.mrb[0].mxu0
    %3680 = vmatprep.mubr.f32.mxu0 0.0
    %3681 = vmatmul.mubr.f32.gmra.mrb[0].mxu0 %v3576
    %v3682 = vpop.f32.mrb[0].mxu0
    %v3683 = vadd.f32 0.0, %v3682
    %v3684 = vpop.f32.mrb[0].mxu0
    %3685 = vdwg.mxu0
    %v3687 = vsel %vm1286, %v2689, 0
    %v3690 = vsel %vm1286, %v2694, 0
    %v3693 = vsel %vm1286, %v2699, 0
    %v3696 = vsel %vm1286, %v2704, 0
    %v3699 = vsel %vm1286, %v2709, 0
    %v3702 = vsel %vm1286, %v2714, 0
    %v3705 = vsel %vm1286, %v2719, 0
    %v3708 = vsel %vm1286, %v2724, 0
    %v3711 = vsel %vm1286, %v3007, 0
    %3713 = vmatprep.subr.mxu0 0.0
    %3714 = vmatpush1.xpose.msra.mxu0 %v3711
    %3715 = vmatprep.subr.mxu0 0.0
    %3716 = vmatpush1.xpose.msra.mxu0 0.0
    %3717 = vmatprep.subr.mxu0 0.0
    %3718 = vmatpush1.xpose.msra.mxu0 0.0
    %3719 = vmatprep.subr.mxu0 0.0
    %3720 = vmatpush1.xpose.msra.mxu0 0.0
    %3721 = vmatprep.subr.mxu0 0.0
    %3722 = vmatpush1.xpose.msra.mxu0 0.0
    %3723 = vmatprep.subr.mxu0 0.0
    %3724 = vmatpush1.xpose.msra.mxu0 0.0
    %3725 = vmatprep.subr.mxu0 0.0
    %3726 = vmatpush1.xpose.msra.mxu0 0.0
    %3727 = vmatprep.subr.mxu0 0.0
    %3728 = vmatpush1.xpose.msra.mxu0 0.0
    %3729 = vmatprep.subr.mxu0 0.0
    %3730 = vmatpush1.xpose.msra.mxu0 0.0
    %3731 = vmatprep.subr.mxu0 0.0
    %3732 = vmatpush1.xpose.msra.mxu0 0.0
    %3733 = vmatprep.subr.mxu0 0.0
    %3734 = vmatpush1.xpose.msra.mxu0 0.0
    %3735 = vmatprep.subr.mxu0 0.0
    %3736 = vmatpush1.xpose.msra.mxu0 0.0
    %3737 = vmatprep.subr.mxu0 0.0
    %3738 = vmatpush1.xpose.msra.mxu0 0.0
    %3739 = vmatprep.subr.mxu0 0.0
    %3740 = vmatpush1.xpose.msra.mxu0 0.0
    %3741 = vmatprep.subr.mxu0 0.0
    %3742 = vmatpush1.xpose.msra.mxu0 0.0
    %3743 = vmatprep.subr.mxu0 0.0
    %3744 = vmatpush1.xpose.msra.mxu0 0.0
    %3745 = vmatprep.subr.mxu0 0.0
    %3746 = vmatpush1.xpose.msra.mxu0 0.0
    %3747 = vmatprep.subr.mxu0 0.0
    %3748 = vmatpush1.xpose.msra.mxu0 0.0
    %3749 = vmatprep.subr.mxu0 0.0
    %3750 = vmatpush1.xpose.msra.mxu0 0.0
    %3751 = vmatprep.subr.mxu0 0.0
    %3752 = vmatpush1.xpose.msra.mxu0 0.0
    %3753 = vmatprep.subr.mxu0 0.0
    %3754 = vmatpush1.xpose.msra.mxu0 0.0
    %3755 = vmatprep.subr.mxu0 0.0
    %3756 = vmatpush1.xpose.msra.mxu0 0.0
    %3757 = vmatprep.subr.mxu0 0.0
    %3758 = vmatpush1.xpose.msra.mxu0 0.0
    %3759 = vmatprep.subr.mxu0 0.0
    %3760 = vmatpush1.xpose.msra.mxu0 0.0
    %3761 = vmatprep.subr.mxu0 0.0
    %3762 = vmatpush1.xpose.msra.mxu0 0.0
    %3763 = vmatprep.subr.mxu0 0.0
    %3764 = vmatpush1.xpose.msra.mxu0 0.0
    %3765 = vmatprep.subr.mxu0 0.0
    %3766 = vmatpush1.xpose.msra.mxu0 0.0
    %3767 = vmatprep.subr.mxu0 0.0
    %3768 = vmatpush1.xpose.msra.mxu0 0.0
    %3769 = vmatprep.subr.mxu0 0.0
    %3770 = vmatpush1.xpose.msra.mxu0 0.0
    %3771 = vmatprep.subr.mxu0 0.0
    %3772 = vmatpush1.xpose.msra.mxu0 0.0
    %3773 = vmatprep.subr.mxu0 0.0
    %3774 = vmatpush1.xpose.msra.mxu0 0.0
    %3775 = vmatprep.subr.mxu0 0.0
    %3776 = vmatpush1.xpose.msra.mxu0 0.0
    %3777 = vmatprep.mubr.f32.mxu0 0.0
    %3778 = vmatmul.mubr.f32.gmra.mrb[0].mxu0 %v3687
    %v3779 = vpop.f32.mrb[0].mxu0
    %v3780 = vadd.f32 0.0, %v3779
    %v3781 = vpop.f32.mrb[0].mxu0
    %3782 = vmatprep.mubr.f32.mxu0 0.0
    %3783 = vmatmul.mubr.f32.gmra.mrb[0].mxu0 %v3690
    %v3784 = vpop.f32.mrb[0].mxu0
    %v3785 = vadd.f32 0.0, %v3784
    %v3786 = vpop.f32.mrb[0].mxu0
    %3787 = vmatprep.mubr.f32.mxu0 0.0
    %3788 = vmatmul.mubr.f32.gmra.mrb[0].mxu0 %v3693
    %v3789 = vpop.f32.mrb[0].mxu0
    %v3790 = vadd.f32 0.0, %v3789
    %v3791 = vpop.f32.mrb[0].mxu0
    %3792 = vmatprep.mubr.f32.mxu0 0.0
    %3793 = vmatmul.mubr.f32.gmra.mrb[0].mxu0 %v3696
    %v3794 = vpop.f32.mrb[0].mxu0
    %v3795 = vadd.f32 0.0, %v3794
    %v3796 = vpop.f32.mrb[0].mxu0
    %3797 = vmatprep.mubr.f32.mxu0 0.0
    %3798 = vmatmul.mubr.f32.gmra.mrb[0].mxu0 %v3699
    %v3799 = vpop.f32.mrb[0].mxu0
    %v3800 = vadd.f32 0.0, %v3799
    %v3801 = vpop.f32.mrb[0].mxu0
    %3802 = vmatprep.mubr.f32.mxu0 0.0
    %3803 = vmatmul.mubr.f32.gmra.mrb[0].mxu0 %v3702
    %v3804 = vpop.f32.mrb[0].mxu0
    %v3805 = vadd.f32 0.0, %v3804
    %v3806 = vpop.f32.mrb[0].mxu0
    %3807 = vmatprep.mubr.f32.mxu0 0.0
    %3808 = vmatmul.mubr.f32.gmra.mrb[0].mxu0 %v3705
    %v3809 = vpop.f32.mrb[0].mxu0
    %v3810 = vadd.f32 0.0, %v3809
    %v3811 = vpop.f32.mrb[0].mxu0
    %3812 = vmatprep.mubr.f32.mxu0 0.0
    %3813 = vmatmul.mubr.f32.gmra.mrb[0].mxu0 %v3708
    %v3814 = vpop.f32.mrb[0].mxu0
    %v3815 = vadd.f32 0.0, %v3814
    %v3816 = vpop.f32.mrb[0].mxu0
    %3817 = vdwg.mxu0
    %v3818 = vsel %vm1286, %v3384, -inf
    %3819 = vmax.xlane.f32.xlu0 %v3818
    %v3820 = vpop.xlane.xlu0 %3819
    %v3821 = vsel %vm1286, %v3389, -inf
    %3822 = vmax.xlane.f32.xlu0 %v3821
    %v3823 = vpop.xlane.xlu0 %3822
    %v3824 = vsel %vm1286, %v3394, -inf
    %3825 = vmax.xlane.f32.xlu0 %v3824
    %v3826 = vpop.xlane.xlu0 %3825
    %v3827 = vsel %vm1286, %v3399, -inf
    %3828 = vmax.xlane.f32.xlu0 %v3827
    %v3829 = vpop.xlane.xlu0 %3828
    %v3830 = vsel %vm1286, %v3404, -inf
    %3831 = vmax.xlane.f32.xlu0 %v3830
    %v3832 = vpop.xlane.xlu0 %3831
    %v3833 = vsel %vm1286, %v3409, -inf
    %3834 = vmax.xlane.f32.xlu0 %v3833
    %v3835 = vpop.xlane.xlu0 %3834
    %v3836 = vsel %vm1286, %v3414, -inf
    %3837 = vmax.xlane.f32.xlu0 %v3836
    %v3838 = vpop.xlane.xlu0 %3837
    %v3839 = vsel %vm1286, %v3419, -inf
    %3840 = vmax.xlane.f32.xlu0 %v3839
    %v3841 = vpop.xlane.xlu0 %3840
    %v3842 = vsel %vm1286, %v3516, -inf
    %3843 = vmax.xlane.f32.xlu0 %v3842
    %v3844 = vpop.xlane.xlu0 %3843
    %v3845 = vsel %vm1286, %v3521, -inf
    %3846 = vmax.xlane.f32.xlu0 %v3845
    %v3847 = vpop.xlane.xlu0 %3846
    %v3848 = vsel %vm1286, %v3526, -inf
    %3849 = vmax.xlane.f32.xlu0 %v3848
    %v3850 = vpop.xlane.xlu0 %3849
    %v3851 = vsel %vm1286, %v3531, -inf
    %3852 = vmax.xlane.f32.xlu0 %v3851
    %v3853 = vpop.xlane.xlu0 %3852
    %v3854 = vsel %vm1286, %v3536, -inf
    %3855 = vmax.xlane.f32.xlu0 %v3854
    %v3856 = vpop.xlane.xlu0 %3855
    %v3857 = vsel %vm1286, %v3541, -inf
    %3858 = vmax.xlane.f32.xlu0 %v3857
    %v3859 = vpop.xlane.xlu0 %3858
    %v3860 = vsel %vm1286, %v3546, -inf
    %3861 = vmax.xlane.f32.xlu0 %v3860
    %v3862 = vpop.xlane.xlu0 %3861
    %v3863 = vsel %vm1286, %v3551, -inf
    %3864 = vmax.xlane.f32.xlu0 %v3863
    %v3865 = vpop.xlane.xlu0 %3864
    %v3866 = vsel %vm1286, %v3648, -inf
    %3867 = vmax.xlane.f32.xlu0 %v3866
    %v3868 = vpop.xlane.xlu0 %3867
    %v3869 = vsel %vm1286, %v3653, -inf
    %3870 = vmax.xlane.f32.xlu0 %v3869
    %v3871 = vpop.xlane.xlu0 %3870
    %v3872 = vsel %vm1286, %v3658, -inf
    %3873 = vmax.xlane.f32.xlu0 %v3872
    %v3874 = vpop.xlane.xlu0 %3873
    %v3875 = vsel %vm1286, %v3663, -inf
    %3876 = vmax.xlane.f32.xlu0 %v3875
    %v3877 = vpop.xlane.xlu0 %3876
    %v3878 = vsel %vm1286, %v3668, -inf
    %3879 = vmax.xlane.f32.xlu0 %v3878
    %v3880 = vpop.xlane.xlu0 %3879
    %v3881 = vsel %vm1286, %v3673, -inf
    %3882 = vmax.xlane.f32.xlu0 %v3881
    %v3883 = vpop.xlane.xlu0 %3882
    %v3884 = vsel %vm1286, %v3678, -inf
    %3885 = vmax.xlane.f32.xlu0 %v3884
    %v3886 = vpop.xlane.xlu0 %3885
    %v3887 = vsel %vm1286, %v3683, -inf
    %3888 = vmax.xlane.f32.xlu0 %v3887
    %v3889 = vpop.xlane.xlu0 %3888
    %v3890 = vsel %vm1286, %v3780, -inf
    %3891 = vmax.xlane.f32.xlu0 %v3890
    %v3892 = vpop.xlane.xlu0 %3891
    %v3893 = vsel %vm1286, %v3785, -inf
    %3894 = vmax.xlane.f32.xlu0 %v3893
    %v3895 = vpop.xlane.xlu0 %3894
    %v3896 = vsel %vm1286, %v3790, -inf
    %3897 = vmax.xlane.f32.xlu0 %v3896
    %v3898 = vpop.xlane.xlu0 %3897
    %v3899 = vsel %vm1286, %v3795, -inf
    %3900 = vmax.xlane.f32.xlu0 %v3899
    %v3901 = vpop.xlane.xlu0 %3900
    %v3902 = vsel %vm1286, %v3800, -inf
    %3903 = vmax.xlane.f32.xlu0 %v3902
    %v3904 = vpop.xlane.xlu0 %3903
    %v3905 = vsel %vm1286, %v3805, -inf
    %3906 = vmax.xlane.f32.xlu0 %v3905
    %v3907 = vpop.xlane.xlu0 %3906
    %v3908 = vsel %vm1286, %v3810, -inf
    %3909 = vmax.xlane.f32.xlu0 %v3908
    %v3910 = vpop.xlane.xlu0 %3909
    %v3911 = vsel %vm1286, %v3815, -inf
    %3912 = vmax.xlane.f32.xlu0 %v3911
    %v3913 = vpop.xlane.xlu0 %3912
    %v3914 = vsub.f32 %v3384, %v3820
    %v3915 = vsub.f32 %v3389, %v3823
    %v3916 = vsub.f32 %v3394, %v3826
    %v3917 = vsub.f32 %v3399, %v3829
    %v3918 = vsub.f32 %v3404, %v3832
    %v3919 = vsub.f32 %v3409, %v3835
    %v3920 = vsub.f32 %v3414, %v3838
    %v3921 = vsub.f32 %v3419, %v3841
    %v3922 = vsub.f32 %v3516, %v3844
    %v3923 = vsub.f32 %v3521, %v3847
    %v3924 = vsub.f32 %v3526, %v3850
    %v3925 = vsub.f32 %v3531, %v3853
    %v3926 = vsub.f32 %v3536, %v3856
    %v3927 = vsub.f32 %v3541, %v3859
    %v3928 = vsub.f32 %v3546, %v3862
    %v3929 = vsub.f32 %v3551, %v3865
    %v3930 = vsub.f32 %v3648, %v3868
    %v3931 = vsub.f32 %v3653, %v3871
    %v3932 = vsub.f32 %v3658, %v3874
    %v3933 = vsub.f32 %v3663, %v3877
    %v3934 = vsub.f32 %v3668, %v3880
    %v3935 = vsub.f32 %v3673, %v3883
    %v3936 = vsub.f32 %v3678, %v3886
    %v3937 = vsub.f32 %v3683, %v3889
    %v3938 = vsub.f32 %v3780, %v3892
    %v3939 = vsub.f32 %v3785, %v3895
    %v3940 = vsub.f32 %v3790, %v3898
    %v3941 = vsub.f32 %v3795, %v3901
    %v3942 = vsub.f32 %v3800, %v3904
    %v3943 = vsub.f32 %v3805, %v3907
    %v3944 = vsub.f32 %v3810, %v3910
    %v3945 = vsub.f32 %v3815, %v3913
    %v3946 = vmul.f32 %v3914, 1.442695
    %v3947 = vpow.pop %v3946
    %v3948 = vmul.f32 %v3915, 1.442695
    %v3949 = vpow.pop %v3948
    %v3950 = vmul.f32 %v3916, 1.442695
    %v3951 = vpow.pop %v3950
    %v3952 = vmul.f32 %v3917, 1.442695
    %v3953 = vpow.pop %v3952
    %v3954 = vmul.f32 %v3918, 1.442695
    %v3955 = vpow.pop %v3954
    %v3956 = vmul.f32 %v3919, 1.442695
    %v3957 = vpow.pop %v3956
    %v3958 = vmul.f32 %v3920, 1.442695
    %v3959 = vpow.pop %v3958
    %v3960 = vmul.f32 %v3921, 1.442695
    %v3961 = vpow.pop %v3960
    %v3962 = vmul.f32 %v3922, 1.442695
    %v3963 = vpow.pop %v3962
    %v3964 = vmul.f32 %v3923, 1.442695
    %v3965 = vpow.pop %v3964
    %v3966 = vmul.f32 %v3924, 1.442695
    %v3967 = vpow.pop %v3966
    %v3968 = vmul.f32 %v3925, 1.442695
    %v3969 = vpow.pop %v3968
    %v3970 = vmul.f32 %v3926, 1.442695
    %v3971 = vpow.pop %v3970
    %v3972 = vmul.f32 %v3927, 1.442695
    %v3973 = vpow.pop %v3972
    %v3974 = vmul.f32 %v3928, 1.442695
    %v3975 = vpow.pop %v3974
    %v3976 = vmul.f32 %v3929, 1.442695
    %v3977 = vpow.pop %v3976
    %v3978 = vmul.f32 %v3930, 1.442695
    %v3979 = vpow.pop %v3978
    %v3980 = vmul.f32 %v3931, 1.442695
    %v3981 = vpow.pop %v3980
    %v3982 = vmul.f32 %v3932, 1.442695
    %v3983 = vpow.pop %v3982
    %v3984 = vmul.f32 %v3933, 1.442695
    %v3985 = vpow.pop %v3984
    %v3986 = vmul.f32 %v3934, 1.442695
    %v3987 = vpow.pop %v3986
    %v3988 = vmul.f32 %v3935, 1.442695
    %v3989 = vpow.pop %v3988
    %v3990 = vmul.f32 %v3936, 1.442695
    %v3991 = vpow.pop %v3990
    %v3992 = vmul.f32 %v3937, 1.442695
    %v3993 = vpow.pop %v3992
    %v3994 = vmul.f32 %v3938, 1.442695
    %v3995 = vpow.pop %v3994
    %v3996 = vmul.f32 %v3939, 1.442695
    %v3997 = vpow.pop %v3996
    %v3998 = vmul.f32 %v3940, 1.442695
    %v3999 = vpow.pop %v3998
    %v4000 = vmul.f32 %v3941, 1.442695
    %v4001 = vpow.pop %v4000
    %v4002 = vmul.f32 %v3942, 1.442695
    %v4003 = vpow.pop %v4002
    %v4004 = vmul.f32 %v3943, 1.442695
    %v4005 = vpow.pop %v4004
    %v4006 = vmul.f32 %v3944, 1.442695
    %v4007 = vpow.pop %v4006
    %v4008 = vmul.f32 %v3945, 1.442695
    %v4009 = vpow.pop %v4008
    %v4010 = vsel %vm1286, %v3947, 0.0
    %4011 = vadd.xlane.f32.xlu0 %v4010
    %v4012 = vpop.xlane.xlu0 %4011
    %v4013 = vsel %vm1286, %v3949, 0.0
    %4014 = vadd.xlane.f32.xlu0 %v4013
    %v4015 = vpop.xlane.xlu0 %4014
    %v4016 = vsel %vm1286, %v3951, 0.0
    %4017 = vadd.xlane.f32.xlu0 %v4016
    %v4018 = vpop.xlane.xlu0 %4017
    %v4019 = vsel %vm1286, %v3953, 0.0
    %4020 = vadd.xlane.f32.xlu0 %v4019
    %v4021 = vpop.xlane.xlu0 %4020
    %v4022 = vsel %vm1286, %v3955, 0.0
    %4023 = vadd.xlane.f32.xlu0 %v4022
    %v4024 = vpop.xlane.xlu0 %4023
    %v4025 = vsel %vm1286, %v3957, 0.0
    %4026 = vadd.xlane.f32.xlu0 %v4025
    %v4027 = vpop.xlane.xlu0 %4026
    %v4028 = vsel %vm1286, %v3959, 0.0
    %4029 = vadd.xlane.f32.xlu0 %v4028
    %v4030 = vpop.xlane.xlu0 %4029
    %v4031 = vsel %vm1286, %v3961, 0.0
    %4032 = vadd.xlane.f32.xlu0 %v4031
    %v4033 = vpop.xlane.xlu0 %4032
    %v4034 = vsel %vm1286, %v3963, 0.0
    %4035 = vadd.xlane.f32.xlu0 %v4034
    %v4036 = vpop.xlane.xlu0 %4035
    %v4037 = vsel %vm1286, %v3965, 0.0
    %4038 = vadd.xlane.f32.xlu0 %v4037
    %v4039 = vpop.xlane.xlu0 %4038
    %v4040 = vsel %vm1286, %v3967, 0.0
    %4041 = vadd.xlane.f32.xlu0 %v4040
    %v4042 = vpop.xlane.xlu0 %4041
    %v4043 = vsel %vm1286, %v3969, 0.0
    %4044 = vadd.xlane.f32.xlu0 %v4043
    %v4045 = vpop.xlane.xlu0 %4044
    %v4046 = vsel %vm1286, %v3971, 0.0
    %4047 = vadd.xlane.f32.xlu0 %v4046
    %v4048 = vpop.xlane.xlu0 %4047
    %v4049 = vsel %vm1286, %v3973, 0.0
    %4050 = vadd.xlane.f32.xlu0 %v4049
    %v4051 = vpop.xlane.xlu0 %4050
    %v4052 = vsel %vm1286, %v3975, 0.0
    %4053 = vadd.xlane.f32.xlu0 %v4052
    %v4054 = vpop.xlane.xlu0 %4053
    %v4055 = vsel %vm1286, %v3977, 0.0
    %4056 = vadd.xlane.f32.xlu0 %v4055
    %v4057 = vpop.xlane.xlu0 %4056
    %v4058 = vsel %vm1286, %v3979, 0.0
    %4059 = vadd.xlane.f32.xlu0 %v4058
    %v4060 = vpop.xlane.xlu0 %4059
    %v4061 = vsel %vm1286, %v3981, 0.0
    %4062 = vadd.xlane.f32.xlu0 %v4061
    %v4063 = vpop.xlane.xlu0 %4062
    %v4064 = vsel %vm1286, %v3983, 0.0
    %4065 = vadd.xlane.f32.xlu0 %v4064
    %v4066 = vpop.xlane.xlu0 %4065
    %v4067 = vsel %vm1286, %v3985, 0.0
    %4068 = vadd.xlane.f32.xlu0 %v4067
    %v4069 = vpop.xlane.xlu0 %4068
    %v4070 = vsel %vm1286, %v3987, 0.0
    %4071 = vadd.xlane.f32.xlu0 %v4070
    %v4072 = vpop.xlane.xlu0 %4071
    %v4073 = vsel %vm1286, %v3989, 0.0
    %4074 = vadd.xlane.f32.xlu0 %v4073
    %v4075 = vpop.xlane.xlu0 %4074
    %v4076 = vsel %vm1286, %v3991, 0.0
    %4077 = vadd.xlane.f32.xlu0 %v4076
    %v4078 = vpop.xlane.xlu0 %4077
    %v4079 = vsel %vm1286, %v3993, 0.0
    %4080 = vadd.xlane.f32.xlu0 %v4079
    %v4081 = vpop.xlane.xlu0 %4080
    %v4082 = vsel %vm1286, %v3995, 0.0
    %4083 = vadd.xlane.f32.xlu0 %v4082
    %v4084 = vpop.xlane.xlu0 %4083
    %v4085 = vsel %vm1286, %v3997, 0.0
    %4086 = vadd.xlane.f32.xlu0 %v4085
    %v4087 = vpop.xlane.xlu0 %4086
    %v4088 = vsel %vm1286, %v3999, 0.0
    %4089 = vadd.xlane.f32.xlu0 %v4088
    %v4090 = vpop.xlane.xlu0 %4089
    %v4091 = vsel %vm1286, %v4001, 0.0
    %4092 = vadd.xlane.f32.xlu0 %v4091
    %v4093 = vpop.xlane.xlu0 %4092
    %v4094 = vsel %vm1286, %v4003, 0.0
    %4095 = vadd.xlane.f32.xlu0 %v4094
    %v4096 = vpop.xlane.xlu0 %4095
    %v4097 = vsel %vm1286, %v4005, 0.0
    %4098 = vadd.xlane.f32.xlu0 %v4097
    %v4099 = vpop.xlane.xlu0 %4098
    %v4100 = vsel %vm1286, %v4007, 0.0
    %4101 = vadd.xlane.f32.xlu0 %v4100
    %v4102 = vpop.xlane.xlu0 %4101
    %v4103 = vsel %vm1286, %v4009, 0.0
    %4104 = vadd.xlane.f32.xlu0 %v4103
    %v4105 = vpop.xlane.xlu0 %4104
    %v4106 = vrcp.pop %v4012
    %v4107 = vrcp.pop %v4015
    %v4108 = vrcp.pop %v4018
    %v4109 = vrcp.pop %v4021
    %v4110 = vrcp.pop %v4024
    %v4111 = vrcp.pop %v4027
    %v4112 = vrcp.pop %v4030
    %v4113 = vrcp.pop %v4033
    %v4114 = vrcp.pop %v4036
    %v4115 = vrcp.pop %v4039
    %v4116 = vrcp.pop %v4042
    %v4117 = vrcp.pop %v4045
    %v4118 = vrcp.pop %v4048
    %v4119 = vrcp.pop %v4051
    %v4120 = vrcp.pop %v4054
    %v4121 = vrcp.pop %v4057
    %v4122 = vrcp.pop %v4060
    %v4123 = vrcp.pop %v4063
    %v4124 = vrcp.pop %v4066
    %v4125 = vrcp.pop %v4069
    %v4126 = vrcp.pop %v4072
    %v4127 = vrcp.pop %v4075
    %v4128 = vrcp.pop %v4078
    %v4129 = vrcp.pop %v4081
    %v4130 = vrcp.pop %v4084
    %v4131 = vrcp.pop %v4087
    %v4132 = vrcp.pop %v4090
    %v4133 = vrcp.pop %v4093
    %v4134 = vrcp.pop %v4096
    %v4135 = vrcp.pop %v4099
    %v4136 = vrcp.pop %v4102
    %v4137 = vrcp.pop %v4105
    %v4138 = vmul.f32 %v3947, %v4106
    %v4139 = vmul.f32 %v3949, %v4107
    %v4140 = vmul.f32 %v3951, %v4108
    %v4141 = vmul.f32 %v3953, %v4109
    %v4142 = vmul.f32 %v3955, %v4110
    %v4143 = vmul.f32 %v3957, %v4111
    %v4144 = vmul.f32 %v3959, %v4112
    %v4145 = vmul.f32 %v3961, %v4113
    %v4146 = vmul.f32 %v3963, %v4114
    %v4147 = vmul.f32 %v3965, %v4115
    %v4148 = vmul.f32 %v3967, %v4116
    %v4149 = vmul.f32 %v3969, %v4117
    %v4150 = vmul.f32 %v3971, %v4118
    %v4151 = vmul.f32 %v3973, %v4119
    %v4152 = vmul.f32 %v3975, %v4120
    %v4153 = vmul.f32 %v3977, %v4121
    %v4154 = vmul.f32 %v3979, %v4122
    %v4155 = vmul.f32 %v3981, %v4123
    %v4156 = vmul.f32 %v3983, %v4124
    %v4157 = vmul.f32 %v3985, %v4125
    %v4158 = vmul.f32 %v3987, %v4126
    %v4159 = vmul.f32 %v3989, %v4127
    %v4160 = vmul.f32 %v3991, %v4128
    %v4161 = vmul.f32 %v3993, %v4129
    %v4162 = vmul.f32 %v3995, %v4130
    %v4163 = vmul.f32 %v3997, %v4131
    %v4164 = vmul.f32 %v3999, %v4132
    %v4165 = vmul.f32 %v4001, %v4133
    %v4166 = vmul.f32 %v4003, %v4134
    %v4167 = vmul.f32 %v4005, %v4135
    %v4168 = vmul.f32 %v4007, %v4136
    %v4169 = vmul.f32 %v4009, %v4137
    %v4171 = vsel %vm1286, %v4138, 0
    %v4174 = vsel %vm1286, %v4139, 0
    %v4177 = vsel %vm1286, %v4140, 0
    %v4180 = vsel %vm1286, %v4141, 0
    %v4183 = vsel %vm1286, %v4142, 0
    %v4186 = vsel %vm1286, %v4143, 0
    %v4189 = vsel %vm1286, %v4144, 0
    %v4192 = vsel %vm1286, %v4145, 0
    %4194 = vmatprep.subr.mxu0 0.0
    %4195 = vmatpush1.msra.mxu0 %v3077
    %4196 = vmatprep.subr.mxu0 0.0
    %4197 = vmatpush1.msra.mxu0 0.0
    %4198 = vmatprep.subr.mxu0 0.0
    %4199 = vmatpush1.msra.mxu0 0.0
    %4200 = vmatprep.subr.mxu0 0.0
    %4201 = vmatpush1.msra.mxu0 0.0
    %4202 = vmatprep.subr.mxu0 0.0
    %4203 = vmatpush1.msra.mxu0 0.0
    %4204 = vmatprep.subr.mxu0 0.0
    %4205 = vmatpush1.msra.mxu0 0.0
    %4206 = vmatprep.subr.mxu0 0.0
    %4207 = vmatpush1.msra.mxu0 0.0
    %4208 = vmatprep.subr.mxu0 0.0
    %4209 = vmatpush1.msra.mxu0 0.0
    %4210 = vmatprep.subr.mxu0 0.0
    %4211 = vmatpush1.msra.mxu0 0.0
    %4212 = vmatprep.subr.mxu0 0.0
    %4213 = vmatpush1.msra.mxu0 0.0
    %4214 = vmatprep.subr.mxu0 0.0
    %4215 = vmatpush1.msra.mxu0 0.0
    %4216 = vmatprep.subr.mxu0 0.0
    %4217 = vmatpush1.msra.mxu0 0.0
    %4218 = vmatprep.subr.mxu0 0.0
    %4219 = vmatpush1.msra.mxu0 0.0
    %4220 = vmatprep.subr.mxu0 0.0
    %4221 = vmatpush1.msra.mxu0 0.0
    %4222 = vmatprep.subr.mxu0 0.0
    %4223 = vmatpush1.msra.mxu0 0.0
    %4224 = vmatprep.subr.mxu0 0.0
    %4225 = vmatpush1.msra.mxu0 0.0
    %4226 = vmatprep.subr.mxu0 0.0
    %4227 = vmatpush1.msra.mxu0 0.0
    %4228 = vmatprep.subr.mxu0 0.0
    %4229 = vmatpush1.msra.mxu0 0.0
    %4230 = vmatprep.subr.mxu0 0.0
    %4231 = vmatpush1.msra.mxu0 0.0
    %4232 = vmatprep.subr.mxu0 0.0
    %4233 = vmatpush1.msra.mxu0 0.0
    %4234 = vmatprep.subr.mxu0 0.0
    %4235 = vmatpush1.msra.mxu0 0.0
    %4236 = vmatprep.subr.mxu0 0.0
    %4237 = vmatpush1.msra.mxu0 0.0
    %4238 = vmatprep.subr.mxu0 0.0
    %4239 = vmatpush1.msra.mxu0 0.0
    %4240 = vmatprep.subr.mxu0 0.0
    %4241 = vmatpush1.msra.mxu0 0.0
    %4242 = vmatprep.subr.mxu0 0.0
    %4243 = vmatpush1.msra.mxu0 0.0
    %4244 = vmatprep.subr.mxu0 0.0
    %4245 = vmatpush1.msra.mxu0 0.0
    %4246 = vmatprep.subr.mxu0 0.0
    %4247 = vmatpush1.msra.mxu0 0.0
    %4248 = vmatprep.subr.mxu0 0.0
    %4249 = vmatpush1.msra.mxu0 0.0
    %4250 = vmatprep.subr.mxu0 0.0
    %4251 = vmatpush1.msra.mxu0 0.0
    %4252 = vmatprep.subr.mxu0 0.0
    %4253 = vmatpush1.msra.mxu0 0.0
    %4254 = vmatprep.subr.mxu0 0.0
    %4255 = vmatpush1.msra.mxu0 0.0
    %4256 = vmatprep.subr.mxu0 0.0
    %4257 = vmatpush1.msra.mxu0 0.0
    %4258 = vmatprep.mubr.f32.mxu0 0.0
    %4259 = vmatmul.mubr.f32.gmra.mrb[0].mxu0 %v4171
    %v4260 = vpop.f32.mrb[0].mxu0
    %v4261 = vadd.f32 0.0, %v4260
    %v4262 = vpop.f32.mrb[0].mxu0
    %4263 = vmatprep.mubr.f32.mxu0 0.0
    %4264 = vmatmul.mubr.f32.gmra.mrb[0].mxu0 %v4174
    %v4265 = vpop.f32.mrb[0].mxu0
    %v4266 = vadd.f32 0.0, %v4265
    %v4267 = vpop.f32.mrb[0].mxu0
    %4268 = vmatprep.mubr.f32.mxu0 0.0
    %4269 = vmatmul.mubr.f32.gmra.mrb[0].mxu0 %v4177
    %v4270 = vpop.f32.mrb[0].mxu0
    %v4271 = vadd.f32 0.0, %v4270
    %v4272 = vpop.f32.mrb[0].mxu0
    %4273 = vmatprep.mubr.f32.mxu0 0.0
    %4274 = vmatmul.mubr.f32.gmra.mrb[0].mxu0 %v4180
    %v4275 = vpop.f32.mrb[0].mxu0
    %v4276 = vadd.f32 0.0, %v4275
    %v4277 = vpop.f32.mrb[0].mxu0
    %4278 = vmatprep.mubr.f32.mxu0 0.0
    %4279 = vmatmul.mubr.f32.gmra.mrb[0].mxu0 %v4183
    %v4280 = vpop.f32.mrb[0].mxu0
    %v4281 = vadd.f32 0.0, %v4280
    %v4282 = vpop.f32.mrb[0].mxu0
    %4283 = vmatprep.mubr.f32.mxu0 0.0
    %4284 = vmatmul.mubr.f32.gmra.mrb[0].mxu0 %v4186
    %v4285 = vpop.f32.mrb[0].mxu0
    %v4286 = vadd.f32 0.0, %v4285
    %v4287 = vpop.f32.mrb[0].mxu0
    %4288 = vmatprep.mubr.f32.mxu0 0.0
    %4289 = vmatmul.mubr.f32.gmra.mrb[0].mxu0 %v4189
    %v4290 = vpop.f32.mrb[0].mxu0
    %v4291 = vadd.f32 0.0, %v4290
    %v4292 = vpop.f32.mrb[0].mxu0
    %4293 = vmatprep.mubr.f32.mxu0 0.0
    %4294 = vmatmul.mubr.f32.gmra.mrb[0].mxu0 %v4192
    %v4295 = vpop.f32.mrb[0].mxu0
    %v4296 = vadd.f32 0.0, %v4295
    %v4297 = vpop.f32.mrb[0].mxu0
    %4298 = vdwg.mxu0
    %v4300 = vsel %vm1286, %v4146, 0
    %v4303 = vsel %vm1286, %v4147, 0
    %v4306 = vsel %vm1286, %v4148, 0
    %v4309 = vsel %vm1286, %v4149, 0
    %v4312 = vsel %vm1286, %v4150, 0
    %v4315 = vsel %vm1286, %v4151, 0
    %v4318 = vsel %vm1286, %v4152, 0
    %v4321 = vsel %vm1286, %v4153, 0
    %4323 = vmatprep.subr.mxu0 0.0
    %4324 = vmatpush1.msra.mxu0 %v3147
    %4325 = vmatprep.subr.mxu0 0.0
    %4326 = vmatpush1.msra.mxu0 0.0
    %4327 = vmatprep.subr.mxu0 0.0
    %4328 = vmatpush1.msra.mxu0 0.0
    %4329 = vmatprep.subr.mxu0 0.0
    %4330 = vmatpush1.msra.mxu0 0.0
    %4331 = vmatprep.subr.mxu0 0.0
    %4332 = vmatpush1.msra.mxu0 0.0
    %4333 = vmatprep.subr.mxu0 0.0
    %4334 = vmatpush1.msra.mxu0 0.0
    %4335 = vmatprep.subr.mxu0 0.0
    %4336 = vmatpush1.msra.mxu0 0.0
    %4337 = vmatprep.subr.mxu0 0.0
    %4338 = vmatpush1.msra.mxu0 0.0
    %4339 = vmatprep.subr.mxu0 0.0
    %4340 = vmatpush1.msra.mxu0 0.0
    %4341 = vmatprep.subr.mxu0 0.0
    %4342 = vmatpush1.msra.mxu0 0.0
    %4343 = vmatprep.subr.mxu0 0.0
    %4344 = vmatpush1.msra.mxu0 0.0
    %4345 = vmatprep.subr.mxu0 0.0
    %4346 = vmatpush1.msra.mxu0 0.0
    %4347 = vmatprep.subr.mxu0 0.0
    %4348 = vmatpush1.msra.mxu0 0.0
    %4349 = vmatprep.subr.mxu0 0.0
    %4350 = vmatpush1.msra.mxu0 0.0
    %4351 = vmatprep.subr.mxu0 0.0
    %4352 = vmatpush1.msra.mxu0 0.0
    %4353 = vmatprep.subr.mxu0 0.0
    %4354 = vmatpush1.msra.mxu0 0.0
    %4355 = vmatprep.subr.mxu0 0.0
    %4356 = vmatpush1.msra.mxu0 0.0
    %4357 = vmatprep.subr.mxu0 0.0
    %4358 = vmatpush1.msra.mxu0 0.0
    %4359 = vmatprep.subr.mxu0 0.0
    %4360 = vmatpush1.msra.mxu0 0.0
    %4361 = vmatprep.subr.mxu0 0.0
    %4362 = vmatpush1.msra.mxu0 0.0
    %4363 = vmatprep.subr.mxu0 0.0
    %4364 = vmatpush1.msra.mxu0 0.0
    %4365 = vmatprep.subr.mxu0 0.0
    %4366 = vmatpush1.msra.mxu0 0.0
    %4367 = vmatprep.subr.mxu0 0.0
    %4368 = vmatpush1.msra.mxu0 0.0
    %4369 = vmatprep.subr.mxu0 0.0
    %4370 = vmatpush1.msra.mxu0 0.0
    %4371 = vmatprep.subr.mxu0 0.0
    %4372 = vmatpush1.msra.mxu0 0.0
    %4373 = vmatprep.subr.mxu0 0.0
    %4374 = vmatpush1.msra.mxu0 0.0
    %4375 = vmatprep.subr.mxu0 0.0
    %4376 = vmatpush1.msra.mxu0 0.0
    %4377 = vmatprep.subr.mxu0 0.0
    %4378 = vmatpush1.msra.mxu0 0.0
    %4379 = vmatprep.subr.mxu0 0.0
    %4380 = vmatpush1.msra.mxu0 0.0
    %4381 = vmatprep.subr.mxu0 0.0
    %4382 = vmatpush1.msra.mxu0 0.0
    %4383 = vmatprep.subr.mxu0 0.0
    %4384 = vmatpush1.msra.mxu0 0.0
    %4385 = vmatprep.subr.mxu0 0.0
    %4386 = vmatpush1.msra.mxu0 0.0
    %4387 = vmatprep.mubr.f32.mxu0 0.0
    %4388 = vmatmul.mubr.f32.gmra.mrb[0].mxu0 %v4300
    %v4389 = vpop.f32.mrb[0].mxu0
    %v4390 = vadd.f32 0.0, %v4389
    %v4391 = vpop.f32.mrb[0].mxu0
    %4392 = vmatprep.mubr.f32.mxu0 0.0
    %4393 = vmatmul.mubr.f32.gmra.mrb[0].mxu0 %v4303
    %v4394 = vpop.f32.mrb[0].mxu0
    %v4395 = vadd.f32 0.0, %v4394
    %v4396 = vpop.f32.mrb[0].mxu0
    %4397 = vmatprep.mubr.f32.mxu0 0.0
    %4398 = vmatmul.mubr.f32.gmra.mrb[0].mxu0 %v4306
    %v4399 = vpop.f32.mrb[0].mxu0
    %v4400 = vadd.f32 0.0, %v4399
    %v4401 = vpop.f32.mrb[0].mxu0
    %4402 = vmatprep.mubr.f32.mxu0 0.0
    %4403 = vmatmul.mubr.f32.gmra.mrb[0].mxu0 %v4309
    %v4404 = vpop.f32.mrb[0].mxu0
    %v4405 = vadd.f32 0.0, %v4404
    %v4406 = vpop.f32.mrb[0].mxu0
    %4407 = vmatprep.mubr.f32.mxu0 0.0
    %4408 = vmatmul.mubr.f32.gmra.mrb[0].mxu0 %v4312
    %v4409 = vpop.f32.mrb[0].mxu0
    %v4410 = vadd.f32 0.0, %v4409
    %v4411 = vpop.f32.mrb[0].mxu0
    %4412 = vmatprep.mubr.f32.mxu0 0.0
    %4413 = vmatmul.mubr.f32.gmra.mrb[0].mxu0 %v4315
    %v4414 = vpop.f32.mrb[0].mxu0
    %v4415 = vadd.f32 0.0, %v4414
    %v4416 = vpop.f32.mrb[0].mxu0
    %4417 = vmatprep.mubr.f32.mxu0 0.0
    %4418 = vmatmul.mubr.f32.gmra.mrb[0].mxu0 %v4318
    %v4419 = vpop.f32.mrb[0].mxu0
    %v4420 = vadd.f32 0.0, %v4419
    %v4421 = vpop.f32.mrb[0].mxu0
    %4422 = vmatprep.mubr.f32.mxu0 0.0
    %4423 = vmatmul.mubr.f32.gmra.mrb[0].mxu0 %v4321
    %v4424 = vpop.f32.mrb[0].mxu0
    %v4425 = vadd.f32 0.0, %v4424
    %v4426 = vpop.f32.mrb[0].mxu0
    %4427 = vdwg.mxu0
    %v4429 = vsel %vm1286, %v4154, 0
    %v4432 = vsel %vm1286, %v4155, 0
    %v4435 = vsel %vm1286, %v4156, 0
    %v4438 = vsel %vm1286, %v4157, 0
    %v4441 = vsel %vm1286, %v4158, 0
    %v4444 = vsel %vm1286, %v4159, 0
    %v4447 = vsel %vm1286, %v4160, 0
    %v4450 = vsel %vm1286, %v4161, 0
    %4452 = vmatprep.subr.mxu0 0.0
    %4453 = vmatpush1.msra.mxu0 %v3217
    %4454 = vmatprep.subr.mxu0 0.0
    %4455 = vmatpush1.msra.mxu0 0.0
    %4456 = vmatprep.subr.mxu0 0.0
    %4457 = vmatpush1.msra.mxu0 0.0
    %4458 = vmatprep.subr.mxu0 0.0
    %4459 = vmatpush1.msra.mxu0 0.0
    %4460 = vmatprep.subr.mxu0 0.0
    %4461 = vmatpush1.msra.mxu0 0.0
    %4462 = vmatprep.subr.mxu0 0.0
    %4463 = vmatpush1.msra.mxu0 0.0
    %4464 = vmatprep.subr.mxu0 0.0
    %4465 = vmatpush1.msra.mxu0 0.0
    %4466 = vmatprep.subr.mxu0 0.0
    %4467 = vmatpush1.msra.mxu0 0.0
    %4468 = vmatprep.subr.mxu0 0.0
    %4469 = vmatpush1.msra.mxu0 0.0
    %4470 = vmatprep.subr.mxu0 0.0
    %4471 = vmatpush1.msra.mxu0 0.0
    %4472 = vmatprep.subr.mxu0 0.0
    %4473 = vmatpush1.msra.mxu0 0.0
    %4474 = vmatprep.subr.mxu0 0.0
    %4475 = vmatpush1.msra.mxu0 0.0
    %4476 = vmatprep.subr.mxu0 0.0
    %4477 = vmatpush1.msra.mxu0 0.0
    %4478 = vmatprep.subr.mxu0 0.0
    %4479 = vmatpush1.msra.mxu0 0.0
    %4480 = vmatprep.subr.mxu0 0.0
    %4481 = vmatpush1.msra.mxu0 0.0
    %4482 = vmatprep.subr.mxu0 0.0
    %4483 = vmatpush1.msra.mxu0 0.0
    %4484 = vmatprep.subr.mxu0 0.0
    %4485 = vmatpush1.msra.mxu0 0.0
    %4486 = vmatprep.subr.mxu0 0.0
    %4487 = vmatpush1.msra.mxu0 0.0
    %4488 = vmatprep.subr.mxu0 0.0
    %4489 = vmatpush1.msra.mxu0 0.0
    %4490 = vmatprep.subr.mxu0 0.0
    %4491 = vmatpush1.msra.mxu0 0.0
    %4492 = vmatprep.subr.mxu0 0.0
    %4493 = vmatpush1.msra.mxu0 0.0
    %4494 = vmatprep.subr.mxu0 0.0
    %4495 = vmatpush1.msra.mxu0 0.0
    %4496 = vmatprep.subr.mxu0 0.0
    %4497 = vmatpush1.msra.mxu0 0.0
    %4498 = vmatprep.subr.mxu0 0.0
    %4499 = vmatpush1.msra.mxu0 0.0
    %4500 = vmatprep.subr.mxu0 0.0
    %4501 = vmatpush1.msra.mxu0 0.0
    %4502 = vmatprep.subr.mxu0 0.0
    %4503 = vmatpush1.msra.mxu0 0.0
    %4504 = vmatprep.subr.mxu0 0.0
    %4505 = vmatpush1.msra.mxu0 0.0
    %4506 = vmatprep.subr.mxu0 0.0
    %4507 = vmatpush1.msra.mxu0 0.0
    %4508 = vmatprep.subr.mxu0 0.0
    %4509 = vmatpush1.msra.mxu0 0.0
    %4510 = vmatprep.subr.mxu0 0.0
    %4511 = vmatpush1.msra.mxu0 0.0
    %4512 = vmatprep.subr.mxu0 0.0
    %4513 = vmatpush1.msra.mxu0 0.0
    %4514 = vmatprep.subr.mxu0 0.0
    %4515 = vmatpush1.msra.mxu0 0.0
    %4516 = vmatprep.mubr.f32.mxu0 0.0
    %4517 = vmatmul.mubr.f32.gmra.mrb[0].mxu0 %v4429
    %v4518 = vpop.f32.mrb[0].mxu0
    %v4519 = vadd.f32 0.0, %v4518
    %v4520 = vpop.f32.mrb[0].mxu0
    %4521 = vmatprep.mubr.f32.mxu0 0.0
    %4522 = vmatmul.mubr.f32.gmra.mrb[0].mxu0 %v4432
    %v4523 = vpop.f32.mrb[0].mxu0
    %v4524 = vadd.f32 0.0, %v4523
    %v4525 = vpop.f32.mrb[0].mxu0
    %4526 = vmatprep.mubr.f32.mxu0 0.0
    %4527 = vmatmul.mubr.f32.gmra.mrb[0].mxu0 %v4435
    %v4528 = vpop.f32.mrb[0].mxu0
    %v4529 = vadd.f32 0.0, %v4528
    %v4530 = vpop.f32.mrb[0].mxu0
    %4531 = vmatprep.mubr.f32.mxu0 0.0
    %4532 = vmatmul.mubr.f32.gmra.mrb[0].mxu0 %v4438
    %v4533 = vpop.f32.mrb[0].mxu0
    %v4534 = vadd.f32 0.0, %v4533
    %v4535 = vpop.f32.mrb[0].mxu0
    %4536 = vmatprep.mubr.f32.mxu0 0.0
    %4537 = vmatmul.mubr.f32.gmra.mrb[0].mxu0 %v4441
    %v4538 = vpop.f32.mrb[0].mxu0
    %v4539 = vadd.f32 0.0, %v4538
    %v4540 = vpop.f32.mrb[0].mxu0
    %4541 = vmatprep.mubr.f32.mxu0 0.0
    %4542 = vmatmul.mubr.f32.gmra.mrb[0].mxu0 %v4444
    %v4543 = vpop.f32.mrb[0].mxu0
    %v4544 = vadd.f32 0.0, %v4543
    %v4545 = vpop.f32.mrb[0].mxu0
    %4546 = vmatprep.mubr.f32.mxu0 0.0
    %4547 = vmatmul.mubr.f32.gmra.mrb[0].mxu0 %v4447
    %v4548 = vpop.f32.mrb[0].mxu0
    %v4549 = vadd.f32 0.0, %v4548
    %v4550 = vpop.f32.mrb[0].mxu0
    %4551 = vmatprep.mubr.f32.mxu0 0.0
    %4552 = vmatmul.mubr.f32.gmra.mrb[0].mxu0 %v4450
    %v4553 = vpop.f32.mrb[0].mxu0
    %v4554 = vadd.f32 0.0, %v4553
    %v4555 = vpop.f32.mrb[0].mxu0
    %4556 = vdwg.mxu0
    %v4558 = vsel %vm1286, %v4162, 0
    %v4561 = vsel %vm1286, %v4163, 0
    %v4564 = vsel %vm1286, %v4164, 0
    %v4567 = vsel %vm1286, %v4165, 0
    %v4570 = vsel %vm1286, %v4166, 0
    %v4573 = vsel %vm1286, %v4167, 0
    %v4576 = vsel %vm1286, %v4168, 0
    %v4579 = vsel %vm1286, %v4169, 0
    %4581 = vmatprep.subr.mxu0 0.0
    %4582 = vmatpush1.msra.mxu0 %v3287
    %4583 = vmatprep.subr.mxu0 0.0
    %4584 = vmatpush1.msra.mxu0 0.0
    %4585 = vmatprep.subr.mxu0 0.0
    %4586 = vmatpush1.msra.mxu0 0.0
    %4587 = vmatprep.subr.mxu0 0.0
    %4588 = vmatpush1.msra.mxu0 0.0
    %4589 = vmatprep.subr.mxu0 0.0
    %4590 = vmatpush1.msra.mxu0 0.0
    %4591 = vmatprep.subr.mxu0 0.0
    %4592 = vmatpush1.msra.mxu0 0.0
    %4593 = vmatprep.subr.mxu0 0.0
    %4594 = vmatpush1.msra.mxu0 0.0
    %4595 = vmatprep.subr.mxu0 0.0
    %4596 = vmatpush1.msra.mxu0 0.0
    %4597 = vmatprep.subr.mxu0 0.0
    %4598 = vmatpush1.msra.mxu0 0.0
    %4599 = vmatprep.subr.mxu0 0.0
    %4600 = vmatpush1.msra.mxu0 0.0
    %4601 = vmatprep.subr.mxu0 0.0
    %4602 = vmatpush1.msra.mxu0 0.0
    %4603 = vmatprep.subr.mxu0 0.0
    %4604 = vmatpush1.msra.mxu0 0.0
    %4605 = vmatprep.subr.mxu0 0.0
    %4606 = vmatpush1.msra.mxu0 0.0
    %4607 = vmatprep.subr.mxu0 0.0
    %4608 = vmatpush1.msra.mxu0 0.0
    %4609 = vmatprep.subr.mxu0 0.0
    %4610 = vmatpush1.msra.mxu0 0.0
    %4611 = vmatprep.subr.mxu0 0.0
    %4612 = vmatpush1.msra.mxu0 0.0
    %4613 = vmatprep.subr.mxu0 0.0
    %4614 = vmatpush1.msra.mxu0 0.0
    %4615 = vmatprep.subr.mxu0 0.0
    %4616 = vmatpush1.msra.mxu0 0.0
    %4617 = vmatprep.subr.mxu0 0.0
    %4618 = vmatpush1.msra.mxu0 0.0
    %4619 = vmatprep.subr.mxu0 0.0
    %4620 = vmatpush1.msra.mxu0 0.0
    %4621 = vmatprep.subr.mxu0 0.0
    %4622 = vmatpush1.msra.mxu0 0.0
    %4623 = vmatprep.subr.mxu0 0.0
    %4624 = vmatpush1.msra.mxu0 0.0
    %4625 = vmatprep.subr.mxu0 0.0
    %4626 = vmatpush1.msra.mxu0 0.0
    %4627 = vmatprep.subr.mxu0 0.0
    %4628 = vmatpush1.msra.mxu0 0.0
    %4629 = vmatprep.subr.mxu0 0.0
    %4630 = vmatpush1.msra.mxu0 0.0
    %4631 = vmatprep.subr.mxu0 0.0
    %4632 = vmatpush1.msra.mxu0 0.0
    %4633 = vmatprep.subr.mxu0 0.0
    %4634 = vmatpush1.msra.mxu0 0.0
    %4635 = vmatprep.subr.mxu0 0.0
    %4636 = vmatpush1.msra.mxu0 0.0
    %4637 = vmatprep.subr.mxu0 0.0
    %4638 = vmatpush1.msra.mxu0 0.0
    %4639 = vmatprep.subr.mxu0 0.0
    %4640 = vmatpush1.msra.mxu0 0.0
    %4641 = vmatprep.subr.mxu0 0.0
    %4642 = vmatpush1.msra.mxu0 0.0
    %4643 = vmatprep.subr.mxu0 0.0
    %4644 = vmatpush1.msra.mxu0 0.0
    %4645 = vmatprep.mubr.f32.mxu0 0.0
    %4646 = vmatmul.mubr.f32.gmra.mrb[0].mxu0 %v4558
    %v4647 = vpop.f32.mrb[0].mxu0
    %v4648 = vadd.f32 0.0, %v4647
    %v4649 = vpop.f32.mrb[0].mxu0
    %4650 = vmatprep.mubr.f32.mxu0 0.0
    %4651 = vmatmul.mubr.f32.gmra.mrb[0].mxu0 %v4561
    %v4652 = vpop.f32.mrb[0].mxu0
    %v4653 = vadd.f32 0.0, %v4652
    %v4654 = vpop.f32.mrb[0].mxu0
    %4655 = vmatprep.mubr.f32.mxu0 0.0
    %4656 = vmatmul.mubr.f32.gmra.mrb[0].mxu0 %v4564
    %v4657 = vpop.f32.mrb[0].mxu0
    %v4658 = vadd.f32 0.0, %v4657
    %v4659 = vpop.f32.mrb[0].mxu0
    %4660 = vmatprep.mubr.f32.mxu0 0.0
    %4661 = vmatmul.mubr.f32.gmra.mrb[0].mxu0 %v4567
    %v4662 = vpop.f32.mrb[0].mxu0
    %v4663 = vadd.f32 0.0, %v4662
    %v4664 = vpop.f32.mrb[0].mxu0
    %4665 = vmatprep.mubr.f32.mxu0 0.0
    %4666 = vmatmul.mubr.f32.gmra.mrb[0].mxu0 %v4570
    %v4667 = vpop.f32.mrb[0].mxu0
    %v4668 = vadd.f32 0.0, %v4667
    %v4669 = vpop.f32.mrb[0].mxu0
    %4670 = vmatprep.mubr.f32.mxu0 0.0
    %4671 = vmatmul.mubr.f32.gmra.mrb[0].mxu0 %v4573
    %v4672 = vpop.f32.mrb[0].mxu0
    %v4673 = vadd.f32 0.0, %v4672
    %v4674 = vpop.f32.mrb[0].mxu0
    %4675 = vmatprep.mubr.f32.mxu0 0.0
    %4676 = vmatmul.mubr.f32.gmra.mrb[0].mxu0 %v4576
    %v4677 = vpop.f32.mrb[0].mxu0
    %v4678 = vadd.f32 0.0, %v4677
    %v4679 = vpop.f32.mrb[0].mxu0
    %4680 = vmatprep.mubr.f32.mxu0 0.0
    %4681 = vmatmul.mubr.f32.gmra.mrb[0].mxu0 %v4579
    %v4682 = vpop.f32.mrb[0].mxu0
    %v4683 = vadd.f32 0.0, %v4682
    %v4684 = vpop.f32.mrb[0].mxu0
    %4685 = vdwg.mxu0
    %v4687 = vsel %vm1286, %v4390, 0
    %v4690 = vsel %vm1286, %v4395, 0
    %v4693 = vsel %vm1286, %v4400, 0
    %v4696 = vsel %vm1286, %v4405, 0
    %v4699 = vsel %vm1286, %v4410, 0
    %v4702 = vsel %vm1286, %v4415, 0
    %v4705 = vsel %vm1286, %v4420, 0
    %v4708 = vsel %vm1286, %v4425, 0
    %4710 = vmatprep.subr.mxu0 0.0
    %4711 = vmatpush1.msra.mxu0 %v90
    %4712 = vmatprep.subr.mxu0 0.0
    %4713 = vmatpush1.msra.mxu0 0.0
    %4714 = vmatprep.subr.mxu0 0.0
    %4715 = vmatpush1.msra.mxu0 0.0
    %4716 = vmatprep.subr.mxu0 0.0
    %4717 = vmatpush1.msra.mxu0 0.0
    %4718 = vmatprep.subr.mxu0 0.0
    %4719 = vmatpush1.msra.mxu0 0.0
    %4720 = vmatprep.subr.mxu0 0.0
    %4721 = vmatpush1.msra.mxu0 0.0
    %4722 = vmatprep.subr.mxu0 0.0
    %4723 = vmatpush1.msra.mxu0 0.0
    %4724 = vmatprep.subr.mxu0 0.0
    %4725 = vmatpush1.msra.mxu0 0.0
    %4726 = vmatprep.subr.mxu0 0.0
    %4727 = vmatpush1.msra.mxu0 0.0
    %4728 = vmatprep.subr.mxu0 0.0
    %4729 = vmatpush1.msra.mxu0 0.0
    %4730 = vmatprep.subr.mxu0 0.0
    %4731 = vmatpush1.msra.mxu0 0.0
    %4732 = vmatprep.subr.mxu0 0.0
    %4733 = vmatpush1.msra.mxu0 0.0
    %4734 = vmatprep.subr.mxu0 0.0
    %4735 = vmatpush1.msra.mxu0 0.0
    %4736 = vmatprep.subr.mxu0 0.0
    %4737 = vmatpush1.msra.mxu0 0.0
    %4738 = vmatprep.subr.mxu0 0.0
    %4739 = vmatpush1.msra.mxu0 0.0
    %4740 = vmatprep.subr.mxu0 0.0
    %4741 = vmatpush1.msra.mxu0 0.0
    %4742 = vmatprep.subr.mxu0 0.0
    %4743 = vmatpush1.msra.mxu0 0.0
    %4744 = vmatprep.subr.mxu0 0.0
    %4745 = vmatpush1.msra.mxu0 0.0
    %4746 = vmatprep.subr.mxu0 0.0
    %4747 = vmatpush1.msra.mxu0 0.0
    %4748 = vmatprep.subr.mxu0 0.0
    %4749 = vmatpush1.msra.mxu0 0.0
    %4750 = vmatprep.subr.mxu0 0.0
    %4751 = vmatpush1.msra.mxu0 0.0
    %4752 = vmatprep.subr.mxu0 0.0
    %4753 = vmatpush1.msra.mxu0 0.0
    %4754 = vmatprep.subr.mxu0 0.0
    %4755 = vmatpush1.msra.mxu0 0.0
    %4756 = vmatprep.subr.mxu0 0.0
    %4757 = vmatpush1.msra.mxu0 0.0
    %4758 = vmatprep.subr.mxu0 0.0
    %4759 = vmatpush1.msra.mxu0 0.0
    %4760 = vmatprep.subr.mxu0 0.0
    %4761 = vmatpush1.msra.mxu0 0.0
    %4762 = vmatprep.subr.mxu0 0.0
    %4763 = vmatpush1.msra.mxu0 0.0
    %4764 = vmatprep.subr.mxu0 0.0
    %4765 = vmatpush1.msra.mxu0 0.0
    %4766 = vmatprep.subr.mxu0 0.0
    %4767 = vmatpush1.msra.mxu0 0.0
    %4768 = vmatprep.subr.mxu0 0.0
    %4769 = vmatpush1.msra.mxu0 0.0
    %4770 = vmatprep.subr.mxu0 0.0
    %4771 = vmatpush1.msra.mxu0 0.0
    %4772 = vmatprep.subr.mxu0 0.0
    %4773 = vmatpush1.msra.mxu0 0.0
    %4774 = vmatprep.mubr.f32.mxu0 0.0
    %4775 = vmatmul.mubr.f32.gmra.mrb[0].mxu0 %v4687
    %v4776 = vpop.f32.mrb[0].mxu0
    %v4777 = vadd.f32 0.0, %v4776
    %v4778 = vpop.f32.mrb[0].mxu0
    %4779 = vmatprep.mubr.f32.mxu0 0.0
    %4780 = vmatmul.mubr.f32.gmra.mrb[0].mxu0 %v4690
    %v4781 = vpop.f32.mrb[0].mxu0
    %v4782 = vadd.f32 0.0, %v4781
    %v4783 = vpop.f32.mrb[0].mxu0
    %4784 = vmatprep.mubr.f32.mxu0 0.0
    %4785 = vmatmul.mubr.f32.gmra.mrb[0].mxu0 %v4693
    %v4786 = vpop.f32.mrb[0].mxu0
    %v4787 = vadd.f32 0.0, %v4786
    %v4788 = vpop.f32.mrb[0].mxu0
    %4789 = vmatprep.mubr.f32.mxu0 0.0
    %4790 = vmatmul.mubr.f32.gmra.mrb[0].mxu0 %v4696
    %v4791 = vpop.f32.mrb[0].mxu0
    %v4792 = vadd.f32 0.0, %v4791
    %v4793 = vpop.f32.mrb[0].mxu0
    %4794 = vmatprep.mubr.f32.mxu0 0.0
    %4795 = vmatmul.mubr.f32.gmra.mrb[0].mxu0 %v4699
    %v4796 = vpop.f32.mrb[0].mxu0
    %v4797 = vadd.f32 0.0, %v4796
    %v4798 = vpop.f32.mrb[0].mxu0
    %4799 = vmatprep.mubr.f32.mxu0 0.0
    %4800 = vmatmul.mubr.f32.gmra.mrb[0].mxu0 %v4702
    %v4801 = vpop.f32.mrb[0].mxu0
    %v4802 = vadd.f32 0.0, %v4801
    %v4803 = vpop.f32.mrb[0].mxu0
    %4804 = vmatprep.mubr.f32.mxu0 0.0
    %4805 = vmatmul.mubr.f32.gmra.mrb[0].mxu0 %v4705
    %v4806 = vpop.f32.mrb[0].mxu0
    %v4807 = vadd.f32 0.0, %v4806
    %v4808 = vpop.f32.mrb[0].mxu0
    %4809 = vmatprep.mubr.f32.mxu0 0.0
    %4810 = vmatmul.mubr.f32.gmra.mrb[0].mxu0 %v4708
    %v4811 = vpop.f32.mrb[0].mxu0
    %v4812 = vadd.f32 0.0, %v4811
    %v4813 = vpop.f32.mrb[0].mxu0
    %4814 = vdwg.mxu0
    %v4816 = vsel %vm1286, %v4261, 0
    %v4819 = vsel %vm1286, %v4266, 0
    %v4822 = vsel %vm1286, %v4271, 0
    %v4825 = vsel %vm1286, %v4276, 0
    %v4828 = vsel %vm1286, %v4281, 0
    %v4831 = vsel %vm1286, %v4286, 0
    %v4834 = vsel %vm1286, %v4291, 0
    %v4837 = vsel %vm1286, %v4296, 0
    %4839 = vmatprep.subr.mxu0 0.0
    %4840 = vmatpush1.msra.mxu0 %v89
    %4841 = vmatprep.subr.mxu0 0.0
    %4842 = vmatpush1.msra.mxu0 0.0
    %4843 = vmatprep.subr.mxu0 0.0
    %4844 = vmatpush1.msra.mxu0 0.0
    %4845 = vmatprep.subr.mxu0 0.0
    %4846 = vmatpush1.msra.mxu0 0.0
    %4847 = vmatprep.subr.mxu0 0.0
    %4848 = vmatpush1.msra.mxu0 0.0
    %4849 = vmatprep.subr.mxu0 0.0
    %4850 = vmatpush1.msra.mxu0 0.0
    %4851 = vmatprep.subr.mxu0 0.0
    %4852 = vmatpush1.msra.mxu0 0.0
    %4853 = vmatprep.subr.mxu0 0.0
    %4854 = vmatpush1.msra.mxu0 0.0
    %4855 = vmatprep.subr.mxu0 0.0
    %4856 = vmatpush1.msra.mxu0 0.0
    %4857 = vmatprep.subr.mxu0 0.0
    %4858 = vmatpush1.msra.mxu0 0.0
    %4859 = vmatprep.subr.mxu0 0.0
    %4860 = vmatpush1.msra.mxu0 0.0
    %4861 = vmatprep.subr.mxu0 0.0
    %4862 = vmatpush1.msra.mxu0 0.0
    %4863 = vmatprep.subr.mxu0 0.0
    %4864 = vmatpush1.msra.mxu0 0.0
    %4865 = vmatprep.subr.mxu0 0.0
    %4866 = vmatpush1.msra.mxu0 0.0
    %4867 = vmatprep.subr.mxu0 0.0
    %4868 = vmatpush1.msra.mxu0 0.0
    %4869 = vmatprep.subr.mxu0 0.0
    %4870 = vmatpush1.msra.mxu0 0.0
    %4871 = vmatprep.subr.mxu0 0.0
    %4872 = vmatpush1.msra.mxu0 0.0
    %4873 = vmatprep.subr.mxu0 0.0
    %4874 = vmatpush1.msra.mxu0 0.0
    %4875 = vmatprep.subr.mxu0 0.0
    %4876 = vmatpush1.msra.mxu0 0.0
    %4877 = vmatprep.subr.mxu0 0.0
    %4878 = vmatpush1.msra.mxu0 0.0
    %4879 = vmatprep.subr.mxu0 0.0
    %4880 = vmatpush1.msra.mxu0 0.0
    %4881 = vmatprep.subr.mxu0 0.0
    %4882 = vmatpush1.msra.mxu0 0.0
    %4883 = vmatprep.subr.mxu0 0.0
    %4884 = vmatpush1.msra.mxu0 0.0
    %4885 = vmatprep.subr.mxu0 0.0
    %4886 = vmatpush1.msra.mxu0 0.0
    %4887 = vmatprep.subr.mxu0 0.0
    %4888 = vmatpush1.msra.mxu0 0.0
    %4889 = vmatprep.subr.mxu0 0.0
    %4890 = vmatpush1.msra.mxu0 0.0
    %4891 = vmatprep.subr.mxu0 0.0
    %4892 = vmatpush1.msra.mxu0 0.0
    %4893 = vmatprep.subr.mxu0 0.0
    %4894 = vmatpush1.msra.mxu0 0.0
    %4895 = vmatprep.subr.mxu0 0.0
    %4896 = vmatpush1.msra.mxu0 0.0
    %4897 = vmatprep.subr.mxu0 0.0
    %4898 = vmatpush1.msra.mxu0 0.0
    %4899 = vmatprep.subr.mxu0 0.0
    %4900 = vmatpush1.msra.mxu0 0.0
    %4901 = vmatprep.subr.mxu0 0.0
    %4902 = vmatpush1.msra.mxu0 0.0
    %4903 = vmatprep.mubr.f32.mxu0 0.0
    %4904 = vmatmul.mubr.f32.gmra.mrb[0].mxu0 %v4816
    %v4905 = vpop.f32.mrb[0].mxu0
    %v4906 = vadd.f32 %v4777, %v4905
    %v4907 = vpop.f32.mrb[0].mxu0
    %4908 = vmatprep.mubr.f32.mxu0 0.0
    %4909 = vmatmul.mubr.f32.gmra.mrb[0].mxu0 %v4819
    %v4910 = vpop.f32.mrb[0].mxu0
    %v4911 = vadd.f32 %v4782, %v4910
    %v4912 = vpop.f32.mrb[0].mxu0
    %4913 = vmatprep.mubr.f32.mxu0 0.0
    %4914 = vmatmul.mubr.f32.gmra.mrb[0].mxu0 %v4822
    %v4915 = vpop.f32.mrb[0].mxu0
    %v4916 = vadd.f32 %v4787, %v4915
    %v4917 = vpop.f32.mrb[0].mxu0
    %4918 = vmatprep.mubr.f32.mxu0 0.0
    %4919 = vmatmul.mubr.f32.gmra.mrb[0].mxu0 %v4825
    %v4920 = vpop.f32.mrb[0].mxu0
    %v4921 = vadd.f32 %v4792, %v4920
    %v4922 = vpop.f32.mrb[0].mxu0
    %4923 = vmatprep.mubr.f32.mxu0 0.0
    %4924 = vmatmul.mubr.f32.gmra.mrb[0].mxu0 %v4828
    %v4925 = vpop.f32.mrb[0].mxu0
    %v4926 = vadd.f32 %v4797, %v4925
    %v4927 = vpop.f32.mrb[0].mxu0
    %4928 = vmatprep.mubr.f32.mxu0 0.0
    %4929 = vmatmul.mubr.f32.gmra.mrb[0].mxu0 %v4831
    %v4930 = vpop.f32.mrb[0].mxu0
    %v4931 = vadd.f32 %v4802, %v4930
    %v4932 = vpop.f32.mrb[0].mxu0
    %4933 = vmatprep.mubr.f32.mxu0 0.0
    %4934 = vmatmul.mubr.f32.gmra.mrb[0].mxu0 %v4834
    %v4935 = vpop.f32.mrb[0].mxu0
    %v4936 = vadd.f32 %v4807, %v4935
    %v4937 = vpop.f32.mrb[0].mxu0
    %4938 = vmatprep.mubr.f32.mxu0 0.0
    %4939 = vmatmul.mubr.f32.gmra.mrb[0].mxu0 %v4837
    %v4940 = vpop.f32.mrb[0].mxu0
    %v4941 = vadd.f32 %v4812, %v4940
    %v4942 = vpop.f32.mrb[0].mxu0
    %4943 = vdwg.mxu0
    %v4945 = vsel %vm1286, %v4519, 0
    %v4948 = vsel %vm1286, %v4524, 0
    %v4951 = vsel %vm1286, %v4529, 0
    %v4954 = vsel %vm1286, %v4534, 0
    %v4957 = vsel %vm1286, %v4539, 0
    %v4960 = vsel %vm1286, %v4544, 0
    %v4963 = vsel %vm1286, %v4549, 0
    %v4966 = vsel %vm1286, %v4554, 0
    %4968 = vmatprep.subr.mxu0 0.0
    %4969 = vmatpush1.msra.mxu0 %v91
    %4970 = vmatprep.subr.mxu0 0.0
    %4971 = vmatpush1.msra.mxu0 0.0
    %4972 = vmatprep.subr.mxu0 0.0
    %4973 = vmatpush1.msra.mxu0 0.0
    %4974 = vmatprep.subr.mxu0 0.0
    %4975 = vmatpush1.msra.mxu0 0.0
    %4976 = vmatprep.subr.mxu0 0.0
    %4977 = vmatpush1.msra.mxu0 0.0
    %4978 = vmatprep.subr.mxu0 0.0
    %4979 = vmatpush1.msra.mxu0 0.0
    %4980 = vmatprep.subr.mxu0 0.0
    %4981 = vmatpush1.msra.mxu0 0.0
    %4982 = vmatprep.subr.mxu0 0.0
    %4983 = vmatpush1.msra.mxu0 0.0
    %4984 = vmatprep.subr.mxu0 0.0
    %4985 = vmatpush1.msra.mxu0 0.0
    %4986 = vmatprep.subr.mxu0 0.0
    %4987 = vmatpush1.msra.mxu0 0.0
    %4988 = vmatprep.subr.mxu0 0.0
    %4989 = vmatpush1.msra.mxu0 0.0
    %4990 = vmatprep.subr.mxu0 0.0
    %4991 = vmatpush1.msra.mxu0 0.0
    %4992 = vmatprep.subr.mxu0 0.0
    %4993 = vmatpush1.msra.mxu0 0.0
    %4994 = vmatprep.subr.mxu0 0.0
    %4995 = vmatpush1.msra.mxu0 0.0
    %4996 = vmatprep.subr.mxu0 0.0
    %4997 = vmatpush1.msra.mxu0 0.0
    %4998 = vmatprep.subr.mxu0 0.0
    %4999 = vmatpush1.msra.mxu0 0.0
    %5000 = vmatprep.subr.mxu0 0.0
    %5001 = vmatpush1.msra.mxu0 0.0
    %5002 = vmatprep.subr.mxu0 0.0
    %5003 = vmatpush1.msra.mxu0 0.0
    %5004 = vmatprep.subr.mxu0 0.0
    %5005 = vmatpush1.msra.mxu0 0.0
    %5006 = vmatprep.subr.mxu0 0.0
    %5007 = vmatpush1.msra.mxu0 0.0
    %5008 = vmatprep.subr.mxu0 0.0
    %5009 = vmatpush1.msra.mxu0 0.0
    %5010 = vmatprep.subr.mxu0 0.0
    %5011 = vmatpush1.msra.mxu0 0.0
    %5012 = vmatprep.subr.mxu0 0.0
    %5013 = vmatpush1.msra.mxu0 0.0
    %5014 = vmatprep.subr.mxu0 0.0
    %5015 = vmatpush1.msra.mxu0 0.0
    %5016 = vmatprep.subr.mxu0 0.0
    %5017 = vmatpush1.msra.mxu0 0.0
    %5018 = vmatprep.subr.mxu0 0.0
    %5019 = vmatpush1.msra.mxu0 0.0
    %5020 = vmatprep.subr.mxu0 0.0
    %5021 = vmatpush1.msra.mxu0 0.0
    %5022 = vmatprep.subr.mxu0 0.0
    %5023 = vmatpush1.msra.mxu0 0.0
    %5024 = vmatprep.subr.mxu0 0.0
    %5025 = vmatpush1.msra.mxu0 0.0
    %5026 = vmatprep.subr.mxu0 0.0
    %5027 = vmatpush1.msra.mxu0 0.0
    %5028 = vmatprep.subr.mxu0 0.0
    %5029 = vmatpush1.msra.mxu0 0.0
    %5030 = vmatprep.subr.mxu0 0.0
    %5031 = vmatpush1.msra.mxu0 0.0
    %5032 = vmatprep.mubr.f32.mxu0 0.0
    %5033 = vmatmul.mubr.f32.gmra.mrb[0].mxu0 %v4945
    %v5034 = vpop.f32.mrb[0].mxu0
    %v5035 = vadd.f32 0.0, %v5034
    %v5036 = vpop.f32.mrb[0].mxu0
    %5037 = vmatprep.mubr.f32.mxu0 0.0
    %5038 = vmatmul.mubr.f32.gmra.mrb[0].mxu0 %v4948
    %v5039 = vpop.f32.mrb[0].mxu0
    %v5040 = vadd.f32 0.0, %v5039
    %v5041 = vpop.f32.mrb[0].mxu0
    %5042 = vmatprep.mubr.f32.mxu0 0.0
    %5043 = vmatmul.mubr.f32.gmra.mrb[0].mxu0 %v4951
    %v5044 = vpop.f32.mrb[0].mxu0
    %v5045 = vadd.f32 0.0, %v5044
    %v5046 = vpop.f32.mrb[0].mxu0
    %5047 = vmatprep.mubr.f32.mxu0 0.0
    %5048 = vmatmul.mubr.f32.gmra.mrb[0].mxu0 %v4954
    %v5049 = vpop.f32.mrb[0].mxu0
    %v5050 = vadd.f32 0.0, %v5049
    %v5051 = vpop.f32.mrb[0].mxu0
    %5052 = vmatprep.mubr.f32.mxu0 0.0
    %5053 = vmatmul.mubr.f32.gmra.mrb[0].mxu0 %v4957
    %v5054 = vpop.f32.mrb[0].mxu0
    %v5055 = vadd.f32 0.0, %v5054
    %v5056 = vpop.f32.mrb[0].mxu0
    %5057 = vmatprep.mubr.f32.mxu0 0.0
    %5058 = vmatmul.mubr.f32.gmra.mrb[0].mxu0 %v4960
    %v5059 = vpop.f32.mrb[0].mxu0
    %v5060 = vadd.f32 0.0, %v5059
    %v5061 = vpop.f32.mrb[0].mxu0
    %5062 = vmatprep.mubr.f32.mxu0 0.0
    %5063 = vmatmul.mubr.f32.gmra.mrb[0].mxu0 %v4963
    %v5064 = vpop.f32.mrb[0].mxu0
    %v5065 = vadd.f32 0.0, %v5064
    %v5066 = vpop.f32.mrb[0].mxu0
    %5067 = vmatprep.mubr.f32.mxu0 0.0
    %5068 = vmatmul.mubr.f32.gmra.mrb[0].mxu0 %v4966
    %v5069 = vpop.f32.mrb[0].mxu0
    %v5070 = vadd.f32 0.0, %v5069
    %v5071 = vpop.f32.mrb[0].mxu0
    %5072 = vdwg.mxu0
    %v5073 = vadd.f32 %v4906, %v5035
    %v5074 = vadd.f32 %v4911, %v5040
    %v5075 = vadd.f32 %v4916, %v5045
    %v5076 = vadd.f32 %v4921, %v5050
    %v5077 = vadd.f32 %v4926, %v5055
    %v5078 = vadd.f32 %v4931, %v5060
    %v5079 = vadd.f32 %v4936, %v5065
    %v5080 = vadd.f32 %v4941, %v5070
    %v5082 = vsel %vm1286, %v4648, 0
    %v5085 = vsel %vm1286, %v4653, 0
    %v5088 = vsel %vm1286, %v4658, 0
    %v5091 = vsel %vm1286, %v4663, 0
    %v5094 = vsel %vm1286, %v4668, 0
    %v5097 = vsel %vm1286, %v4673, 0
    %v5100 = vsel %vm1286, %v4678, 0
    %v5103 = vsel %vm1286, %v4683, 0
    %5105 = vmatprep.subr.mxu0 0.0
    %5106 = vmatpush1.msra.mxu0 %v92
    %5107 = vmatprep.subr.mxu0 0.0
    %5108 = vmatpush1.msra.mxu0 0.0
    %5109 = vmatprep.subr.mxu0 0.0
    %5110 = vmatpush1.msra.mxu0 0.0
    %5111 = vmatprep.subr.mxu0 0.0
    %5112 = vmatpush1.msra.mxu0 0.0
    %5113 = vmatprep.subr.mxu0 0.0
    %5114 = vmatpush1.msra.mxu0 0.0
    %5115 = vmatprep.subr.mxu0 0.0
    %5116 = vmatpush1.msra.mxu0 0.0
    %5117 = vmatprep.subr.mxu0 0.0
    %5118 = vmatpush1.msra.mxu0 0.0
    %5119 = vmatprep.subr.mxu0 0.0
    %5120 = vmatpush1.msra.mxu0 0.0
    %5121 = vmatprep.subr.mxu0 0.0
    %5122 = vmatpush1.msra.mxu0 0.0
    %5123 = vmatprep.subr.mxu0 0.0
    %5124 = vmatpush1.msra.mxu0 0.0
    %5125 = vmatprep.subr.mxu0 0.0
    %5126 = vmatpush1.msra.mxu0 0.0
    %5127 = vmatprep.subr.mxu0 0.0
    %5128 = vmatpush1.msra.mxu0 0.0
    %5129 = vmatprep.subr.mxu0 0.0
    %5130 = vmatpush1.msra.mxu0 0.0
    %5131 = vmatprep.subr.mxu0 0.0
    %5132 = vmatpush1.msra.mxu0 0.0
    %5133 = vmatprep.subr.mxu0 0.0
    %5134 = vmatpush1.msra.mxu0 0.0
    %5135 = vmatprep.subr.mxu0 0.0
    %5136 = vmatpush1.msra.mxu0 0.0
    %5137 = vmatprep.subr.mxu0 0.0
    %5138 = vmatpush1.msra.mxu0 0.0
    %5139 = vmatprep.subr.mxu0 0.0
    %5140 = vmatpush1.msra.mxu0 0.0
    %5141 = vmatprep.subr.mxu0 0.0
    %5142 = vmatpush1.msra.mxu0 0.0
    %5143 = vmatprep.subr.mxu0 0.0
    %5144 = vmatpush1.msra.mxu0 0.0
    %5145 = vmatprep.subr.mxu0 0.0
    %5146 = vmatpush1.msra.mxu0 0.0
    %5147 = vmatprep.subr.mxu0 0.0
    %5148 = vmatpush1.msra.mxu0 0.0
    %5149 = vmatprep.subr.mxu0 0.0
    %5150 = vmatpush1.msra.mxu0 0.0
    %5151 = vmatprep.subr.mxu0 0.0
    %5152 = vmatpush1.msra.mxu0 0.0
    %5153 = vmatprep.subr.mxu0 0.0
    %5154 = vmatpush1.msra.mxu0 0.0
    %5155 = vmatprep.subr.mxu0 0.0
    %5156 = vmatpush1.msra.mxu0 0.0
    %5157 = vmatprep.subr.mxu0 0.0
    %5158 = vmatpush1.msra.mxu0 0.0
    %5159 = vmatprep.subr.mxu0 0.0
    %5160 = vmatpush1.msra.mxu0 0.0
    %5161 = vmatprep.subr.mxu0 0.0
    %5162 = vmatpush1.msra.mxu0 0.0
    %5163 = vmatprep.subr.mxu0 0.0
    %5164 = vmatpush1.msra.mxu0 0.0
    %5165 = vmatprep.subr.mxu0 0.0
    %5166 = vmatpush1.msra.mxu0 0.0
    %5167 = vmatprep.subr.mxu0 0.0
    %5168 = vmatpush1.msra.mxu0 0.0
    %5169 = vmatprep.mubr.f32.mxu0 0.0
    %5170 = vmatmul.mubr.f32.gmra.mrb[0].mxu0 %v5082
    %v5171 = vpop.f32.mrb[0].mxu0
    %v5172 = vadd.f32 0.0, %v5171
    %v5173 = vpop.f32.mrb[0].mxu0
    %5174 = vmatprep.mubr.f32.mxu0 0.0
    %5175 = vmatmul.mubr.f32.gmra.mrb[0].mxu0 %v5085
    %v5176 = vpop.f32.mrb[0].mxu0
    %v5177 = vadd.f32 0.0, %v5176
    %v5178 = vpop.f32.mrb[0].mxu0
    %5179 = vmatprep.mubr.f32.mxu0 0.0
    %5180 = vmatmul.mubr.f32.gmra.mrb[0].mxu0 %v5088
    %v5181 = vpop.f32.mrb[0].mxu0
    %v5182 = vadd.f32 0.0, %v5181
    %v5183 = vpop.f32.mrb[0].mxu0
    %5184 = vmatprep.mubr.f32.mxu0 0.0
    %5185 = vmatmul.mubr.f32.gmra.mrb[0].mxu0 %v5091
    %v5186 = vpop.f32.mrb[0].mxu0
    %v5187 = vadd.f32 0.0, %v5186
    %v5188 = vpop.f32.mrb[0].mxu0
    %5189 = vmatprep.mubr.f32.mxu0 0.0
    %5190 = vmatmul.mubr.f32.gmra.mrb[0].mxu0 %v5094
    %v5191 = vpop.f32.mrb[0].mxu0
    %v5192 = vadd.f32 0.0, %v5191
    %v5193 = vpop.f32.mrb[0].mxu0
    %5194 = vmatprep.mubr.f32.mxu0 0.0
    %5195 = vmatmul.mubr.f32.gmra.mrb[0].mxu0 %v5097
    %v5196 = vpop.f32.mrb[0].mxu0
    %v5197 = vadd.f32 0.0, %v5196
    %v5198 = vpop.f32.mrb[0].mxu0
    %5199 = vmatprep.mubr.f32.mxu0 0.0
    %5200 = vmatmul.mubr.f32.gmra.mrb[0].mxu0 %v5100
    %v5201 = vpop.f32.mrb[0].mxu0
    %v5202 = vadd.f32 0.0, %v5201
    %v5203 = vpop.f32.mrb[0].mxu0
    %5204 = vmatprep.mubr.f32.mxu0 0.0
    %5205 = vmatmul.mubr.f32.gmra.mrb[0].mxu0 %v5103
    %v5206 = vpop.f32.mrb[0].mxu0
    %v5207 = vadd.f32 0.0, %v5206
    %v5208 = vpop.f32.mrb[0].mxu0
    %5209 = vdwg.mxu0
    %v5210 = vadd.f32 %v5073, %v5172
    %v5211 = vadd.f32 %v5074, %v5177
    %v5212 = vadd.f32 %v5075, %v5182
    %v5213 = vadd.f32 %v5076, %v5187
    %v5214 = vadd.f32 %v5077, %v5192
    %v5215 = vadd.f32 %v5078, %v5197
    %v5216 = vadd.f32 %v5079, %v5202
    %v5217 = vadd.f32 %v5080, %v5207
    %v5218 = vadd.f32 %v5210, %v33
    %v5219 = vadd.f32 %v5211, %v34
    %v5220 = vadd.f32 %v5212, %v35
    %v5221 = vadd.f32 %v5213, %v36
    %v5222 = vadd.f32 %v5214, %v37
    %v5223 = vadd.f32 %v5215, %v38
    %v5224 = vadd.f32 %v5216, %v39
    %v5225 = vadd.f32 %v5217, %v40
    %v5226 = vsel %vm138, %v5218, 0.0
    %5227 = vadd.xlane.f32.xlu0 %v5226
    %v5228 = vpop.xlane.xlu0 %5227
    %v5229 = vsel %vm138, %v5219, 0.0
    %5230 = vadd.xlane.f32.xlu0 %v5229
    %v5231 = vpop.xlane.xlu0 %5230
    %v5232 = vsel %vm138, %v5220, 0.0
    %5233 = vadd.xlane.f32.xlu0 %v5232
    %v5234 = vpop.xlane.xlu0 %5233
    %v5235 = vsel %vm138, %v5221, 0.0
    %5236 = vadd.xlane.f32.xlu0 %v5235
    %v5237 = vpop.xlane.xlu0 %5236
    %v5238 = vsel %vm138, %v5222, 0.0
    %5239 = vadd.xlane.f32.xlu0 %v5238
    %v5240 = vpop.xlane.xlu0 %5239
    %v5241 = vsel %vm138, %v5223, 0.0
    %5242 = vadd.xlane.f32.xlu0 %v5241
    %v5243 = vpop.xlane.xlu0 %5242
    %v5244 = vsel %vm138, %v5224, 0.0
    %5245 = vadd.xlane.f32.xlu0 %v5244
    %v5246 = vpop.xlane.xlu0 %5245
    %v5247 = vsel %vm138, %v5225, 0.0
    %5248 = vadd.xlane.f32.xlu0 %v5247
    %v5249 = vpop.xlane.xlu0 %5248
    %v5250 = vrcp.pop 32.0
    %v5251 = vmul.f32 %v5228, %v5250
    %v5252 = vmul.f32 %v5231, %v5250
    %v5253 = vmul.f32 %v5234, %v5250
    %v5254 = vmul.f32 %v5237, %v5250
    %v5255 = vmul.f32 %v5240, %v5250
    %v5256 = vmul.f32 %v5243, %v5250
    %v5257 = vmul.f32 %v5246, %v5250
    %v5258 = vmul.f32 %v5249, %v5250
    %v5259 = vsub.f32 %v5218, %v5251
    %v5260 = vsub.f32 %v5219, %v5252
    %v5261 = vsub.f32 %v5220, %v5253
    %v5262 = vsub.f32 %v5221, %v5254
    %v5263 = vsub.f32 %v5222, %v5255
    %v5264 = vsub.f32 %v5223, %v5256
    %v5265 = vsub.f32 %v5224, %v5257
    %v5266 = vsub.f32 %v5225, %v5258
    %v5267 = vmul.f32 %v5259, %v5259
    %v5268 = vmul.f32 %v5260, %v5260
    %v5269 = vmul.f32 %v5261, %v5261
    %v5270 = vmul.f32 %v5262, %v5262
    %v5271 = vmul.f32 %v5263, %v5263
    %v5272 = vmul.f32 %v5264, %v5264
    %v5273 = vmul.f32 %v5265, %v5265
    %v5274 = vmul.f32 %v5266, %v5266
    %v5275 = vsel %vm138, %v5267, 0.0
    %5276 = vadd.xlane.f32.xlu0 %v5275
    %v5277 = vpop.xlane.xlu0 %5276
    %v5278 = vsel %vm138, %v5268, 0.0
    %5279 = vadd.xlane.f32.xlu0 %v5278
    %v5280 = vpop.xlane.xlu0 %5279
    %v5281 = vsel %vm138, %v5269, 0.0
    %5282 = vadd.xlane.f32.xlu0 %v5281
    %v5283 = vpop.xlane.xlu0 %5282
    %v5284 = vsel %vm138, %v5270, 0.0
    %5285 = vadd.xlane.f32.xlu0 %v5284
    %v5286 = vpop.xlane.xlu0 %5285
    %v5287 = vsel %vm138, %v5271, 0.0
    %5288 = vadd.xlane.f32.xlu0 %v5287
    %v5289 = vpop.xlane.xlu0 %5288
    %v5290 = vsel %vm138, %v5272, 0.0
    %5291 = vadd.xlane.f32.xlu0 %v5290
    %v5292 = vpop.xlane.xlu0 %5291
    %v5293 = vsel %vm138, %v5273, 0.0
    %5294 = vadd.xlane.f32.xlu0 %v5293
    %v5295 = vpop.xlane.xlu0 %5294
    %v5296 = vsel %vm138, %v5274, 0.0
    %5297 = vadd.xlane.f32.xlu0 %v5296
    %v5298 = vpop.xlane.xlu0 %5297
    %v5299 = vmul.f32 %v5277, %v5250
    %v5300 = vmul.f32 %v5280, %v5250
    %v5301 = vmul.f32 %v5283, %v5250
    %v5302 = vmul.f32 %v5286, %v5250
    %v5303 = vmul.f32 %v5289, %v5250
    %v5304 = vmul.f32 %v5292, %v5250
    %v5305 = vmul.f32 %v5295, %v5250
    %v5306 = vmul.f32 %v5298, %v5250
    %v5307 = vadd.f32 %v5299, 1e-05
    %v5308 = vadd.f32 %v5300, 1e-05
    %v5309 = vadd.f32 %v5301, 1e-05
    %v5310 = vadd.f32 %v5302, 1e-05
    %v5311 = vadd.f32 %v5303, 1e-05
    %v5312 = vadd.f32 %v5304, 1e-05
    %v5313 = vadd.f32 %v5305, 1e-05
    %v5314 = vadd.f32 %v5306, 1e-05
    %v5315 = vrsqrt.pop %v5307
    %v5316 = vrsqrt.pop %v5308
    %v5317 = vrsqrt.pop %v5309
    %v5318 = vrsqrt.pop %v5310
    %v5319 = vrsqrt.pop %v5311
    %v5320 = vrsqrt.pop %v5312
    %v5321 = vrsqrt.pop %v5313
    %v5322 = vrsqrt.pop %v5314
    %v5323 = vmul.f32 %v5259, %v5315
    %v5324 = vmul.f32 %v5260, %v5316
    %v5325 = vmul.f32 %v5261, %v5317
    %v5326 = vmul.f32 %v5262, %v5318
    %v5327 = vmul.f32 %v5263, %v5319
    %v5328 = vmul.f32 %v5264, %v5320
    %v5329 = vmul.f32 %v5265, %v5321
    %v5330 = vmul.f32 %v5266, %v5322
    %v5331 = vlaneseq
    %v5332 = vshrl.u32 %v5331, 7
    %v5333 = vsub.s32 2, %v5332
    %v5334 = vrot.slane %v103, %v5333
    %v5335 = vmul.f32 %v5323, %v5334
    %v5336 = vmul.f32 %v5324, %v5334
    %v5337 = vmul.f32 %v5325, %v5334
    %v5338 = vmul.f32 %v5326, %v5334
    %v5339 = vmul.f32 %v5327, %v5334
    %v5340 = vmul.f32 %v5328, %v5334
    %v5341 = vmul.f32 %v5329, %v5334
    %v5342 = vmul.f32 %v5330, %v5334
    %v5343 = vlaneseq
    %v5344 = vshrl.u32 %v5343, 7
    %v5345 = vsub.s32 3, %v5344
    %v5346 = vrot.slane %v103, %v5345
    %v5347 = vadd.f32 %v5335, %v5346
    %v5348 = vadd.f32 %v5336, %v5346
    %v5349 = vadd.f32 %v5337, %v5346
    %v5350 = vadd.f32 %v5338, %v5346
    %v5351 = vadd.f32 %v5339, %v5346
    %v5352 = vadd.f32 %v5340, %v5346
    %v5353 = vadd.f32 %v5341, %v5346
    %v5354 = vadd.f32 %v5342, %v5346
    %v5355 = vlaneseq
    %v5356 = vshrl.u32 %v5355, 7
    %v5357 = vsub.s32 0, %v5356
    %v5358 = vrot.slane %v103, %v5357
    %v5360 = vsel %vm138, %v5347, 0
    %v5363 = vsel %vm138, %v5348, 0
    %v5366 = vsel %vm138, %v5349, 0
    %v5369 = vsel %vm138, %v5350, 0
    %v5372 = vsel %vm138, %v5351, 0
    %v5375 = vsel %vm138, %v5352, 0
    %v5378 = vsel %vm138, %v5353, 0
    %v5381 = vsel %vm138, %v5354, 0
    %5383 = vmatprep.subr.mxu0 0.0
    %5384 = vmatpush1.msra.mxu0 %v94
    %5385 = vmatprep.subr.mxu0 0.0
    %5386 = vmatpush1.msra.mxu0 %v95
    %5387 = vmatprep.subr.mxu0 0.0
    %5388 = vmatpush1.msra.mxu0 %v96
    %5389 = vmatprep.subr.mxu0 0.0
    %5390 = vmatpush1.msra.mxu0 %v97
    %5391 = vmatprep.subr.mxu0 0.0
    %5392 = vmatpush1.msra.mxu0 0.0
    %5393 = vmatprep.subr.mxu0 0.0
    %5394 = vmatpush1.msra.mxu0 0.0
    %5395 = vmatprep.subr.mxu0 0.0
    %5396 = vmatpush1.msra.mxu0 0.0
    %5397 = vmatprep.subr.mxu0 0.0
    %5398 = vmatpush1.msra.mxu0 0.0
    %5399 = vmatprep.subr.mxu0 0.0
    %5400 = vmatpush1.msra.mxu0 0.0
    %5401 = vmatprep.subr.mxu0 0.0
    %5402 = vmatpush1.msra.mxu0 0.0
    %5403 = vmatprep.subr.mxu0 0.0
    %5404 = vmatpush1.msra.mxu0 0.0
    %5405 = vmatprep.subr.mxu0 0.0
    %5406 = vmatpush1.msra.mxu0 0.0
    %5407 = vmatprep.subr.mxu0 0.0
    %5408 = vmatpush1.msra.mxu0 0.0
    %5409 = vmatprep.subr.mxu0 0.0
    %5410 = vmatpush1.msra.mxu0 0.0
    %5411 = vmatprep.subr.mxu0 0.0
    %5412 = vmatpush1.msra.mxu0 0.0
    %5413 = vmatprep.subr.mxu0 0.0
    %5414 = vmatpush1.msra.mxu0 0.0
    %5415 = vmatprep.subr.mxu0 0.0
    %5416 = vmatpush1.msra.mxu0 0.0
    %5417 = vmatprep.subr.mxu0 0.0
    %5418 = vmatpush1.msra.mxu0 0.0
    %5419 = vmatprep.subr.mxu0 0.0
    %5420 = vmatpush1.msra.mxu0 0.0
    %5421 = vmatprep.subr.mxu0 0.0
    %5422 = vmatpush1.msra.mxu0 0.0
    %5423 = vmatprep.subr.mxu0 0.0
    %5424 = vmatpush1.msra.mxu0 0.0
    %5425 = vmatprep.subr.mxu0 0.0
    %5426 = vmatpush1.msra.mxu0 0.0
    %5427 = vmatprep.subr.mxu0 0.0
    %5428 = vmatpush1.msra.mxu0 0.0
    %5429 = vmatprep.subr.mxu0 0.0
    %5430 = vmatpush1.msra.mxu0 0.0
    %5431 = vmatprep.subr.mxu0 0.0
    %5432 = vmatpush1.msra.mxu0 0.0
    %5433 = vmatprep.subr.mxu0 0.0
    %5434 = vmatpush1.msra.mxu0 0.0
    %5435 = vmatprep.subr.mxu0 0.0
    %5436 = vmatpush1.msra.mxu0 0.0
    %5437 = vmatprep.subr.mxu0 0.0
    %5438 = vmatpush1.msra.mxu0 0.0
    %5439 = vmatprep.subr.mxu0 0.0
    %5440 = vmatpush1.msra.mxu0 0.0
    %5441 = vmatprep.subr.mxu0 0.0
    %5442 = vmatpush1.msra.mxu0 0.0
    %5443 = vmatprep.subr.mxu0 0.0
    %5444 = vmatpush1.msra.mxu0 0.0
    %5445 = vmatprep.subr.mxu0 0.0
    %5446 = vmatpush1.msra.mxu0 0.0
    %5447 = vmatprep.mubr.f32.mxu0 0.0
    %5448 = vmatmul.mubr.f32.gmra.mrb[0].mxu0 %v5360
    %v5449 = vpop.f32.mrb[0].mxu0
    %v5450 = vadd.f32 %v5358, %v5449
    %v5451 = vpop.f32.mrb[0].mxu0
    %5452 = vmatprep.mubr.f32.mxu0 0.0
    %5453 = vmatmul.mubr.f32.gmra.mrb[0].mxu0 %v5363
    %v5454 = vpop.f32.mrb[0].mxu0
    %v5455 = vadd.f32 %v5358, %v5454
    %v5456 = vpop.f32.mrb[0].mxu0
    %5457 = vmatprep.mubr.f32.mxu0 0.0
    %5458 = vmatmul.mubr.f32.gmra.mrb[0].mxu0 %v5366
    %v5459 = vpop.f32.mrb[0].mxu0
    %v5460 = vadd.f32 %v5358, %v5459
    %v5461 = vpop.f32.mrb[0].mxu0
    %5462 = vmatprep.mubr.f32.mxu0 0.0
    %5463 = vmatmul.mubr.f32.gmra.mrb[0].mxu0 %v5369
    %v5464 = vpop.f32.mrb[0].mxu0
    %v5465 = vadd.f32 %v5358, %v5464
    %v5466 = vpop.f32.mrb[0].mxu0
    %5467 = vmatprep.mubr.f32.mxu0 0.0
    %5468 = vmatmul.mubr.f32.gmra.mrb[0].mxu0 %v5372
    %v5469 = vpop.f32.mrb[0].mxu0
    %v5470 = vadd.f32 %v5358, %v5469
    %v5471 = vpop.f32.mrb[0].mxu0
    %5472 = vmatprep.mubr.f32.mxu0 0.0
    %5473 = vmatmul.mubr.f32.gmra.mrb[0].mxu0 %v5375
    %v5474 = vpop.f32.mrb[0].mxu0
    %v5475 = vadd.f32 %v5358, %v5474
    %v5476 = vpop.f32.mrb[0].mxu0
    %5477 = vmatprep.mubr.f32.mxu0 0.0
    %5478 = vmatmul.mubr.f32.gmra.mrb[0].mxu0 %v5378
    %v5479 = vpop.f32.mrb[0].mxu0
    %v5480 = vadd.f32 %v5358, %v5479
    %v5481 = vpop.f32.mrb[0].mxu0
    %5482 = vmatprep.mubr.f32.mxu0 0.0
    %5483 = vmatmul.mubr.f32.gmra.mrb[0].mxu0 %v5381
    %v5484 = vpop.f32.mrb[0].mxu0
    %v5485 = vadd.f32 %v5358, %v5484
    %v5486 = vpop.f32.mrb[0].mxu0
    %5487 = vdwg.mxu0
    %v5488 = vmax.f32 %v5450, 0.0
    %v5489 = vmax.f32 %v5455, 0.0
    %v5490 = vmax.f32 %v5460, 0.0
    %v5491 = vmax.f32 %v5465, 0.0
    %v5492 = vmax.f32 %v5470, 0.0
    %v5493 = vmax.f32 %v5475, 0.0
    %v5494 = vmax.f32 %v5480, 0.0
    %v5495 = vmax.f32 %v5485, 0.0
    %v5496 = vlaneseq
    %v5497 = vshrl.u32 %v5496, 7
    %v5498 = vsub.s32 1, %v5497
    %v5499 = vrot.slane %v103, %v5498
    %v5501 = vsel %vm138, %v5488, 0
    %v5504 = vsel %vm138, %v5489, 0
    %v5507 = vsel %vm138, %v5490, 0
    %v5510 = vsel %vm138, %v5491, 0
    %v5513 = vsel %vm138, %v5492, 0
    %v5516 = vsel %vm138, %v5493, 0
    %v5519 = vsel %vm138, %v5494, 0
    %v5522 = vsel %vm138, %v5495, 0
    %5524 = vmatprep.subr.mxu0 0.0
    %5525 = vmatpush1.msra.mxu0 %v99
    %5526 = vmatprep.subr.mxu0 0.0
    %5527 = vmatpush1.msra.mxu0 %v100
    %5528 = vmatprep.subr.mxu0 0.0
    %5529 = vmatpush1.msra.mxu0 %v101
    %5530 = vmatprep.subr.mxu0 0.0
    %5531 = vmatpush1.msra.mxu0 %v102
    %5532 = vmatprep.subr.mxu0 0.0
    %5533 = vmatpush1.msra.mxu0 0.0
    %5534 = vmatprep.subr.mxu0 0.0
    %5535 = vmatpush1.msra.mxu0 0.0
    %5536 = vmatprep.subr.mxu0 0.0
    %5537 = vmatpush1.msra.mxu0 0.0
    %5538 = vmatprep.subr.mxu0 0.0
    %5539 = vmatpush1.msra.mxu0 0.0
    %5540 = vmatprep.subr.mxu0 0.0
    %5541 = vmatpush1.msra.mxu0 0.0
    %5542 = vmatprep.subr.mxu0 0.0
    %5543 = vmatpush1.msra.mxu0 0.0
    %5544 = vmatprep.subr.mxu0 0.0
    %5545 = vmatpush1.msra.mxu0 0.0
    %5546 = vmatprep.subr.mxu0 0.0
    %5547 = vmatpush1.msra.mxu0 0.0
    %5548 = vmatprep.subr.mxu0 0.0
    %5549 = vmatpush1.msra.mxu0 0.0
    %5550 = vmatprep.subr.mxu0 0.0
    %5551 = vmatpush1.msra.mxu0 0.0
    %5552 = vmatprep.subr.mxu0 0.0
    %5553 = vmatpush1.msra.mxu0 0.0
    %5554 = vmatprep.subr.mxu0 0.0
    %5555 = vmatpush1.msra.mxu0 0.0
    %5556 = vmatprep.subr.mxu0 0.0
    %5557 = vmatpush1.msra.mxu0 0.0
    %5558 = vmatprep.subr.mxu0 0.0
    %5559 = vmatpush1.msra.mxu0 0.0
    %5560 = vmatprep.subr.mxu0 0.0
    %5561 = vmatpush1.msra.mxu0 0.0
    %5562 = vmatprep.subr.mxu0 0.0
    %5563 = vmatpush1.msra.mxu0 0.0
    %5564 = vmatprep.subr.mxu0 0.0
    %5565 = vmatpush1.msra.mxu0 0.0
    %5566 = vmatprep.subr.mxu0 0.0
    %5567 = vmatpush1.msra.mxu0 0.0
    %5568 = vmatprep.subr.mxu0 0.0
    %5569 = vmatpush1.msra.mxu0 0.0
    %5570 = vmatprep.subr.mxu0 0.0
    %5571 = vmatpush1.msra.mxu0 0.0
    %5572 = vmatprep.subr.mxu0 0.0
    %5573 = vmatpush1.msra.mxu0 0.0
    %5574 = vmatprep.subr.mxu0 0.0
    %5575 = vmatpush1.msra.mxu0 0.0
    %5576 = vmatprep.subr.mxu0 0.0
    %5577 = vmatpush1.msra.mxu0 0.0
    %5578 = vmatprep.subr.mxu0 0.0
    %5579 = vmatpush1.msra.mxu0 0.0
    %5580 = vmatprep.subr.mxu0 0.0
    %5581 = vmatpush1.msra.mxu0 0.0
    %5582 = vmatprep.subr.mxu0 0.0
    %5583 = vmatpush1.msra.mxu0 0.0
    %5584 = vmatprep.subr.mxu0 0.0
    %5585 = vmatpush1.msra.mxu0 0.0
    %5586 = vmatprep.subr.mxu0 0.0
    %5587 = vmatpush1.msra.mxu0 0.0
    %5588 = vmatprep.mubr.f32.mxu0 0.0
    %5589 = vmatmul.mubr.f32.gmra.mrb[0].mxu0 %v5501
    %v5590 = vpop.f32.mrb[0].mxu0
    %v5591 = vadd.f32 %v5499, %v5590
    %v5592 = vpop.f32.mrb[0].mxu0
    %5593 = vmatprep.mubr.f32.mxu0 0.0
    %5594 = vmatmul.mubr.f32.gmra.mrb[0].mxu0 %v5504
    %v5595 = vpop.f32.mrb[0].mxu0
    %v5596 = vadd.f32 %v5499, %v5595
    %v5597 = vpop.f32.mrb[0].mxu0
    %5598 = vmatprep.mubr.f32.mxu0 0.0
    %5599 = vmatmul.mubr.f32.gmra.mrb[0].mxu0 %v5507
    %v5600 = vpop.f32.mrb[0].mxu0
    %v5601 = vadd.f32 %v5499, %v5600
    %v5602 = vpop.f32.mrb[0].mxu0
    %5603 = vmatprep.mubr.f32.mxu0 0.0
    %5604 = vmatmul.mubr.f32.gmra.mrb[0].mxu0 %v5510
    %v5605 = vpop.f32.mrb[0].mxu0
    %v5606 = vadd.f32 %v5499, %v5605
    %v5607 = vpop.f32.mrb[0].mxu0
    %5608 = vmatprep.mubr.f32.mxu0 0.0
    %5609 = vmatmul.mubr.f32.gmra.mrb[0].mxu0 %v5513
    %v5610 = vpop.f32.mrb[0].mxu0
    %v5611 = vadd.f32 %v5499, %v5610
    %v5612 = vpop.f32.mrb[0].mxu0
    %5613 = vmatprep.mubr.f32.mxu0 0.0
    %5614 = vmatmul.mubr.f32.gmra.mrb[0].mxu0 %v5516
    %v5615 = vpop.f32.mrb[0].mxu0
    %v5616 = vadd.f32 %v5499, %v5615
    %v5617 = vpop.f32.mrb[0].mxu0
    %5618 = vmatprep.mubr.f32.mxu0 0.0
    %5619 = vmatmul.mubr.f32.gmra.mrb[0].mxu0 %v5519
    %v5620 = vpop.f32.mrb[0].mxu0
    %v5621 = vadd.f32 %v5499, %v5620
    %v5622 = vpop.f32.mrb[0].mxu0
    %5623 = vmatprep.mubr.f32.mxu0 0.0
    %5624 = vmatmul.mubr.f32.gmra.mrb[0].mxu0 %v5522
    %v5625 = vpop.f32.mrb[0].mxu0
    %v5626 = vadd.f32 %v5499, %v5625
    %v5627 = vpop.f32.mrb[0].mxu0
    %5628 = vdwg.mxu0
    %v5629 = vmax.f32 %v5591, 0.0
    %v5630 = vmax.f32 %v5596, 0.0
    %v5631 = vmax.f32 %v5601, 0.0
    %v5632 = vmax.f32 %v5606, 0.0
    %v5633 = vmax.f32 %v5611, 0.0
    %v5634 = vmax.f32 %v5616, 0.0
    %v5635 = vmax.f32 %v5621, 0.0
    %v5636 = vmax.f32 %v5626, 0.0
    %v5637 = vadd.f32 %v5629, %v5347
    %v5638 = vadd.f32 %v5630, %v5348
    %v5639 = vadd.f32 %v5631, %v5349
    %v5640 = vadd.f32 %v5632, %v5350
    %v5641 = vadd.f32 %v5633, %v5351
    %v5642 = vadd.f32 %v5634, %v5352
    %v5643 = vadd.f32 %v5635, %v5353
    %v5644 = vadd.f32 %v5636, %v5354
    %v5645 = vsel %vm138, %v5637, 0.0
    %5646 = vadd.xlane.f32.xlu0 %v5645
    %v5647 = vpop.xlane.xlu0 %5646
    %v5648 = vsel %vm138, %v5638, 0.0
    %5649 = vadd.xlane.f32.xlu0 %v5648
    %v5650 = vpop.xlane.xlu0 %5649
    %v5651 = vsel %vm138, %v5639, 0.0
    %5652 = vadd.xlane.f32.xlu0 %v5651
    %v5653 = vpop.xlane.xlu0 %5652
    %v5654 = vsel %vm138, %v5640, 0.0
    %5655 = vadd.xlane.f32.xlu0 %v5654
    %v5656 = vpop.xlane.xlu0 %5655
    %v5657 = vsel %vm138, %v5641, 0.0
    %5658 = vadd.xlane.f32.xlu0 %v5657
    %v5659 = vpop.xlane.xlu0 %5658
    %v5660 = vsel %vm138, %v5642, 0.0
    %5661 = vadd.xlane.f32.xlu0 %v5660
    %v5662 = vpop.xlane.xlu0 %5661
    %v5663 = vsel %vm138, %v5643, 0.0
    %5664 = vadd.xlane.f32.xlu0 %v5663
    %v5665 = vpop.xlane.xlu0 %5664
    %v5666 = vsel %vm138, %v5644, 0.0
    %5667 = vadd.xlane.f32.xlu0 %v5666
    %v5668 = vpop.xlane.xlu0 %5667
    %v5669 = vmul.f32 %v5647, %v5250
    %v5670 = vmul.f32 %v5650, %v5250
    %v5671 = vmul.f32 %v5653, %v5250
    %v5672 = vmul.f32 %v5656, %v5250
    %v5673 = vmul.f32 %v5659, %v5250
    %v5674 = vmul.f32 %v5662, %v5250
    %v5675 = vmul.f32 %v5665, %v5250
    %v5676 = vmul.f32 %v5668, %v5250
    %v5677 = vsub.f32 %v5637, %v5669
    %v5678 = vsub.f32 %v5638, %v5670
    %v5679 = vsub.f32 %v5639, %v5671
    %v5680 = vsub.f32 %v5640, %v5672
    %v5681 = vsub.f32 %v5641, %v5673
    %v5682 = vsub.f32 %v5642, %v5674
    %v5683 = vsub.f32 %v5643, %v5675
    %v5684 = vsub.f32 %v5644, %v5676
    %v5685 = vmul.f32 %v5677, %v5677
    %v5686 = vmul.f32 %v5678, %v5678
    %v5687 = vmul.f32 %v5679, %v5679
    %v5688 = vmul.f32 %v5680, %v5680
    %v5689 = vmul.f32 %v5681, %v5681
    %v5690 = vmul.f32 %v5682, %v5682
    %v5691 = vmul.f32 %v5683, %v5683
    %v5692 = vmul.f32 %v5684, %v5684
    %v5693 = vsel %vm138, %v5685, 0.0
    %5694 = vadd.xlane.f32.xlu0 %v5693
    %v5695 = vpop.xlane.xlu0 %5694
    %v5696 = vsel %vm138, %v5686, 0.0
    %5697 = vadd.xlane.f32.xlu0 %v5696
    %v5698 = vpop.xlane.xlu0 %5697
    %v5699 = vsel %vm138, %v5687, 0.0
    %5700 = vadd.xlane.f32.xlu0 %v5699
    %v5701 = vpop.xlane.xlu0 %5700
    %v5702 = vsel %vm138, %v5688, 0.0
    %5703 = vadd.xlane.f32.xlu0 %v5702
    %v5704 = vpop.xlane.xlu0 %5703
    %v5705 = vsel %vm138, %v5689, 0.0
    %5706 = vadd.xlane.f32.xlu0 %v5705
    %v5707 = vpop.xlane.xlu0 %5706
    %v5708 = vsel %vm138, %v5690, 0.0
    %5709 = vadd.xlane.f32.xlu0 %v5708
    %v5710 = vpop.xlane.xlu0 %5709
    %v5711 = vsel %vm138, %v5691, 0.0
    %5712 = vadd.xlane.f32.xlu0 %v5711
    %v5713 = vpop.xlane.xlu0 %5712
    %v5714 = vsel %vm138, %v5692, 0.0
    %5715 = vadd.xlane.f32.xlu0 %v5714
    %v5716 = vpop.xlane.xlu0 %5715
    %v5717 = vmul.f32 %v5695, %v5250
    %v5718 = vmul.f32 %v5698, %v5250
    %v5719 = vmul.f32 %v5701, %v5250
    %v5720 = vmul.f32 %v5704, %v5250
    %v5721 = vmul.f32 %v5707, %v5250
    %v5722 = vmul.f32 %v5710, %v5250
    %v5723 = vmul.f32 %v5713, %v5250
    %v5724 = vmul.f32 %v5716, %v5250
    %v5725 = vadd.f32 %v5717, 1e-05
    %v5726 = vadd.f32 %v5718, 1e-05
    %v5727 = vadd.f32 %v5719, 1e-05
    %v5728 = vadd.f32 %v5720, 1e-05
    %v5729 = vadd.f32 %v5721, 1e-05
    %v5730 = vadd.f32 %v5722, 1e-05
    %v5731 = vadd.f32 %v5723, 1e-05
    %v5732 = vadd.f32 %v5724, 1e-05
    %v5733 = vrsqrt.pop %v5725
    %v5734 = vrsqrt.pop %v5726
    %v5735 = vrsqrt.pop %v5727
    %v5736 = vrsqrt.pop %v5728
    %v5737 = vrsqrt.pop %v5729
    %v5738 = vrsqrt.pop %v5730
    %v5739 = vrsqrt.pop %v5731
    %v5740 = vrsqrt.pop %v5732
    %v5741 = vmul.f32 %v5677, %v5733
    %v5742 = vmul.f32 %v5678, %v5734
    %v5743 = vmul.f32 %v5679, %v5735
    %v5744 = vmul.f32 %v5680, %v5736
    %v5745 = vmul.f32 %v5681, %v5737
    %v5746 = vmul.f32 %v5682, %v5738
    %v5747 = vmul.f32 %v5683, %v5739
    %v5748 = vmul.f32 %v5684, %v5740
    %v5749 = vlaneseq
    %v5750 = vshrl.u32 %v5749, 7
    %v5751 = vsub.s32 4, %v5750
    %v5752 = vrot.slane %v103, %v5751
    %v5753 = vmul.f32 %v5741, %v5752
    %v5754 = vmul.f32 %v5742, %v5752
    %v5755 = vmul.f32 %v5743, %v5752
    %v5756 = vmul.f32 %v5744, %v5752
    %v5757 = vmul.f32 %v5745, %v5752
    %v5758 = vmul.f32 %v5746, %v5752
    %v5759 = vmul.f32 %v5747, %v5752
    %v5760 = vmul.f32 %v5748, %v5752
    %v5761 = vlaneseq
    %v5762 = vshrl.u32 %v5761, 7
    %v5763 = vsub.s32 5, %v5762
    %v5764 = vrot.slane %v103, %v5763
    %v5765 = vadd.f32 %v5753, %v5764
    %v5766 = vadd.f32 %v5754, %v5764
    %v5767 = vadd.f32 %v5755, %v5764
    %v5768 = vadd.f32 %v5756, %v5764
    %v5769 = vadd.f32 %v5757, %v5764
    %v5770 = vadd.f32 %v5758, %v5764
    %v5771 = vadd.f32 %v5759, %v5764
    %v5772 = vadd.f32 %v5760, %v5764
    %5773 = vst.msk [vmem:[%s5] sm:$0xff] %vm138, %v5765
    %5774 = vst.msk [vmem:[%s5 + $0x8] sm:$0xff] %vm138, %v5766
    %5775 = vst.msk [vmem:[%s5 + $0x10] sm:$0xff] %vm138, %v5767
    %5776 = vst.msk [vmem:[%s5 + $0x18] sm:$0xff] %vm138, %v5768
    %5777 = vst.msk [vmem:[%s5 + $0x20] sm:$0xff] %vm138, %v5769
    %5778 = vst.msk [vmem:[%s5 + $0x28] sm:$0xff] %vm138, %v5770
    %5779 = vst.msk [vmem:[%s5 + $0x30] sm:$0xff] %vm138, %v5771
    %5780 = vst.msk [vmem:[%s5 + $0x38] sm:$0xff] %vm138, %v5772
    // Predicated region
    $region26: #{gt_layer_forward.1} parent=1 // pred_check
      _
    $region27: #{gt_layer_forward.1} parent=1 // pred_check_branch
      %5782 = sbr.rel (0) target = $region29
    $region28: #{gt_layer_forward.1} parent=1 // pred_region
      _
    $region29: #{gt_layer_forward.1} parent=1 // pred_fallthru
      _
    // Predicated region
    $region30: #{gt_layer_forward.1} parent=1 // pred_check
      _
    $region31: #{gt_layer_forward.1} parent=1 // pred_check_branch
      %5784 = sbr.rel (0) target = $region33
    $region32: #{gt_layer_forward.1} parent=1 // pred_region
      _
    $region33: #{gt_layer_forward.1} parent=1 // pred_fallthru
      _
    %5785 = vsyncpa [#allocation4], 1

</llo_original>
